<compile_context>
chip_gen: v7x
topology: tpu7x:2x2x1
jax: 0.10.0
libtpu: 0.0.40
codegen_flags: <defaults>
</compile_context>

<pallas_src>
import functools

import jax
import jax.numpy as jnp
from jax.experimental import pallas as pl
from jax.experimental.pallas import tpu as pltpu


# Matmul input dtype (bf16 on the MXU, f32 accumulation).  Set to jnp.float32
# to debug numerics.
MATMUL_DTYPE = jnp.bfloat16


def _vmem_capacity_bytes():
    try:
        return int(pltpu.get_tpu_info().vmem_capacity_bytes)
    except Exception:
        return 64 << 20          # conservative (v7x-sized) fallback


_VMEM_CAP = _vmem_capacity_bytes()
# Explicit scoped-VMEM budget: half of physical (32 MiB on v7x, 64 MiB on
# v5e/v6e) keeps full double-buffering on every generation.
_VMEM_LIMIT = int(min(_VMEM_CAP // 2, 96 << 20))


def _cparams(sem):
    return pltpu.CompilerParams(dimension_semantics=sem,
                                vmem_limit_bytes=_VMEM_LIMIT)


def _round_up(x, m):
    return -(-x // m) * m


def _pad_rows(x, n):
    if x.shape[0] == n:
        return x
    pad = [(0, n - x.shape[0])] + [(0, 0)] * (x.ndim - 1)
    return jnp.pad(x, pad)


def _channel_group(width):
    """Rows packed per 128 lanes for the channel-mix layers."""
    return max(1, 128 // width)


def _mode_group(cin, m2):
    """Modes per spectral matmul group: largest divisor of m2 with
    group * 2 * cin <= 128 (lane-dense blocks, no cross-mode remainder)."""
    gmax = max(1, 128 // (2 * cin))
    g = 1
    for d in range(1, m2 + 1):
        if m2 % d == 0 and d <= gmax:
            g = d
    return g


def _tile_rows(n_rows, row_bytes):
    """Row tile for the channel-mix kernels: as big as the VMEM budget allows
    (per-grid-step overhead ~0.35us dominates small tiles) but with >= 2 grid
    steps when there is enough work (v7x megacore)."""
    target = 4096 if _VMEM_CAP >= (100 << 20) else 2048
    budget = max(_VMEM_LIMIT // 6, 1 << 20)
    t = min(target, max(8, budget // max(row_bytes, 1)))
    t = max(8, (t // 8) * 8)
    if n_rows >= 16:
        t = min(t, _round_up(-(-n_rows // 2), 8))   # >= 2 grid steps
    t = min(t, _round_up(n_rows, 8))
    return max(8, t)


def _spectral_gb(ng, lin, lout):
    """Mode-groups per grid step: bounded by a VMEM weight budget and a static
    unroll cap, multiple of 8 (sublane tile), >= 2 grid steps when possible."""
    budget = max(_VMEM_LIMIT // 8, 1 << 20)
    gb = budget // max(lin * lout * 2, 1)     # bf16 weights dominate the block
    gb = int(max(8, min(32, gb)))
    gb = (gb // 8) * 8
    if ng >= 16:
        gb = min(gb, _round_up(-(-ng // 2), 8))
    return max(8, gb)


# ----------------------------- Pallas kernels -----------------------------

def _linear_kernel(x_ref, w_ref, b_ref, o_ref, *, relu):
    y = jnp.dot(x_ref[...], w_ref[...], preferred_element_type=jnp.float32)
    y = y + b_ref[...]
    if relu:
        y = jnp.maximum(y, 0.0)
    o_ref[...] = y.astype(o_ref.dtype)


def _linear_add_relu_kernel(x_ref, w_ref, b_ref, a_ref, o_ref):
    # relu( x @ w + b + a )  -- fuses the "(W + K)(u)" add and the ReLU.
    y = jnp.dot(x_ref[...], w_ref[...], preferred_element_type=jnp.float32)
    y = jnp.maximum(y + b_ref[...] + a_ref[...].astype(jnp.float32), 0.0)
    o_ref[...] = y.astype(o_ref.dtype)


def _fc12_kernel(x_ref, w1_ref, b1_ref, w2_ref, b2_ref, o_ref):
    # fc2( relu( fc1(x) ) ) fused; the (tn, G*128) intermediate never hits HBM.
    h = jnp.dot(x_ref[...], w1_ref[...], preferred_element_type=jnp.float32)
    h = jnp.maximum(h + b1_ref[...], 0.0)
    y = jnp.dot(h.astype(w2_ref.dtype), w2_ref[...],
                preferred_element_type=jnp.float32)
    o_ref[...] = (y + b2_ref[...]).astype(o_ref.dtype)


def _spectral_kernel(a_ref, w_ref, o_ref, *, groups):
    # a_ref : (B, gb, Lin)     packed [re|im] activations for gb mode-groups
    # w_ref : (gb, Lin, Lout)  per-group packed [[wr, wi], [-wi, wr]] weights
    # o_ref : (B, gb, Lout)    packed [re|im] outputs
    # One full-K (Lin ~ 128) matmul per mode-group; static unroll keeps all
    # slicing static and cheap.
    for g in range(groups):
        o_ref[:, g, :] = jnp.dot(
            a_ref[:, g, :], w_ref[g],
            preferred_element_type=jnp.float32).astype(o_ref.dtype)


# ----------------------------- Pallas wrappers -----------------------------

def linear(x, w_bd, b_t, *, relu=False, out_dtype=MATMUL_DTYPE):
    """y = maybe_relu(x @ w_bd + b_t); x: (Nr, Lin) MATMUL_DTYPE."""
    Nr, lin = x.shape
    lout = w_bd.shape[1]
    row_bytes = 2 * (2 * lin + 2 * lout) + 4 * lout
    tn = _tile_rows(Nr, row_bytes)
    Np = _round_up(Nr, tn)
    out = pl.pallas_call(
        functools.partial(_linear_kernel, relu=relu),
        out_shape=jax.ShapeDtypeStruct((Np, lout), out_dtype),
        grid_spec=pltpu.PrefetchScalarGridSpec(
            num_scalar_prefetch=0,
            grid=(Np // tn,),
            in_specs=[
                pl.BlockSpec((tn, lin), lambda i: (i, 0)),
                pl.BlockSpec((lin, lout), lambda i: (0, 0)),
                pl.BlockSpec((1, lout), lambda i: (0, 0)),
            ],
            out_specs=pl.BlockSpec((tn, lout), lambda i: (i, 0)),
        ),
        compiler_params=_cparams(("parallel",)),
    )(_pad_rows(x, Np), w_bd, b_t)
    return out if Np == Nr else out[:Nr]


def linear_add_relu(x, w_bd, b_t, add, *, out_dtype=MATMUL_DTYPE):
    """y = relu(x @ w_bd + b_t + add); x, add: (Nr, L) MATMUL_DTYPE."""
    Nr, lin = x.shape
    lout = w_bd.shape[1]
    row_bytes = 2 * (2 * lin + 4 * lout) + 4 * lout
    tn = _tile_rows(Nr, row_bytes)
    Np = _round_up(Nr, tn)
    out = pl.pallas_call(
        _linear_add_relu_kernel,
        out_shape=jax.ShapeDtypeStruct((Np, lout), out_dtype),
        grid_spec=pltpu.PrefetchScalarGridSpec(
            num_scalar_prefetch=0,
            grid=(Np // tn,),
            in_specs=[
                pl.BlockSpec((tn, lin), lambda i: (i, 0)),
                pl.BlockSpec((lin, lout), lambda i: (0, 0)),
                pl.BlockSpec((1, lout), lambda i: (0, 0)),
                pl.BlockSpec((tn, lout), lambda i: (i, 0)),
            ],
            out_specs=pl.BlockSpec((tn, lout), lambda i: (i, 0)),
        ),
        compiler_params=_cparams(("parallel",)),
    )(_pad_rows(x, Np), w_bd, b_t, _pad_rows(add, Np))
    return out if Np == Nr else out[:Nr]


def fc1_fc2(x, w1_bd, b1_t, w2_bd, b2_t):
    """y = fc2(relu(fc1(x))), both block-diagonal; x: (Nr, G*width)."""
    Nr, lin = x.shape
    lhid = w1_bd.shape[1]
    lout = w2_bd.shape[1]
    row_bytes = 2 * 2 * lin + 4 * lhid + 2 * lhid + 2 * 4 * lout
    tn = _tile_rows(Nr, row_bytes)
    Np = _round_up(Nr, tn)
    out = pl.pallas_call(
        _fc12_kernel,
        out_shape=jax.ShapeDtypeStruct((Np, lout), jnp.float32),
        grid_spec=pltpu.PrefetchScalarGridSpec(
            num_scalar_prefetch=0,
            grid=(Np // tn,),
            in_specs=[
                pl.BlockSpec((tn, lin), lambda i: (i, 0)),
                pl.BlockSpec((lin, lhid), lambda i: (0, 0)),
                pl.BlockSpec((1, lhid), lambda i: (0, 0)),
                pl.BlockSpec((lhid, lout), lambda i: (0, 0)),
                pl.BlockSpec((1, lout), lambda i: (0, 0)),
            ],
            out_specs=pl.BlockSpec((tn, lout), lambda i: (i, 0)),
        ),
        compiler_params=_cparams(("parallel",)),
    )(_pad_rows(x, Np), w1_bd, b1_t, w2_bd, b2_t)
    return out if Np == Nr else out[:Nr]


def spectral_mul(a, w):
    """Batched per-mode-group channel mix.  a: (B, NG, Lin), w: (NG, Lin, Lout),
    both MATMUL_DTYPE; returns (B, NG, Lout) float32."""
    B, NG, lin = a.shape
    lout = w.shape[2]
    gb = _spectral_gb(NG, lin, lout)
    NGp = _round_up(NG, gb)
    if NGp != NG:
        a = jnp.pad(a, ((0, 0), (0, NGp - NG), (0, 0)))
        w = jnp.pad(w, ((0, NGp - NG), (0, 0), (0, 0)))
    out = pl.pallas_call(
        functools.partial(_spectral_kernel, groups=gb),
        out_shape=jax.ShapeDtypeStruct((B, NGp, lout), jnp.float32),
        grid_spec=pltpu.PrefetchScalarGridSpec(
            num_scalar_prefetch=0,
            grid=(NGp // gb,),
            in_specs=[
                pl.BlockSpec((B, gb, lin), lambda i: (0, i, 0)),
                pl.BlockSpec((gb, lin, lout), lambda i: (i, 0, 0)),
            ],
            out_specs=pl.BlockSpec((B, gb, lout), lambda i: (0, i, 0)),
        ),
        compiler_params=_cparams(("parallel",)),
    )(a, w)
    return out if NGp == NG else out[:, :NG]


# ----------------------------- model pieces -----------------------------

def spectral_conv2d(h4, w_packed, m1, m2):
    """SpectralConv2d in NHWC: rfft2 -> Pallas packed complex mix -> irfft2.

    h4: (B, H, W, Cin) float32
    w_packed: (NG, Gm*2*Cin, Gm*2*Cout) preprocessed mode-group-major weights.
    """
    B, H, W, cin = h4.shape
    NG, lin, lout = w_packed.shape
    gm = _mode_group(cin, m2)
    cout = lout // (2 * gm)

    # torch.rfft(x, 2, normalized=True, onesided=True) == rfft2(norm='ortho').
    x_ft = jnp.fft.rfft2(h4, axes=(1, 2), norm="ortho")        # (B,H,Wr,Ci) c64

    a = jnp.concatenate([x_ft[:, :m1, :m2, :],                 # mode region 1
                         x_ft[:, H - m1:, :m2, :]], axis=1)    # mode region 2
    a = jnp.concatenate([a.real, a.imag], axis=-1)             # (B,2m1,m2,2Ci)
    a = a.reshape(B, NG, lin).astype(MATMUL_DTYPE)             # free reshape

    out = spectral_mul(a, w_packed)                            # (B, NG, Lout) f32
    out = out.reshape(B, 2 * m1, m2, 2 * cout)                 # free reshape
    oc = jax.lax.complex(out[..., :cout], out[..., cout:])     # (B,2m1,m2,Co)

    wr_ = W // 2 + 1
    out_ft = jnp.zeros((B, H, wr_, cout), dtype=x_ft.dtype)
    out_ft = out_ft.at[:, :m1, :m2, :].set(oc[:, :m1])
    out_ft = out_ft.at[:, H - m1:, :m2, :].set(oc[:, m1:])

    # torch.irfft(..., 2, normalized=True, onesided=True, signal_sizes=(H, W)).
    return jnp.fft.irfft2(out_ft, s=(H, W), axes=(1, 2), norm="ortho")


def simple_block2d(x, params, m1, m2, width):
    """Forward of SimpleBlock2d. x: (B, H, W, 3) float32 -> (B, H, W, 1)."""
    B, H, W, cin0 = x.shape
    N = B * H * W
    G = _channel_group(width)
    Nr = -(-N // G)                 # grouped rows (G pixels share 128 lanes)
    Npad = Nr * G

    xg = _pad_rows(x.reshape(N, cin0), Npad).reshape(Nr, G * cin0)
    xg = xg.astype(MATMUL_DTYPE)

    # fc0: lift 3 -> width (block-diagonal, lane-dense 128-wide output).
    hg = linear(xg, params["fc0_w"], params["fc0_b"])           # (Nr, G*width)

    # 4 Fourier layers: u' = relu( K(u) + W(u) )  (same h feeds both branches).
    for l in range(4):
        h4 = hg.reshape(Npad, width)[:N].reshape(B, H, W, width)
        h4 = h4.astype(jnp.float32)
        x1 = spectral_conv2d(h4, params[f"conv{l}_w"], m1, m2)  # (B,H,W,width)
        ag = _pad_rows(x1.reshape(N, width), Npad)
        ag = ag.reshape(Nr, G * width).astype(MATMUL_DTYPE)
        hg = linear_add_relu(hg, params[f"w{l}_w"], params[f"w{l}_b"], ag)

    # fc1 (+relu) and fc2 fused; fc2 block-diagonal -> (Nr, G) output.
    outg = fc1_fc2(hg, params["fc1_w"], params["fc1_b"],
                   params["fc2_w"], params["fc2_b"])            # (Nr, G) f32
    out = outg.reshape(Npad, 1)[:N]
    return out.reshape(B, H, W, 1)


def fno2d(x, params, m1, m2, width):
    """FNO2d.forward: SimpleBlock2d followed by squeeze()."""
    return jnp.squeeze(simple_block2d(x, params, m1, m2, width))


# ----------------------------- params -----------------------------

def init_params(key, width, m1, m2):
    """Deterministic synthetic parameters matching the PyTorch shapes.

    Channel-mix weights are stored as (Cin, Cout) so they apply as a
    right-matmul on the (N, C) activation layout.  Spectral weights keep the
    PyTorch layout (Cin, Cout, m1, m2, 2) here and are repacked once by
    preprocess_params()."""
    ks = jax.random.split(key, 20)
    scale = 1.0 / (width * width)
    p = {}
    p["fc0_w"] = jax.random.normal(ks[0], (3, width), jnp.float32) * 0.1
    p["fc0_b"] = jax.random.normal(ks[1], (width,), jnp.float32) * 0.1
    for l in range(4):
        p[f"conv{l}_w1"] = scale * jax.random.uniform(
            ks[2 + 3 * l], (width, width, m1, m2, 2), jnp.float32)
        p[f"conv{l}_w2"] = scale * jax.random.uniform(
            ks[3 + 3 * l], (width, width, m1, m2, 2), jnp.float32)
        p[f"w{l}_w"] = jax.random.normal(
            ks[4 + 3 * l], (width, width), jnp.float32) * 0.05
        p[f"w{l}_b"] = jnp.zeros((width,), jnp.float32)
    p["fc1_w"] = jax.random.normal(ks[14], (width, 128), jnp.float32) * 0.05
    p["fc1_b"] = jnp.zeros((128,), jnp.float32)
    p["fc2_w"] = jax.random.normal(ks[15], (128, 1), jnp.float32) * 0.05
    p["fc2_b"] = jnp.zeros((1,), jnp.float32)
    return p


def _block_diag(w, g):
    """(Cin, Cout) -> (g*Cin, g*Cout) with g copies of w on the diagonal."""
    cin, cout = w.shape
    eye = jnp.eye(g, dtype=w.dtype)
    return (eye[:, None, :, None] * w[None, :, None, :]).reshape(g * cin, g * cout)


def preprocess_params(raw, m1, m2, width):
    """One-time repack of all weights into the kernels' layouts:
      * block-diagonal lane-dense channel-mix weights (G row-groups per 128
        lanes), biases tiled G times and stored as (1, L) rows,
      * spectral weights packed as [[wr, wi], [-wi, wr]] per mode and grouped
        Gm modes block-diagonally, mode-group-major (NG, Lin, Lout),
    all cast to MATMUL_DTYPE (bf16) so kernel DMA traffic is halved."""
    G = _channel_group(width)
    p = {}
    p["fc0_w"] = _block_diag(raw["fc0_w"], G).astype(MATMUL_DTYPE)
    p["fc0_b"] = jnp.tile(raw["fc0_b"], G).reshape(1, -1).astype(jnp.float32)
    for l in range(4):
        p[f"w{l}_w"] = _block_diag(raw[f"w{l}_w"], G).astype(MATMUL_DTYPE)
        p[f"w{l}_b"] = jnp.tile(raw[f"w{l}_b"], G).reshape(1, -1).astype(jnp.float32)

        w1, w2 = raw[f"conv{l}_w1"], raw[f"conv{l}_w2"]    # (Ci, Co, m1, m2, 2)
        ci, co = w1.shape[0], w1.shape[1]
        wcat = jnp.concatenate([w1, w2], axis=2)           # (Ci, Co, 2m1, m2, 2)
        wre, wim = wcat[..., 0], wcat[..., 1]
        top = jnp.concatenate([wre, wim], axis=1)          # re-in rows
        bot = jnp.concatenate([-wim, wre], axis=1)         # im-in rows
        wp = jnp.concatenate([top, bot], axis=0)           # (2Ci, 2Co, 2m1, m2)
        wp = jnp.transpose(wp, (2, 3, 0, 1))               # (2m1, m2, 2Ci, 2Co)
        gm = _mode_group(ci, m2)
        wp = wp.reshape(2 * m1, m2 // gm, gm, 2 * ci, 2 * co)
        eye = jnp.eye(gm, dtype=wp.dtype)
        wbd = wp[:, :, :, :, None, :] * eye[None, None, :, None, :, None]
        wbd = wbd.reshape(2 * m1 * (m2 // gm), gm * 2 * ci, gm * 2 * co)
        p[f"conv{l}_w"] = wbd.astype(MATMUL_DTYPE)
    p["fc1_w"] = _block_diag(raw["fc1_w"], G).astype(MATMUL_DTYPE)
    p["fc1_b"] = jnp.tile(raw["fc1_b"], G).reshape(1, -1).astype(jnp.float32)
    p["fc2_w"] = _block_diag(raw["fc2_w"], G).astype(MATMUL_DTYPE)
    p["fc2_b"] = jnp.tile(raw["fc2_b"], G).reshape(1, -1).astype(jnp.float32)
    return p


# ----------------------------- pure-JAX reference -----------------------------

def _ref_forward(x, raw, m1, m2, width):
    """Plain-JAX mirror of the PyTorch SimpleBlock2d/FNO2d forward (NCHW)."""
    hp = jax.lax.Precision.HIGHEST
    B, H, W, _ = x.shape

    def compl_mul2d(a, b):
        op = lambda u, v: jnp.einsum("bixy,ioxy->boxy", u, v, precision=hp)
        return (op(a.real, b[..., 0]) - op(a.imag, b[..., 1])) + 1j * (
            op(a.imag, b[..., 0]) + op(a.real, b[..., 1]))

    h = jnp.einsum("bhwi,io->bhwo", x, raw["fc0_w"], precision=hp) + raw["fc0_b"]
    h = jnp.transpose(h, (0, 3, 1, 2))                                   # NCHW
    for l in range(4):
        xf = jnp.fft.rfft2(h, norm="ortho")                              # (B,C,H,Wr)
        of = jnp.zeros((B, width, H, W // 2 + 1), jnp.complex64)
        of = of.at[:, :, :m1, :m2].set(
            compl_mul2d(xf[:, :, :m1, :m2], raw[f"conv{l}_w1"]))
        of = of.at[:, :, H - m1:, :m2].set(
            compl_mul2d(xf[:, :, H - m1:, :m2], raw[f"conv{l}_w2"]))
        x1 = jnp.fft.irfft2(of, s=(H, W), norm="ortho")
        x2 = (jnp.einsum("bihw,io->bohw", h, raw[f"w{l}_w"], precision=hp)
              + raw[f"w{l}_b"][None, :, None, None])
        h = jax.nn.relu(x1 + x2)
    h = jnp.transpose(h, (0, 2, 3, 1))
    h = jax.nn.relu(jnp.einsum("bhwi,io->bhwo", h, raw["fc1_w"], precision=hp)
                    + raw["fc1_b"])
    h = jnp.einsum("bhwi,io->bhwo", h, raw["fc2_w"], precision=hp) + raw["fc2_b"]
    return jnp.squeeze(h)


# ----------------------------- main -----------------------------

if __name__ == "__main__":
    # Small test shapes consistent with the module's forward:
    #   batch=2, spatial s=16, in-channels=3, width=64, modes1=modes2=4.
    B, S = 2, 16
    WIDTH, M1, M2 = 64, 4, 4

    key = jax.random.PRNGKey(0)
    k_x, k_p = jax.random.split(key)
    x = jax.random.normal(k_x, (B, S, S, 3), jnp.float32)
    raw_params = init_params(k_p, WIDTH, M1, M2)
    params = preprocess_params(raw_params, M1, M2, WIDTH)   # one-time repack

    fwd = jax.jit(functools.partial(fno2d, m1=M1, m2=M2, width=WIDTH))
    out = fwd(x, params)
    jax.block_until_ready(out)

    assert out.shape == (B, S, S), out.shape
    assert bool(jnp.all(jnp.isfinite(out)))

    # Numerical check against a plain-JAX (f32, HIGHEST) mirror of the PyTorch
    # forward; bf16 matmul inputs with f32 accumulation stay well within 5e-2.
    ref = _ref_forward(x, raw_params, M1, M2, WIDTH)
    rel_err = float(jnp.max(jnp.abs(out - ref)) / (jnp.max(jnp.abs(ref)) + 1e-8))
    assert rel_err < 5e-2, rel_err

    print("KERNEL_OK")
</pallas_src>

<mosaic_0001>
module attributes {stable_mosaic.version = 11 : i64} {
  func.func @_linear_kernel(%arg0: i32, %arg1: memref<128x6xbf16, #tpu.memory_space<vmem>>, %arg2: memref<6x128xbf16, #tpu.memory_space<vmem>>, %arg3: memref<1x128xf32, #tpu.memory_space<vmem>>, %arg4: memref<128x128xbf16, #tpu.memory_space<vmem>>) attributes {dimension_semantics = [#tpu.dimension_semantics<parallel>], iteration_bounds = array<i64: 2>, scalar_prefetch = 0 : i64, scratch_operands = 0 : i64, tpu.core_type = #tpu.core_type<tc>, window_params = [{transform_indices = @transform_0, window_bounds = array<i64: 128, 6>}, {pipeline_mode = #tpu.pipeline_mode<synchronous>, transform_indices = @transform_1, window_bounds = array<i64: 6, 128>}, {pipeline_mode = #tpu.pipeline_mode<synchronous>, transform_indices = @transform_2, window_bounds = array<i64: 1, 128>}, {transform_indices = @transform_3, window_bounds = array<i64: 128, 128>}]} {
    %c0 = arith.constant 0 : index
    %c0_0 = arith.constant 0 : index
    %0 = vector.load %arg1[%c0, %c0_0] : memref<128x6xbf16, #tpu.memory_space<vmem>>, vector<128x6xbf16>
    %c0_1 = arith.constant 0 : index
    %c0_2 = arith.constant 0 : index
    %1 = vector.load %arg2[%c0_1, %c0_2] : memref<6x128xbf16, #tpu.memory_space<vmem>>, vector<6x128xbf16>
    %cst = arith.constant dense<0.000000e+00> : vector<128x128xf32>
    %2 = tpu.matmul %0, %1, %cst {dimension_numbers = #tpu.dot_dimension_numbers<[1], [0], [0], [1], [0, 0, 1, 1], [], []>} : vector<128x6xbf16>, vector<6x128xbf16>, vector<128x128xf32> -> vector<128x128xf32>
    %c0_3 = arith.constant 0 : index
    %c0_4 = arith.constant 0 : index
    %3 = vector.load %arg3[%c0_3, %c0_4] : memref<1x128xf32, #tpu.memory_space<vmem>>, vector<1x128xf32>
    %4 = vector.broadcast %3 : vector<1x128xf32> to vector<128x128xf32>
    %5 = arith.addf %2, %4 : vector<128x128xf32>
    %6 = arith.truncf %5 : vector<128x128xf32> to vector<128x128xbf16>
    %c0_5 = arith.constant 0 : index
    %c0_6 = arith.constant 0 : index
    %7 = vector.load %arg4[%c0_5, %c0_6] : memref<128x128xbf16, #tpu.memory_space<vmem>>, vector<128x128xbf16>
    tpu.vector_store %arg4[%c0_5, %c0_6], %6 {strides = array<i32>} : memref<128x128xbf16, #tpu.memory_space<vmem>>, vector<128x128xbf16>,
    return
  }
  func.func @transform_0(%arg0: i32) -> (i32, i32) {
    %c0_i32 = arith.constant 0 : i32
    %c0_i32_0 = arith.constant 0 : i32
    return %arg0, %c0_i32 : i32, i32
  }
  func.func @transform_1(%arg0: i32) -> (i32, i32) {
    %c0_i32 = arith.constant 0 : i32
    %c0_i32_0 = arith.constant 0 : i32
    %c0_i32_1 = arith.constant 0 : i32
    return %c0_i32, %c0_i32_0 : i32, i32
  }
  func.func @transform_2(%arg0: i32) -> (i32, i32) {
    %c0_i32 = arith.constant 0 : i32
    %c0_i32_0 = arith.constant 0 : i32
    %c0_i32_1 = arith.constant 0 : i32
    return %c0_i32, %c0_i32_0 : i32, i32
  }
  func.func @transform_3(%arg0: i32) -> (i32, i32) {
    %c0_i32 = arith.constant 0 : i32
    %c0_i32_0 = arith.constant 0 : i32
    return %arg0, %c0_i32 : i32, i32
  }
}

module attributes {stable_mosaic.version = 11 : i64} {
  func.func @_spectral_kernel(%arg0: i32, %arg1: memref<2x16x128xbf16, #tpu.memory_space<vmem>>, %arg2: memref<16x128x128xbf16, #tpu.memory_space<vmem>>, %arg3: memref<2x16x128xf32, #tpu.memory_space<vmem>>) attributes {dimension_semantics = [#tpu.dimension_semantics<parallel>], iteration_bounds = array<i64: 2>, scalar_prefetch = 0 : i64, scratch_operands = 0 : i64, tpu.core_type = #tpu.core_type<tc>, window_params = [{transform_indices = @transform_0, window_bounds = array<i64: 2, 16, 128>}, {transform_indices = @transform_1, window_bounds = array<i64: 16, 128, 128>}, {transform_indices = @transform_2, window_bounds = array<i64: 2, 16, 128>}]} {
    %c0 = arith.constant 0 : index
    %c0_0 = arith.constant 0 : index
    %c0_1 = arith.constant 0 : index
    %0 = vector.load %arg1[%c0, %c0_0, %c0_1] : memref<2x16x128xbf16, #tpu.memory_space<vmem>>, vector<2x1x128xbf16>
    %1 = vector.shape_cast %0 : vector<2x1x128xbf16> to vector<2x128xbf16>
    %c0_2 = arith.constant 0 : index
    %c0_3 = arith.constant 0 : index
    %c0_4 = arith.constant 0 : index
    %2 = vector.load %arg2[%c0_2, %c0_3, %c0_4] : memref<16x128x128xbf16, #tpu.memory_space<vmem>>, vector<1x128x128xbf16>
    %3 = vector.shape_cast %2 : vector<1x128x128xbf16> to vector<128x128xbf16>
    %cst = arith.constant dense<0.000000e+00> : vector<2x128xf32>
    %4 = tpu.matmul %1, %3, %cst {dimension_numbers = #tpu.dot_dimension_numbers<[1], [0], [0], [1], [0, 0, 1, 1], [], []>} : vector<2x128xbf16>, vector<128x128xbf16>, vector<2x128xf32> -> vector<2x128xf32>
    %c0_5 = arith.constant 0 : index
    %c0_6 = arith.constant 0 : index
    %c0_7 = arith.constant 0 : index
    %5 = vector.load %arg3[%c0_5, %c0_6, %c0_7] : memref<2x16x128xf32, #tpu.memory_space<vmem>>, vector<2x1x128xf32>
    %6 = vector.shape_cast %5 : vector<2x1x128xf32> to vector<2x128xf32>
    %7 = vector.shape_cast %4 : vector<2x128xf32> to vector<2x1x128xf32>
    tpu.vector_store %arg3[%c0_5, %c0_6, %c0_7], %7 {strides = array<i32>} : memref<2x16x128xf32, #tpu.memory_space<vmem>>, vector<2x1x128xf32>,
    %c0_8 = arith.constant 0 : index
    %c1 = arith.constant 1 : index
    %c0_9 = arith.constant 0 : index
    %8 = vector.load %arg1[%c0_8, %c1, %c0_9] : memref<2x16x128xbf16, #tpu.memory_space<vmem>>, vector<2x1x128xbf16>
    %9 = vector.shape_cast %8 : vector<2x1x128xbf16> to vector<2x128xbf16>
    %c1_10 = arith.constant 1 : index
    %c0_11 = arith.constant 0 : index
    %c0_12 = arith.constant 0 : index
    %10 = vector.load %arg2[%c1_10, %c0_11, %c0_12] : memref<16x128x128xbf16, #tpu.memory_space<vmem>>, vector<1x128x128xbf16>
    %11 = vector.shape_cast %10 : vector<1x128x128xbf16> to vector<128x128xbf16>
    %cst_13 = arith.constant dense<0.000000e+00> : vector<2x128xf32>
    %12 = tpu.matmul %9, %11, %cst_13 {dimension_numbers = #tpu.dot_dimension_numbers<[1], [0], [0], [1], [0, 0, 1, 1], [], []>} : vector<2x128xbf16>, vector<128x128xbf16>, vector<2x128xf32> -> vector<2x128xf32>
    %c0_14 = arith.constant 0 : index
    %c1_15 = arith.constant 1 : index
    %c0_16 = arith.constant 0 : index
    %13 = vector.load %arg3[%c0_14, %c1_15, %c0_16] : memref<2x16x128xf32, #tpu.memory_space<vmem>>, vector<2x1x128xf32>
    %14 = vector.shape_cast %13 : vector<2x1x128xf32> to vector<2x128xf32>
    %15 = vector.shape_cast %12 : vector<2x128xf32> to vector<2x1x128xf32>
    tpu.vector_store %arg3[%c0_14, %c1_15, %c0_16], %15 {strides = array<i32>} : memref<2x16x128xf32, #tpu.memory_space<vmem>>, vector<2x1x128xf32>,
    %c0_17 = arith.constant 0 : index
    %c2 = arith.constant 2 : index
    %c0_18 = arith.constant 0 : index
    %16 = vector.load %arg1[%c0_17, %c2, %c0_18] : memref<2x16x128xbf16, #tpu.memory_space<vmem>>, vector<2x1x128xbf16>
    %17 = vector.shape_cast %16 : vector<2x1x128xbf16> to vector<2x128xbf16>
    %c2_19 = arith.constant 2 : index
    %c0_20 = arith.constant 0 : index
    %c0_21 = arith.constant 0 : index
    %18 = vector.load %arg2[%c2_19, %c0_20, %c0_21] : memref<16x128x128xbf16, #tpu.memory_space<vmem>>, vector<1x128x128xbf16>
    %19 = vector.shape_cast %18 : vector<1x128x128xbf16> to vector<128x128xbf16>
    %cst_22 = arith.constant dense<0.000000e+00> : vector<2x128xf32>
    %20 = tpu.matmul %17, %19, %cst_22 {dimension_numbers = #tpu.dot_dimension_numbers<[1], [0], [0], [1], [0, 0, 1, 1], [], []>} : vector<2x128xbf16>, vector<128x128xbf16>, vector<2x128xf32> -> vector<2x128xf32>
    %c0_23 = arith.constant 0 : index
    %c2_24 = arith.constant 2 : index
    %c0_25 = arith.constant 0 : index
    %21 = vector.load %arg3[%c0_23, %c2_24, %c0_25] : memref<2x16x128xf32, #tpu.memory_space<vmem>>, vector<2x1x128xf32>
    %22 = vector.shape_cast %21 : vector<2x1x128xf32> to vector<2x128xf32>
    %23 = vector.shape_cast %20 : vector<2x128xf32> to vector<2x1x128xf32>
    tpu.vector_store %arg3[%c0_23, %c2_24, %c0_25], %23 {strides = array<i32>} : memref<2x16x128xf32, #tpu.memory_space<vmem>>, vector<2x1x128xf32>,
    %c0_26 = arith.constant 0 : index
    %c3 = arith.constant 3 : index
    %c0_27 = arith.constant 0 : index
    %24 = vector.load %arg1[%c0_26, %c3, %c0_27] : memref<2x16x128xbf16, #tpu.memory_space<vmem>>, vector<2x1x128xbf16>
    %25 = vector.shape_cast %24 : vector<2x1x128xbf16> to vector<2x128xbf16>
    %c3_28 = arith.constant 3 : index
    %c0_29 = arith.constant 0 : index
    %c0_30 = arith.constant 0 : index
    %26 = vector.load %arg2[%c3_28, %c0_29, %c0_30] : memref<16x128x128xbf16, #tpu.memory_space<vmem>>, vector<1x128x128xbf16>
    %27 = vector.shape_cast %26 : vector<1x128x128xbf16> to vector<128x128xbf16>
    %cst_31 = arith.constant dense<0.000000e+00> : vector<2x128xf32>
    %28 = tpu.matmul %25, %27, %cst_31 {dimension_numbers = #tpu.dot_dimension_numbers<[1], [0], [0], [1], [0, 0, 1, 1], [], []>} : vector<2x128xbf16>, vector<128x128xbf16>, vector<2x128xf32> -> vector<2x128xf32>
    %c0_32 = arith.constant 0 : index
    %c3_33 = arith.constant 3 : index
    %c0_34 = arith.constant 0 : index
    %29 = vector.load %arg3[%c0_32, %c3_33, %c0_34] : memref<2x16x128xf32, #tpu.memory_space<vmem>>, vector<2x1x128xf32>
    %30 = vector.shape_cast %29 : vector<2x1x128xf32> to vector<2x128xf32>
    %31 = vector.shape_cast %28 : vector<2x128xf32> to vector<2x1x128xf32>
    tpu.vector_store %arg3[%c0_32, %c3_33, %c0_34], %31 {strides = array<i32>} : memref<2x16x128xf32, #tpu.memory_space<vmem>>, vector<2x1x128xf32>,
    %c0_35 = arith.constant 0 : index
    %c4 = arith.constant 4 : index
    %c0_36 = arith.constant 0 : index
    %32 = vector.load %arg1[%c0_35, %c4, %c0_36] : memref<2x16x128xbf16, #tpu.memory_space<vmem>>, vector<2x1x128xbf16>
    %33 = vector.shape_cast %32 : vector<2x1x128xbf16> to vector<2x128xbf16>
    %c4_37 = arith.constant 4 : index
    %c0_38 = arith.constant 0 : index
    %c0_39 = arith.constant 0 : index
    %34 = vector.load %arg2[%c4_37, %c0_38, %c0_39] : memref<16x128x128xbf16, #tpu.memory_space<vmem>>, vector<1x128x128xbf16>
    %35 = vector.shape_cast %34 : vector<1x128x128xbf16> to vector<128x128xbf16>
    %cst_40 = arith.constant dense<0.000000e+00> : vector<2x128xf32>
    %36 = tpu.matmul %33, %35, %cst_40 {dimension_numbers = #tpu.dot_dimension_numbers<[1], [0], [0], [1], [0, 0, 1, 1], [], []>} : vector<2x128xbf16>, vector<128x128xbf16>, vector<2x128xf32> -> vector<2x128xf32>
    %c0_41 = arith.constant 0 : index
    %c4_42 = arith.constant 4 : index
    %c0_43 = arith.constant 0 : index
    %37 = vector.load %arg3[%c0_41, %c4_42, %c0_43] : memref<2x16x128xf32, #tpu.memory_space<vmem>>, vector<2x1x128xf32>
    %38 = vector.shape_cast %37 : vector<2x1x128xf32> to vector<2x128xf32>
    %39 = vector.shape_cast %36 : vector<2x128xf32> to vector<2x1x128xf32>
    tpu.vector_store %arg3[%c0_41, %c4_42, %c0_43], %39 {strides = array<i32>} : memref<2x16x128xf32, #tpu.memory_space<vmem>>, vector<2x1x128xf32>,
    %c0_44 = arith.constant 0 : index
    %c5 = arith.constant 5 : index
    %c0_45 = arith.constant 0 : index
    %40 = vector.load %arg1[%c0_44, %c5, %c0_45] : memref<2x16x128xbf16, #tpu.memory_space<vmem>>, vector<2x1x128xbf16>
    %41 = vector.shape_cast %40 : vector<2x1x128xbf16> to vector<2x128xbf16>
    %c5_46 = arith.constant 5 : index
    %c0_47 = arith.constant 0 : index
    %c0_48 = arith.constant 0 : index
    %42 = vector.load %arg2[%c5_46, %c0_47, %c0_48] : memref<16x128x128xbf16, #tpu.memory_space<vmem>>, vector<1x128x128xbf16>
    %43 = vector.shape_cast %42 : vector<1x128x128xbf16> to vector<128x128xbf16>
    %cst_49 = arith.constant dense<0.000000e+00> : vector<2x128xf32>
    %44 = tpu.matmul %41, %43, %cst_49 {dimension_numbers = #tpu.dot_dimension_numbers<[1], [0], [0], [1], [0, 0, 1, 1], [], []>} : vector<2x128xbf16>, vector<128x128xbf16>, vector<2x128xf32> -> vector<2x128xf32>
    %c0_50 = arith.constant 0 : index
    %c5_51 = arith.constant 5 : index
    %c0_52 = arith.constant 0 : index
    %45 = vector.load %arg3[%c0_50, %c5_51, %c0_52] : memref<2x16x128xf32, #tpu.memory_space<vmem>>, vector<2x1x128xf32>
    %46 = vector.shape_cast %45 : vector<2x1x128xf32> to vector<2x128xf32>
    %47 = vector.shape_cast %44 : vector<2x128xf32> to vector<2x1x128xf32>
    tpu.vector_store %arg3[%c0_50, %c5_51, %c0_52], %47 {strides = array<i32>} : memref<2x16x128xf32, #tpu.memory_space<vmem>>, vector<2x1x128xf32>,
    %c0_53 = arith.constant 0 : index
    %c6 = arith.constant 6 : index
    %c0_54 = arith.constant 0 : index
    %48 = vector.load %arg1[%c0_53, %c6, %c0_54] : memref<2x16x128xbf16, #tpu.memory_space<vmem>>, vector<2x1x128xbf16>
    %49 = vector.shape_cast %48 : vector<2x1x128xbf16> to vector<2x128xbf16>
    %c6_55 = arith.constant 6 : index
    %c0_56 = arith.constant 0 : index
    %c0_57 = arith.constant 0 : index
    %50 = vector.load %arg2[%c6_55, %c0_56, %c0_57] : memref<16x128x128xbf16, #tpu.memory_space<vmem>>, vector<1x128x128xbf16>
    %51 = vector.shape_cast %50 : vector<1x128x128xbf16> to vector<128x128xbf16>
    %cst_58 = arith.constant dense<0.000000e+00> : vector<2x128xf32>
    %52 = tpu.matmul %49, %51, %cst_58 {dimension_numbers = #tpu.dot_dimension_numbers<[1], [0], [0], [1], [0, 0, 1, 1], [], []>} : vector<2x128xbf16>, vector<128x128xbf16>, vector<2x128xf32> -> vector<2x128xf32>
    %c0_59 = arith.constant 0 : index
    %c6_60 = arith.constant 6 : index
    %c0_61 = arith.constant 0 : index
    %53 = vector.load %arg3[%c0_59, %c6_60, %c0_61] : memref<2x16x128xf32, #tpu.memory_space<vmem>>, vector<2x1x128xf32>
    %54 = vector.shape_cast %53 : vector<2x1x128xf32> to vector<2x128xf32>
    %55 = vector.shape_cast %52 : vector<2x128xf32> to vector<2x1x128xf32>
    tpu.vector_store %arg3[%c0_59, %c6_60, %c0_61], %55 {strides = array<i32>} : memref<2x16x128xf32, #tpu.memory_space<vmem>>, vector<2x1x128xf32>,
    %c0_62 = arith.constant 0 : index
    %c7 = arith.constant 7 : index
    %c0_63 = arith.constant 0 : index
    %56 = vector.load %arg1[%c0_62, %c7, %c0_63] : memref<2x16x128xbf16, #tpu.memory_space<vmem>>, vector<2x1x128xbf16>
    %57 = vector.shape_cast %56 : vector<2x1x128xbf16> to vector<2x128xbf16>
    %c7_64 = arith.constant 7 : index
    %c0_65 = arith.constant 0 : index
    %c0_66 = arith.constant 0 : index
    %58 = vector.load %arg2[%c7_64, %c0_65, %c0_66] : memref<16x128x128xbf16, #tpu.memory_space<vmem>>, vector<1x128x128xbf16>
    %59 = vector.shape_cast %58 : vector<1x128x128xbf16> to vector<128x128xbf16>
    %cst_67 = arith.constant dense<0.000000e+00> : vector<2x128xf32>
    %60 = tpu.matmul %57, %59, %cst_67 {dimension_numbers = #tpu.dot_dimension_numbers<[1], [0], [0], [1], [0, 0, 1, 1], [], []>} : vector<2x128xbf16>, vector<128x128xbf16>, vector<2x128xf32> -> vector<2x128xf32>
    %c0_68 = arith.constant 0 : index
    %c7_69 = arith.constant 7 : index
    %c0_70 = arith.constant 0 : index
    %61 = vector.load %arg3[%c0_68, %c7_69, %c0_70] : memref<2x16x128xf32, #tpu.memory_space<vmem>>, vector<2x1x128xf32>
    %62 = vector.shape_cast %61 : vector<2x1x128xf32> to vector<2x128xf32>
    %63 = vector.shape_cast %60 : vector<2x128xf32> to vector<2x1x128xf32>
    tpu.vector_store %arg3[%c0_68, %c7_69, %c0_70], %63 {strides = array<i32>} : memref<2x16x128xf32, #tpu.memory_space<vmem>>, vector<2x1x128xf32>,
    %c0_71 = arith.constant 0 : index
    %c8 = arith.constant 8 : index
    %c0_72 = arith.constant 0 : index
    %64 = vector.load %arg1[%c0_71, %c8, %c0_72] : memref<2x16x128xbf16, #tpu.memory_space<vmem>>, vector<2x1x128xbf16>
    %65 = vector.shape_cast %64 : vector<2x1x128xbf16> to vector<2x128xbf16>
    %c8_73 = arith.constant 8 : index
    %c0_74 = arith.constant 0 : index
    %c0_75 = arith.constant 0 : index
    %66 = vector.load %arg2[%c8_73, %c0_74, %c0_75] : memref<16x128x128xbf16, #tpu.memory_space<vmem>>, vector<1x128x128xbf16>
    %67 = vector.shape_cast %66 : vector<1x128x128xbf16> to vector<128x128xbf16>
    %cst_76 = arith.constant dense<0.000000e+00> : vector<2x128xf32>
    %68 = tpu.matmul %65, %67, %cst_76 {dimension_numbers = #tpu.dot_dimension_numbers<[1], [0], [0], [1], [0, 0, 1, 1], [], []>} : vector<2x128xbf16>, vector<128x128xbf16>, vector<2x128xf32> -> vector<2x128xf32>
    %c0_77 = arith.constant 0 : index
    %c8_78 = arith.constant 8 : index
    %c0_79 = arith.constant 0 : index
    %69 = vector.load %arg3[%c0_77, %c8_78, %c0_79] : memref<2x16x128xf32, #tpu.memory_space<vmem>>, vector<2x1x128xf32>
    %70 = vector.shape_cast %69 : vector<2x1x128xf32> to vector<2x128xf32>
    %71 = vector.shape_cast %68 : vector<2x128xf32> to vector<2x1x128xf32>
    tpu.vector_store %arg3[%c0_77, %c8_78, %c0_79], %71 {strides = array<i32>} : memref<2x16x128xf32, #tpu.memory_space<vmem>>, vector<2x1x128xf32>,
    %c0_80 = arith.constant 0 : index
    %c9 = arith.constant 9 : index
    %c0_81 = arith.constant 0 : index
    %72 = vector.load %arg1[%c0_80, %c9, %c0_81] : memref<2x16x128xbf16, #tpu.memory_space<vmem>>, vector<2x1x128xbf16>
    %73 = vector.shape_cast %72 : vector<2x1x128xbf16> to vector<2x128xbf16>
    %c9_82 = arith.constant 9 : index
    %c0_83 = arith.constant 0 : index
    %c0_84 = arith.constant 0 : index
    %74 = vector.load %arg2[%c9_82, %c0_83, %c0_84] : memref<16x128x128xbf16, #tpu.memory_space<vmem>>, vector<1x128x128xbf16>
    %75 = vector.shape_cast %74 : vector<1x128x128xbf16> to vector<128x128xbf16>
    %cst_85 = arith.constant dense<0.000000e+00> : vector<2x128xf32>
    %76 = tpu.matmul %73, %75, %cst_85 {dimension_numbers = #tpu.dot_dimension_numbers<[1], [0], [0], [1], [0, 0, 1, 1], [], []>} : vector<2x128xbf16>, vector<128x128xbf16>, vector<2x128xf32> -> vector<2x128xf32>
    %c0_86 = arith.constant 0 : index
    %c9_87 = arith.constant 9 : index
    %c0_88 = arith.constant 0 : index
    %77 = vector.load %arg3[%c0_86, %c9_87, %c0_88] : memref<2x16x128xf32, #tpu.memory_space<vmem>>, vector<2x1x128xf32>
    %78 = vector.shape_cast %77 : vector<2x1x128xf32> to vector<2x128xf32>
    %79 = vector.shape_cast %76 : vector<2x128xf32> to vector<2x1x128xf32>
    tpu.vector_store %arg3[%c0_86, %c9_87, %c0_88], %79 {strides = array<i32>} : memref<2x16x128xf32, #tpu.memory_space<vmem>>, vector<2x1x128xf32>,
    %c0_89 = arith.constant 0 : index
    %c10 = arith.constant 10 : index
    %c0_90 = arith.constant 0 : index
    %80 = vector.load %arg1[%c0_89, %c10, %c0_90] : memref<2x16x128xbf16, #tpu.memory_space<vmem>>, vector<2x1x128xbf16>
    %81 = vector.shape_cast %80 : vector<2x1x128xbf16> to vector<2x128xbf16>
    %c10_91 = arith.constant 10 : index
    %c0_92 = arith.constant 0 : index
    %c0_93 = arith.constant 0 : index
    %82 = vector.load %arg2[%c10_91, %c0_92, %c0_93] : memref<16x128x128xbf16, #tpu.memory_space<vmem>>, vector<1x128x128xbf16>
    %83 = vector.shape_cast %82 : vector<1x128x128xbf16> to vector<128x128xbf16>
    %cst_94 = arith.constant dense<0.000000e+00> : vector<2x128xf32>
    %84 = tpu.matmul %81, %83, %cst_94 {dimension_numbers = #tpu.dot_dimension_numbers<[1], [0], [0], [1], [0, 0, 1, 1], [], []>} : vector<2x128xbf16>, vector<128x128xbf16>, vector<2x128xf32> -> vector<2x128xf32>
    %c0_95 = arith.constant 0 : index
    %c10_96 = arith.constant 10 : index
    %c0_97 = arith.constant 0 : index
    %85 = vector.load %arg3[%c0_95, %c10_96, %c0_97] : memref<2x16x128xf32, #tpu.memory_space<vmem>>, vector<2x1x128xf32>
    %86 = vector.shape_cast %85 : vector<2x1x128xf32> to vector<2x128xf32>
    %87 = vector.shape_cast %84 : vector<2x128xf32> to vector<2x1x128xf32>
    tpu.vector_store %arg3[%c0_95, %c10_96, %c0_97], %87 {strides = array<i32>} : memref<2x16x128xf32, #tpu.memory_space<vmem>>, vector<2x1x128xf32>,
    %c0_98 = arith.constant 0 : index
    %c11 = arith.constant 11 : index
    %c0_99 = arith.constant 0 : index
    %88 = vector.load %arg1[%c0_98, %c11, %c0_99] : memref<2x16x128xbf16, #tpu.memory_space<vmem>>, vector<2x1x128xbf16>
    %89 = vector.shape_cast %88 : vector<2x1x128xbf16> to vector<2x128xbf16>
    %c11_100 = arith.constant 11 : index
    %c0_101 = arith.constant 0 : index
    %c0_102 = arith.constant 0 : index
    %90 = vector.load %arg2[%c11_100, %c0_101, %c0_102] : memref<16x128x128xbf16, #tpu.memory_space<vmem>>, vector<1x128x128xbf16>
    %91 = vector.shape_cast %90 : vector<1x128x128xbf16> to vector<128x128xbf16>
    %cst_103 = arith.constant dense<0.000000e+00> : vector<2x128xf32>
    %92 = tpu.matmul %89, %91, %cst_103 {dimension_numbers = #tpu.dot_dimension_numbers<[1], [0], [0], [1], [0, 0, 1, 1], [], []>} : vector<2x128xbf16>, vector<128x128xbf16>, vector<2x128xf32> -> vector<2x128xf32>
    %c0_104 = arith.constant 0 : index
    %c11_105 = arith.constant 11 : index
    %c0_106 = arith.constant 0 : index
    %93 = vector.load %arg3[%c0_104, %c11_105, %c0_106] : memref<2x16x128xf32, #tpu.memory_space<vmem>>, vector<2x1x128xf32>
    %94 = vector.shape_cast %93 : vector<2x1x128xf32> to vector<2x128xf32>
    %95 = vector.shape_cast %92 : vector<2x128xf32> to vector<2x1x128xf32>
    tpu.vector_store %arg3[%c0_104, %c11_105, %c0_106], %95 {strides = array<i32>} : memref<2x16x128xf32, #tpu.memory_space<vmem>>, vector<2x1x128xf32>,
    %c0_107 = arith.constant 0 : index
    %c12 = arith.constant 12 : index
    %c0_108 = arith.constant 0 : index
    %96 = vector.load %arg1[%c0_107, %c12, %c0_108] : memref<2x16x128xbf16, #tpu.memory_space<vmem>>, vector<2x1x128xbf16>
    %97 = vector.shape_cast %96 : vector<2x1x128xbf16> to vector<2x128xbf16>
    %c12_109 = arith.constant 12 : index
    %c0_110 = arith.constant 0 : index
    %c0_111 = arith.constant 0 : index
    %98 = vector.load %arg2[%c12_109, %c0_110, %c0_111] : memref<16x128x128xbf16, #tpu.memory_space<vmem>>, vector<1x128x128xbf16>
    %99 = vector.shape_cast %98 : vector<1x128x128xbf16> to vector<128x128xbf16>
    %cst_112 = arith.constant dense<0.000000e+00> : vector<2x128xf32>
    %100 = tpu.matmul %97, %99, %cst_112 {dimension_numbers = #tpu.dot_dimension_numbers<[1], [0], [0], [1], [0, 0, 1, 1], [], []>} : vector<2x128xbf16>, vector<128x128xbf16>, vector<2x128xf32> -> vector<2x128xf32>
    %c0_113 = arith.constant 0 : index
    %c12_114 = arith.constant 12 : index
    %c0_115 = arith.constant 0 : index
    %101 = vector.load %arg3[%c0_113, %c12_114, %c0_115] : memref<2x16x128xf32, #tpu.memory_space<vmem>>, vector<2x1x128xf32>
    %102 = vector.shape_cast %101 : vector<2x1x128xf32> to vector<2x128xf32>
    %103 = vector.shape_cast %100 : vector<2x128xf32> to vector<2x1x128xf32>
    tpu.vector_store %arg3[%c0_113, %c12_114, %c0_115], %103 {strides = array<i32>} : memref<2x16x128xf32, #tpu.memory_space<vmem>>, vector<2x1x128xf32>,
    %c0_116 = arith.constant 0 : index
    %c13 = arith.constant 13 : index
    %c0_117 = arith.constant 0 : index
    %104 = vector.load %arg1[%c0_116, %c13, %c0_117] : memref<2x16x128xbf16, #tpu.memory_space<vmem>>, vector<2x1x128xbf16>
    %105 = vector.shape_cast %104 : vector<2x1x128xbf16> to vector<2x128xbf16>
    %c13_118 = arith.constant 13 : index
    %c0_119 = arith.constant 0 : index
    %c0_120 = arith.constant 0 : index
    %106 = vector.load %arg2[%c13_118, %c0_119, %c0_120] : memref<16x128x128xbf16, #tpu.memory_space<vmem>>, vector<1x128x128xbf16>
    %107 = vector.shape_cast %106 : vector<1x128x128xbf16> to vector<128x128xbf16>
    %cst_121 = arith.constant dense<0.000000e+00> : vector<2x128xf32>
    %108 = tpu.matmul %105, %107, %cst_121 {dimension_numbers = #tpu.dot_dimension_numbers<[1], [0], [0], [1], [0, 0, 1, 1], [], []>} : vector<2x128xbf16>, vector<128x128xbf16>, vector<2x128xf32> -> vector<2x128xf32>
    %c0_122 = arith.constant 0 : index
    %c13_123 = arith.constant 13 : index
    %c0_124 = arith.constant 0 : index
    %109 = vector.load %arg3[%c0_122, %c13_123, %c0_124] : memref<2x16x128xf32, #tpu.memory_space<vmem>>, vector<2x1x128xf32>
    %110 = vector.shape_cast %109 : vector<2x1x128xf32> to vector<2x128xf32>
    %111 = vector.shape_cast %108 : vector<2x128xf32> to vector<2x1x128xf32>
    tpu.vector_store %arg3[%c0_122, %c13_123, %c0_124], %111 {strides = array<i32>} : memref<2x16x128xf32, #tpu.memory_space<vmem>>, vector<2x1x128xf32>,
    %c0_125 = arith.constant 0 : index
    %c14 = arith.constant 14 : index
    %c0_126 = arith.constant 0 : index
    %112 = vector.load %arg1[%c0_125, %c14, %c0_126] : memref<2x16x128xbf16, #tpu.memory_space<vmem>>, vector<2x1x128xbf16>
    %113 = vector.shape_cast %112 : vector<2x1x128xbf16> to vector<2x128xbf16>
    %c14_127 = arith.constant 14 : index
    %c0_128 = arith.constant 0 : index
    %c0_129 = arith.constant 0 : index
    %114 = vector.load %arg2[%c14_127, %c0_128, %c0_129] : memref<16x128x128xbf16, #tpu.memory_space<vmem>>, vector<1x128x128xbf16>
    %115 = vector.shape_cast %114 : vector<1x128x128xbf16> to vector<128x128xbf16>
    %cst_130 = arith.constant dense<0.000000e+00> : vector<2x128xf32>
    %116 = tpu.matmul %113, %115, %cst_130 {dimension_numbers = #tpu.dot_dimension_numbers<[1], [0], [0], [1], [0, 0, 1, 1], [], []>} : vector<2x128xbf16>, vector<128x128xbf16>, vector<2x128xf32> -> vector<2x128xf32>
    %c0_131 = arith.constant 0 : index
    %c14_132 = arith.constant 14 : index
    %c0_133 = arith.constant 0 : index
    %117 = vector.load %arg3[%c0_131, %c14_132, %c0_133] : memref<2x16x128xf32, #tpu.memory_space<vmem>>, vector<2x1x128xf32>
    %118 = vector.shape_cast %117 : vector<2x1x128xf32> to vector<2x128xf32>
    %119 = vector.shape_cast %116 : vector<2x128xf32> to vector<2x1x128xf32>
    tpu.vector_store %arg3[%c0_131, %c14_132, %c0_133], %119 {strides = array<i32>} : memref<2x16x128xf32, #tpu.memory_space<vmem>>, vector<2x1x128xf32>,
    %c0_134 = arith.constant 0 : index
    %c15 = arith.constant 15 : index
    %c0_135 = arith.constant 0 : index
    %120 = vector.load %arg1[%c0_134, %c15, %c0_135] : memref<2x16x128xbf16, #tpu.memory_space<vmem>>, vector<2x1x128xbf16>
    %121 = vector.shape_cast %120 : vector<2x1x128xbf16> to vector<2x128xbf16>
    %c15_136 = arith.constant 15 : index
    %c0_137 = arith.constant 0 : index
    %c0_138 = arith.constant 0 : index
    %122 = vector.load %arg2[%c15_136, %c0_137, %c0_138] : memref<16x128x128xbf16, #tpu.memory_space<vmem>>, vector<1x128x128xbf16>
    %123 = vector.shape_cast %122 : vector<1x128x128xbf16> to vector<128x128xbf16>
    %cst_139 = arith.constant dense<0.000000e+00> : vector<2x128xf32>
    %124 = tpu.matmul %121, %123, %cst_139 {dimension_numbers = #tpu.dot_dimension_numbers<[1], [0], [0], [1], [0, 0, 1, 1], [], []>} : vector<2x128xbf16>, vector<128x128xbf16>, vector<2x128xf32> -> vector<2x128xf32>
    %c0_140 = arith.constant 0 : index
    %c15_141 = arith.constant 15 : index
    %c0_142 = arith.constant 0 : index
    %125 = vector.load %arg3[%c0_140, %c15_141, %c0_142] : memref<2x16x128xf32, #tpu.memory_space<vmem>>, vector<2x1x128xf32>
    %126 = vector.shape_cast %125 : vector<2x1x128xf32> to vector<2x128xf32>
    %127 = vector.shape_cast %124 : vector<2x128xf32> to vector<2x1x128xf32>
    tpu.vector_store %arg3[%c0_140, %c15_141, %c0_142], %127 {strides = array<i32>} : memref<2x16x128xf32, #tpu.memory_space<vmem>>, vector<2x1x128xf32>,
    return
  }
  func.func @transform_0(%arg0: i32) -> (i32, i32, i32) {
    %c0_i32 = arith.constant 0 : i32
    %c0_i32_0 = arith.constant 0 : i32
    %c0_i32_1 = arith.constant 0 : i32
    return %c0_i32, %arg0, %c0_i32_0 : i32, i32, i32
  }
  func.func @transform_1(%arg0: i32) -> (i32, i32, i32) {
    %c0_i32 = arith.constant 0 : i32
    %c0_i32_0 = arith.constant 0 : i32
    %c0_i32_1 = arith.constant 0 : i32
    return %arg0, %c0_i32, %c0_i32_0 : i32, i32, i32
  }
  func.func @transform_2(%arg0: i32) -> (i32, i32, i32) {
    %c0_i32 = arith.constant 0 : i32
    %c0_i32_0 = arith.constant 0 : i32
    %c0_i32_1 = arith.constant 0 : i32
    return %c0_i32, %arg0, %c0_i32_0 : i32, i32, i32
  }
}

module attributes {stable_mosaic.version = 11 : i64} {
  func.func @_linear_add_relu_kernel(%arg0: i32, %arg1: memref<128x128xbf16, #tpu.memory_space<vmem>>, %arg2: memref<128x128xbf16, #tpu.memory_space<vmem>>, %arg3: memref<1x128xf32, #tpu.memory_space<vmem>>, %arg4: memref<128x128xbf16, #tpu.memory_space<vmem>>, %arg5: memref<128x128xbf16, #tpu.memory_space<vmem>>) attributes {dimension_semantics = [#tpu.dimension_semantics<parallel>], iteration_bounds = array<i64: 2>, scalar_prefetch = 0 : i64, scratch_operands = 0 : i64, tpu.core_type = #tpu.core_type<tc>, window_params = [{transform_indices = @transform_0, window_bounds = array<i64: 128, 128>}, {pipeline_mode = #tpu.pipeline_mode<synchronous>, transform_indices = @transform_1, window_bounds = array<i64: 128, 128>}, {pipeline_mode = #tpu.pipeline_mode<synchronous>, transform_indices = @transform_2, window_bounds = array<i64: 1, 128>}, {transform_indices = @transform_3, window_bounds = array<i64: 128, 128>}, {transform_indices = @transform_4, window_bounds = array<i64: 128, 128>}]} {
    %c0 = arith.constant 0 : index
    %c0_0 = arith.constant 0 : index
    %0 = vector.load %arg1[%c0, %c0_0] : memref<128x128xbf16, #tpu.memory_space<vmem>>, vector<128x128xbf16>
    %c0_1 = arith.constant 0 : index
    %c0_2 = arith.constant 0 : index
    %1 = vector.load %arg2[%c0_1, %c0_2] : memref<128x128xbf16, #tpu.memory_space<vmem>>, vector<128x128xbf16>
    %cst = arith.constant dense<0.000000e+00> : vector<128x128xf32>
    %2 = tpu.matmul %0, %1, %cst {dimension_numbers = #tpu.dot_dimension_numbers<[1], [0], [0], [1], [0, 0, 1, 1], [], []>} : vector<128x128xbf16>, vector<128x128xbf16>, vector<128x128xf32> -> vector<128x128xf32>
    %c0_3 = arith.constant 0 : index
    %c0_4 = arith.constant 0 : index
    %3 = vector.load %arg3[%c0_3, %c0_4] : memref<1x128xf32, #tpu.memory_space<vmem>>, vector<1x128xf32>
    %4 = vector.broadcast %3 : vector<1x128xf32> to vector<128x128xf32>
    %5 = arith.addf %2, %4 : vector<128x128xf32>
    %c0_5 = arith.constant 0 : index
    %c0_6 = arith.constant 0 : index
    %6 = vector.load %arg4[%c0_5, %c0_6] : memref<128x128xbf16, #tpu.memory_space<vmem>>, vector<128x128xbf16>
    %7 = arith.extf %6 : vector<128x128xbf16> to vector<128x128xf32>
    %8 = arith.addf %5, %7 : vector<128x128xf32>
    %cst_7 = arith.constant 0.000000e+00 : f32
    %9 = vector.broadcast %cst_7 : f32 to vector<128x128xf32>
    %10 = arith.maximumf %8, %9 : vector<128x128xf32>
    %11 = arith.truncf %10 : vector<128x128xf32> to vector<128x128xbf16>
    %c0_8 = arith.constant 0 : index
    %c0_9 = arith.constant 0 : index
    %12 = vector.load %arg5[%c0_8, %c0_9] : memref<128x128xbf16, #tpu.memory_space<vmem>>, vector<128x128xbf16>
    tpu.vector_store %arg5[%c0_8, %c0_9], %11 {strides = array<i32>} : memref<128x128xbf16, #tpu.memory_space<vmem>>, vector<128x128xbf16>,
    return
  }
  func.func @transform_0(%arg0: i32) -> (i32, i32) {
    %c0_i32 = arith.constant 0 : i32
    %c0_i32_0 = arith.constant 0 : i32
    return %arg0, %c0_i32 : i32, i32
  }
  func.func @transform_1(%arg0: i32) -> (i32, i32) {
    %c0_i32 = arith.constant 0 : i32
    %c0_i32_0 = arith.constant 0 : i32
    %c0_i32_1 = arith.constant 0 : i32
    return %c0_i32, %c0_i32_0 : i32, i32
  }
  func.func @transform_2(%arg0: i32) -> (i32, i32) {
    %c0_i32 = arith.constant 0 : i32
    %c0_i32_0 = arith.constant 0 : i32
    %c0_i32_1 = arith.constant 0 : i32
    return %c0_i32, %c0_i32_0 : i32, i32
  }
  func.func @transform_3(%arg0: i32) -> (i32, i32) {
    %c0_i32 = arith.constant 0 : i32
    %c0_i32_0 = arith.constant 0 : i32
    return %arg0, %c0_i32 : i32, i32
  }
  func.func @transform_4(%arg0: i32) -> (i32, i32) {
    %c0_i32 = arith.constant 0 : i32
    %c0_i32_0 = arith.constant 0 : i32
    return %arg0, %c0_i32 : i32, i32
  }
}

module attributes {stable_mosaic.version = 11 : i64} {
  func.func @_fc12_kernel(%arg0: i32, %arg1: memref<128x128xbf16, #tpu.memory_space<vmem>>, %arg2: memref<128x256xbf16, #tpu.memory_space<vmem>>, %arg3: memref<1x256xf32, #tpu.memory_space<vmem>>, %arg4: memref<256x2xbf16, #tpu.memory_space<vmem>>, %arg5: memref<1x2xf32, #tpu.memory_space<vmem>>, %arg6: memref<128x2xf32, #tpu.memory_space<vmem>>) attributes {dimension_semantics = [#tpu.dimension_semantics<parallel>], iteration_bounds = array<i64: 2>, scalar_prefetch = 0 : i64, scratch_operands = 0 : i64, tpu.core_type = #tpu.core_type<tc>, window_params = [{transform_indices = @transform_0, window_bounds = array<i64: 128, 128>}, {pipeline_mode = #tpu.pipeline_mode<synchronous>, transform_indices = @transform_1, window_bounds = array<i64: 128, 256>}, {pipeline_mode = #tpu.pipeline_mode<synchronous>, transform_indices = @transform_2, window_bounds = array<i64: 1, 256>}, {pipeline_mode = #tpu.pipeline_mode<synchronous>, transform_indices = @transform_3, window_bounds = array<i64: 256, 2>}, {pipeline_mode = #tpu.pipeline_mode<synchronous>, transform_indices = @transform_4, window_bounds = array<i64: 1, 2>}, {transform_indices = @transform_5, window_bounds = array<i64: 128, 2>}]} {
    %c0 = arith.constant 0 : index
    %c0_0 = arith.constant 0 : index
    %0 = vector.load %arg1[%c0, %c0_0] : memref<128x128xbf16, #tpu.memory_space<vmem>>, vector<128x128xbf16>
    %c0_1 = arith.constant 0 : index
    %c0_2 = arith.constant 0 : index
    %1 = vector.load %arg2[%c0_1, %c0_2] : memref<128x256xbf16, #tpu.memory_space<vmem>>, vector<128x256xbf16>
    %cst = arith.constant dense<0.000000e+00> : vector<128x256xf32>
    %2 = tpu.matmul %0, %1, %cst {dimension_numbers = #tpu.dot_dimension_numbers<[1], [0], [0], [1], [0, 0, 1, 1], [], []>} : vector<128x128xbf16>, vector<128x256xbf16>, vector<128x256xf32> -> vector<128x256xf32>
    %c0_3 = arith.constant 0 : index
    %c0_4 = arith.constant 0 : index
    %3 = vector.load %arg3[%c0_3, %c0_4] : memref<1x256xf32, #tpu.memory_space<vmem>>, vector<1x256xf32>
    %4 = vector.broadcast %3 : vector<1x256xf32> to vector<128x256xf32>
    %5 = arith.addf %2, %4 : vector<128x256xf32>
    %cst_5 = arith.constant 0.000000e+00 : f32
    %6 = vector.broadcast %cst_5 : f32 to vector<128x256xf32>
    %7 = arith.maximumf %5, %6 : vector<128x256xf32>
    %8 = arith.truncf %7 : vector<128x256xf32> to vector<128x256xbf16>
    %c0_6 = arith.constant 0 : index
    %c0_7 = arith.constant 0 : index
    %9 = vector.load %arg4[%c0_6, %c0_7] : memref<256x2xbf16, #tpu.memory_space<vmem>>, vector<256x2xbf16>
    %cst_8 = arith.constant dense<0.000000e+00> : vector<128x2xf32>
    %10 = tpu.matmul %8, %9, %cst_8 {dimension_numbers = #tpu.dot_dimension_numbers<[1], [0], [0], [1], [0, 0, 1, 1], [], []>} : vector<128x256xbf16>, vector<256x2xbf16>, vector<128x2xf32> -> vector<128x2xf32>
    %c0_9 = arith.constant 0 : index
    %c0_10 = arith.constant 0 : index
    %11 = vector.load %arg5[%c0_9, %c0_10] : memref<1x2xf32, #tpu.memory_space<vmem>>, vector<1x2xf32>
    %12 = vector.broadcast %11 : vector<1x2xf32> to vector<128x2xf32>
    %13 = arith.addf %10, %12 : vector<128x2xf32>
    %c0_11 = arith.constant 0 : index
    %c0_12 = arith.constant 0 : index
    %14 = vector.load %arg6[%c0_11, %c0_12] : memref<128x2xf32, #tpu.memory_space<vmem>>, vector<128x2xf32>
    tpu.vector_store %arg6[%c0_11, %c0_12], %13 {strides = array<i32>} : memref<128x2xf32, #tpu.memory_space<vmem>>, vector<128x2xf32>,
    return
  }
  func.func @transform_0(%arg0: i32) -> (i32, i32) {
    %c0_i32 = arith.constant 0 : i32
    %c0_i32_0 = arith.constant 0 : i32
    return %arg0, %c0_i32 : i32, i32
  }
  func.func @transform_1(%arg0: i32) -> (i32, i32) {
    %c0_i32 = arith.constant 0 : i32
    %c0_i32_0 = arith.constant 0 : i32
    %c0_i32_1 = arith.constant 0 : i32
    return %c0_i32, %c0_i32_0 : i32, i32
  }
  func.func @transform_2(%arg0: i32) -> (i32, i32) {
    %c0_i32 = arith.constant 0 : i32
    %c0_i32_0 = arith.constant 0 : i32
    %c0_i32_1 = arith.constant 0 : i32
    return %c0_i32, %c0_i32_0 : i32, i32
  }
  func.func @transform_3(%arg0: i32) -> (i32, i32) {
    %c0_i32 = arith.constant 0 : i32
    %c0_i32_0 = arith.constant 0 : i32
    %c0_i32_1 = arith.constant 0 : i32
    return %c0_i32, %c0_i32_0 : i32, i32
  }
  func.func @transform_4(%arg0: i32) -> (i32, i32) {
    %c0_i32 = arith.constant 0 : i32
    %c0_i32_0 = arith.constant 0 : i32
    %c0_i32_1 = arith.constant 0 : i32
    return %c0_i32, %c0_i32_0 : i32, i32
  }
  func.func @transform_5(%arg0: i32) -> (i32, i32) {
    %c0_i32 = arith.constant 0 : i32
    %c0_i32_0 = arith.constant 0 : i32
    return %arg0, %c0_i32 : i32, i32
  }
}

</mosaic_0001>

<llo_original>
// kernel: fno2d.10
$region0: #{fno2d.10}
  #allocation0 [shape = 'u32[]', space=smem, size = 0x4, offset = 0x4, fixed_abs, tag = 'smem constant byte address 0x4 - core index']
  #allocation1 [shape = 'u32[144,128]{1,0:T(1,128)}', space=vmem, size = 0x12000, scoped, tag = 'internal scratch']
  %s0 = inlined_call_operand.vmem [shape: bf16[256,6], index: 0, kind: input, shape index: {}]
  %s1 = inlined_call_operand.vmem [shape: bf16[6,128], index: 1, kind: input, shape index: {}]
  %s2 = inlined_call_operand.vmem [shape: f32[1,128], index: 2, kind: input, shape index: {}]
  %s3 = inlined_call_operand.vmem [shape: bf16[256,128], index: 3, kind: output, shape index: {}]
  %s4 = sld [smem:[#allocation0]]
  $region45: #{fno2d.10} parent=0
    _
  %s6 = ssub.s32 1, %s4
  %s7 = scalar_select 0, %s6, %s4
  loop: start=0, step=1, limit=4
  $region2: #{fno2d.10} parent=0 // loop_pre_header
    _
  $region3: #{fno2d.10} parent=0 // loop_header
    %s9 = sphi 0, %s13
    %p10 = scmp.ge.s32.totalorder %s9, 4
    %s19 = sphi 0, %s21
    %s22 = sphi 0, %s19
    %s23 = sphi 0, %s22
    %s39 = sphi 0, %s23
    %s43 = sphi 0, %s43
    %s45 = sphi 0, %s43
    %s46 = sphi 0, %s45
    %s60 = sphi 0, %s46
    %s64 = sphi 0, %s64
    %s66 = sphi 0, %s64
    %s67 = sphi 0, %s66
    %s81 = sphi 0, %s67
    %s87 = sphi 0, %s89
    %s90 = sphi 0, %s87
    %s91 = sphi 0, %s90
    %s107 = sphi 0, %s91
  $region4: #{fno2d.10} parent=0 // loop_header_branch
    %12 = sbr.rel (%p10) target = $region8
  $region5: #{fno2d.10} parent=0 // loop_body
    %s14 = ssub.s32 %s9, 1
    %s15 = ssub.s32 %s9, 2
    %s16 = sadd.s32 %s9, 1
    %s17 = ssub.s32 %s9, %s16
    %p18 = scmp.eq.s32.totalorder %s17, 0
    %s20 = sadd.s32 %s19, 1
    %s21 = scalar_select %p18, %s19, %s20
    %p24 = pneg %p18
    %p25 = scmp.eq.s32.totalorder %s9, 1
    %p26 = por %p24, %p25
    %p27 = scmp.ne.s32.totalorder %s19, %s22
    %p28 = scmp.eq.s32.totalorder %s9, 0
    %p29 = por %p27, %p28
    %p30 = scmp.ne.s32.totalorder %s19, %s22
    %p31 = scmp.eq.s32.totalorder %s14, 1
    %p32 = por %p30, %p31
    %p33 = scmp.ne.s32.totalorder %s22, %s23
    %p34 = scmp.eq.s32.totalorder %s14, 0
    %p35 = por %p33, %p34
    %p36 = scmp.ne.s32.totalorder %s22, %s23
    %p37 = scmp.eq.s32.totalorder %s15, 1
    %p38 = por %p36, %p37
    %p40 = scmp.ne.s32.totalorder %s23, %s39
    %p41 = scmp.eq.s32.totalorder %s15, 0
    %p42 = por %p40, %p41
    %s44 = sadd.s32 %s43, 1
    %p47 = scmp.eq.s32.totalorder %s9, 1
    %p48 = scmp.ne.s32.totalorder %s43, %s45
    %p49 = scmp.eq.s32.totalorder %s9, 0
    %p50 = por %p48, %p49
    %p51 = scmp.ne.s32.totalorder %s43, %s45
    %p52 = scmp.eq.s32.totalorder %s14, 1
    %p53 = por %p51, %p52
    %p54 = scmp.ne.s32.totalorder %s45, %s46
    %p55 = scmp.eq.s32.totalorder %s14, 0
    %p56 = por %p54, %p55
    %p57 = scmp.ne.s32.totalorder %s45, %s46
    %p58 = scmp.eq.s32.totalorder %s15, 1
    %p59 = por %p57, %p58
    %p61 = scmp.ne.s32.totalorder %s46, %s60
    %p62 = scmp.eq.s32.totalorder %s15, 0
    %p63 = por %p61, %p62
    %s65 = sadd.s32 %s64, 1
    %p68 = scmp.eq.s32.totalorder %s9, 1
    %p69 = scmp.ne.s32.totalorder %s64, %s66
    %p70 = scmp.eq.s32.totalorder %s9, 0
    %p71 = por %p69, %p70
    %p72 = scmp.ne.s32.totalorder %s64, %s66
    %p73 = scmp.eq.s32.totalorder %s14, 1
    %p74 = por %p72, %p73
    %p75 = scmp.ne.s32.totalorder %s66, %s67
    %p76 = scmp.eq.s32.totalorder %s14, 0
    %p77 = por %p75, %p76
    %p78 = scmp.ne.s32.totalorder %s66, %s67
    %p79 = scmp.eq.s32.totalorder %s15, 1
    %p80 = por %p78, %p79
    %p82 = scmp.ne.s32.totalorder %s67, %s81
    %p83 = scmp.eq.s32.totalorder %s15, 0
    %p84 = por %p82, %p83
    %s85 = ssub.s32 %s9, %s16
    %p86 = scmp.eq.s32.totalorder %s85, 0
    %s88 = sadd.s32 %s87, 1
    %s89 = scalar_select %p86, %s87, %s88
    %p92 = pneg %p86
    %p93 = scmp.eq.s32.totalorder %s9, 1
    %p94 = por %p92, %p93
    %p95 = scmp.ne.s32.totalorder %s87, %s90
    %p96 = scmp.eq.s32.totalorder %s9, 0
    %p97 = por %p95, %p96
    %p98 = scmp.ne.s32.totalorder %s87, %s90
    %p99 = scmp.eq.s32.totalorder %s14, 1
    %p100 = por %p98, %p99
    %p101 = scmp.ne.s32.totalorder %s90, %s91
    %p102 = scmp.eq.s32.totalorder %s14, 0
    %p103 = por %p101, %p102
    %p104 = scmp.ne.s32.totalorder %s90, %s91
    %p105 = scmp.eq.s32.totalorder %s15, 1
    %p106 = por %p104, %p105
    %p108 = scmp.ne.s32.totalorder %s91, %s107
    %p109 = scmp.eq.s32.totalorder %s15, 0
    %p110 = por %p108, %p109
    %p111 = scmp.le.s32.totalorder 1, %s9
    %p112 = scmp.lt.s32.totalorder %s9, 3
    %p113 = pnand %p111, %p112
    %p114 = pneg %p113
    // Predicated region
    $region9: #{fno2d.10} parent=5 // pred_check
      _
    $region10: #{fno2d.10} parent=5 // pred_check_branch
      %116 = sbr.rel (%p113) target = $region12
    $region11: #{fno2d.10} parent=5 // pred_region
      %s117 = ssub.s32 %s9, 1
      // Predicated region
      $region13: #{fno2d.10} parent=11 // pred_check
        %p118 = pneg %p56
      $region14: #{fno2d.10} parent=11 // pred_check_branch
        %120 = sbr.rel (%p118) target = $region16
      $region15: #{fno2d.10} parent=11 // pred_region
        _
      $region16: #{fno2d.10} parent=11 // pred_fallthru
        _
      // Predicated region
      $region17: #{fno2d.10} parent=11 // pred_check
        %p121 = pneg %p77
      $region18: #{fno2d.10} parent=11 // pred_check_branch
        %123 = sbr.rel (%p121) target = $region20
      $region19: #{fno2d.10} parent=11 // pred_region
        _
      $region20: #{fno2d.10} parent=11 // pred_fallthru
        _
    $region12: #{fno2d.10} parent=5 // pred_fallthru
      _
    %p124 = scmp.lt.s32.totalorder %s9, 2
    // Predicated region
    $region21: #{fno2d.10} parent=5 // pred_check
      %p125 = pneg %p124
    $region22: #{fno2d.10} parent=5 // pred_check_branch
      %127 = sbr.rel (%p125) target = $region24
    $region23: #{fno2d.10} parent=5 // pred_region
      // Predicated region
      $region25: #{fno2d.10} parent=23 // pred_check
        %p128 = pneg %p29
      $region26: #{fno2d.10} parent=23 // pred_check_branch
        %130 = sbr.rel (%p128) target = $region28
      $region27: #{fno2d.10} parent=23 // pred_region
        %s131 = smul.u32 16, %s9
        %p132 = scmp.lt.s32.totalorder %s131, 31
        %s133 = scalar_select %p132, %s131, 31
        %s134 = smul.addr %s133, 4
        %s135 = scalar_lea.vmem %s0, %s134
        %s136 = smul.u32 16, %s9
      $region28: #{fno2d.10} parent=23 // pred_fallthru
        _
    $region24: #{fno2d.10} parent=5 // pred_fallthru
      _
    %p137 = scmp.le.s32.totalorder 1, %s9
    %p138 = scmp.lt.s32.totalorder %s9, 3
    %p139 = pnand %p137, %p138
    %p140 = pneg %p139
    // Predicated region
    $region29: #{fno2d.10} parent=5 // pred_check
      _
    $region30: #{fno2d.10} parent=5 // pred_check_branch
      %142 = sbr.rel (%p139) target = $region32
    $region31: #{fno2d.10} parent=5 // pred_region
      %s143 = ssub.s32 %s9, 1
      %s144 = smul.u32 16, %s14
      %p145 = scmp.lt.s32.totalorder %s144, 31
      %s146 = scalar_select %p145, %s144, 31
      %s147 = smul.addr %s146, 4
      %s148 = scalar_lea.vmem %s0, %s147
      %p149 = pneg %p35
      %p150 = pneg %p32
      %p151 = pneg %p56
      %p152 = pneg %p53
      %p153 = pneg %p77
      %p154 = pneg %p74
      %p155 = pneg %p103
      %p156 = pneg %p100
      %s157 = smul.u32 16, %s14
      %p158 = scmp.lt.s32.totalorder %s157, 31
      %s159 = scalar_select %p158, %s157, 31
      %s160 = smul.addr %s159, 4
      %s161 = scalar_lea.vmem %s3, %s160
      %s162 = smul.u32 16, %s14
      %p163 = scmp.lt.s32.totalorder %s162, 31
      %s164 = scalar_select %p163, %s162, 31
      %s165 = smul.addr %s164, 4
      %s166 = scalar_lea.vmem %s0, %s165
      %s167 = smul.u32 16, %s14
      %s168 = smul.u32 16, %s14
      %p169 = scmp.lt.s32.totalorder %s168, 31
      %s170 = scalar_select %p169, %s168, 31
      %s171 = smul.addr %s170, 4
      %s172 = scalar_lea.vmem %s3, %s171
      %s173 = smul.u32 16, %s14
      %v175 = vld [vmem:[%s166] sm:$0xf]
      %v176 = vld [vmem:[%s166 + $0x4] sm:$0xf]
      %v177 = vld [vmem:[%s166 + $0x8] sm:$0xf]
      %v178 = vld [vmem:[%s166 + $0xc] sm:$0xf]
      %v179 = vld [vmem:[%s166 + $0x10] sm:$0xf]
      %v180 = vld [vmem:[%s166 + $0x14] sm:$0xf]
      %v181 = vld [vmem:[%s166 + $0x18] sm:$0xf]
      %v182 = vld [vmem:[%s166 + $0x1c] sm:$0xf]
      %v183 = vld [vmem:[%s166 + $0x20] sm:$0xf]
      %v184 = vld [vmem:[%s166 + $0x24] sm:$0xf]
      %v185 = vld [vmem:[%s166 + $0x28] sm:$0xf]
      %v186 = vld [vmem:[%s166 + $0x2c] sm:$0xf]
      %v187 = vld [vmem:[%s166 + $0x30] sm:$0xf]
      %v188 = vld [vmem:[%s166 + $0x34] sm:$0xf]
      %v189 = vld [vmem:[%s166 + $0x38] sm:$0xf]
      %v190 = vld [vmem:[%s166 + $0x3c] sm:$0xf]
      %v191 = vld [vmem:[%s1] sm:$0x7]
      %v192 = vld [vmem:[%s2] sm:$0x1]
      %v194 = vlaneseq
      %v195 = vshrl.u32 %v194, 7
      %v196 = vsub.s32 0, %v195
      %v197 = vrot.slane %v192, %v196
      %v215 = vunpack.c.l.b16 %v175
      %v216 = vunpack.c.l.b16 %v176
      %v217 = vunpack.c.l.b16 %v177
      %v218 = vunpack.c.l.b16 %v178
      %v219 = vunpack.c.l.b16 %v179
      %v220 = vunpack.c.l.b16 %v180
      %v221 = vunpack.c.l.b16 %v181
      %v222 = vunpack.c.l.b16 %v182
      %v223 = vunpack.c.l.b16 %v183
      %v224 = vunpack.c.l.b16 %v184
      %v225 = vunpack.c.l.b16 %v185
      %v226 = vunpack.c.l.b16 %v186
      %v227 = vunpack.c.l.b16 %v187
      %v228 = vunpack.c.l.b16 %v188
      %v229 = vunpack.c.l.b16 %v189
      %v230 = vunpack.c.l.b16 %v190
      %v231 = vpack.c.b16 %v216, %v215
      %v232 = vpack.c.b16 %v218, %v217
      %v233 = vpack.c.b16 %v220, %v219
      %v234 = vpack.c.b16 %v222, %v221
      %v235 = vpack.c.b16 %v224, %v223
      %v236 = vpack.c.b16 %v226, %v225
      %v237 = vpack.c.b16 %v228, %v227
      %v238 = vpack.c.b16 %v230, %v229
      %vm239 = vcmask 48128
      %v241 = vsel %vm239, %v231, 0
      %v244 = vsel %vm239, %v232, 0
      %v247 = vsel %vm239, %v233, 0
      %v250 = vsel %vm239, %v234, 0
      %v253 = vsel %vm239, %v235, 0
      %v256 = vsel %vm239, %v236, 0
      %v259 = vsel %vm239, %v237, 0
      %v262 = vsel %vm239, %v238, 0
      %vm264 = vcmask 1042432
      %v266 = vsel %vm264, %v191, 0
      %268 = vmatprep.subr.bf16.mxu0 0
      %269 = vmatpush1.bf16.msra.mxu0 %v266
      %270 = vmatprep.subr.bf16.mxu0 0
      %271 = vmatpush1.bf16.msra.mxu0 0
      %272 = vmatprep.subr.bf16.mxu0 0
      %273 = vmatpush1.bf16.msra.mxu0 0
      %274 = vmatprep.subr.bf16.mxu0 0
      %275 = vmatpush1.bf16.msra.mxu0 0
      %276 = vmatprep.subr.bf16.mxu0 0
      %277 = vmatpush1.bf16.msra.mxu0 0
      %278 = vmatprep.subr.bf16.mxu0 0
      %279 = vmatpush1.bf16.msra.mxu0 0
      %280 = vmatprep.subr.bf16.mxu0 0
      %281 = vmatpush1.bf16.msra.mxu0 0
      %282 = vmatprep.subr.bf16.mxu0 0
      %283 = vmatpush1.bf16.msra.mxu0 0
      %284 = vmatprep.subr.bf16.mxu0 0
      %285 = vmatpush1.bf16.msra.mxu0 0
      %286 = vmatprep.subr.bf16.mxu0 0
      %287 = vmatpush1.bf16.msra.mxu0 0
      %288 = vmatprep.subr.bf16.mxu0 0
      %289 = vmatpush1.bf16.msra.mxu0 0
      %290 = vmatprep.subr.bf16.mxu0 0
      %291 = vmatpush1.bf16.msra.mxu0 0
      %292 = vmatprep.subr.bf16.mxu0 0
      %293 = vmatpush1.bf16.msra.mxu0 0
      %294 = vmatprep.subr.bf16.mxu0 0
      %295 = vmatpush1.bf16.msra.mxu0 0
      %296 = vmatprep.subr.bf16.mxu0 0
      %297 = vmatpush1.bf16.msra.mxu0 0
      %298 = vmatprep.subr.bf16.mxu0 0
      %299 = vmatpush1.bf16.msra.mxu0 0
      %300 = vmatprep.mubr.bf16.mxu0 0
      %301 = vmatmul.mubr.bf16.gmra.mrb[0].mxu0 %v241
      %v302 = vpop.f32.mrb[0].mxu0
      %v303 = vadd.f32 %v197, %v302
      %v304 = vpop.f32.mrb[0].mxu0
      %v305 = vpop.f32.mrb[0].mxu0
      %v306 = vadd.f32 %v197, %v305
      %v307 = vpop.f32.mrb[0].mxu0
      %308 = vmatprep.mubr.bf16.mxu0 0
      %309 = vmatmul.mubr.bf16.gmra.mrb[0].mxu0 %v244
      %v310 = vpop.f32.mrb[0].mxu0
      %v311 = vadd.f32 %v197, %v310
      %v312 = vpop.f32.mrb[0].mxu0
      %v313 = vpop.f32.mrb[0].mxu0
      %v314 = vadd.f32 %v197, %v313
      %v315 = vpop.f32.mrb[0].mxu0
      %316 = vmatprep.mubr.bf16.mxu0 0
      %317 = vmatmul.mubr.bf16.gmra.mrb[0].mxu0 %v247
      %v318 = vpop.f32.mrb[0].mxu0
      %v319 = vadd.f32 %v197, %v318
      %v320 = vpop.f32.mrb[0].mxu0
      %v321 = vpop.f32.mrb[0].mxu0
      %v322 = vadd.f32 %v197, %v321
      %v323 = vpop.f32.mrb[0].mxu0
      %324 = vmatprep.mubr.bf16.mxu0 0
      %325 = vmatmul.mubr.bf16.gmra.mrb[0].mxu0 %v250
      %v326 = vpop.f32.mrb[0].mxu0
      %v327 = vadd.f32 %v197, %v326
      %v328 = vpop.f32.mrb[0].mxu0
      %v329 = vpop.f32.mrb[0].mxu0
      %v330 = vadd.f32 %v197, %v329
      %v331 = vpop.f32.mrb[0].mxu0
      %332 = vmatprep.mubr.bf16.mxu0 0
      %333 = vmatmul.mubr.bf16.gmra.mrb[0].mxu0 %v253
      %v334 = vpop.f32.mrb[0].mxu0
      %v335 = vadd.f32 %v197, %v334
      %v336 = vpop.f32.mrb[0].mxu0
      %v337 = vpop.f32.mrb[0].mxu0
      %v338 = vadd.f32 %v197, %v337
      %v339 = vpop.f32.mrb[0].mxu0
      %340 = vmatprep.mubr.bf16.mxu0 0
      %341 = vmatmul.mubr.bf16.gmra.mrb[0].mxu0 %v256
      %v342 = vpop.f32.mrb[0].mxu0
      %v343 = vadd.f32 %v197, %v342
      %v344 = vpop.f32.mrb[0].mxu0
      %v345 = vpop.f32.mrb[0].mxu0
      %v346 = vadd.f32 %v197, %v345
      %v347 = vpop.f32.mrb[0].mxu0
      %348 = vmatprep.mubr.bf16.mxu0 0
      %349 = vmatmul.mubr.bf16.gmra.mrb[0].mxu0 %v259
      %v350 = vpop.f32.mrb[0].mxu0
      %v351 = vadd.f32 %v197, %v350
      %v352 = vpop.f32.mrb[0].mxu0
      %v353 = vpop.f32.mrb[0].mxu0
      %v354 = vadd.f32 %v197, %v353
      %v355 = vpop.f32.mrb[0].mxu0
      %356 = vmatprep.mubr.bf16.mxu0 0
      %357 = vmatmul.mubr.bf16.gmra.mrb[0].mxu0 %v262
      %v358 = vpop.f32.mrb[0].mxu0
      %v359 = vadd.f32 %v197, %v358
      %v360 = vpop.f32.mrb[0].mxu0
      %v361 = vpop.f32.mrb[0].mxu0
      %v362 = vadd.f32 %v197, %v361
      %v363 = vpop.f32.mrb[0].mxu0
      %364 = vdwg.mxu0
      %v365 = vpack.c.bf16 %v306, %v303
      %v366 = vpack.c.bf16 %v314, %v311
      %v367 = vpack.c.bf16 %v322, %v319
      %v368 = vpack.c.bf16 %v330, %v327
      %v369 = vpack.c.bf16 %v338, %v335
      %v370 = vpack.c.bf16 %v346, %v343
      %v371 = vpack.c.bf16 %v354, %v351
      %v372 = vpack.c.bf16 %v362, %v359
      %v381 = vunpack.c.l.b16 %v365
      %v382 = vunpack.c.h.b16 %v365
      %v383 = vunpack.c.l.b16 %v366
      %v384 = vunpack.c.h.b16 %v366
      %v385 = vunpack.c.l.b16 %v367
      %v386 = vunpack.c.h.b16 %v367
      %v387 = vunpack.c.l.b16 %v368
      %v388 = vunpack.c.h.b16 %v368
      %v389 = vunpack.c.l.b16 %v369
      %v390 = vunpack.c.h.b16 %v369
      %v391 = vunpack.c.l.b16 %v370
      %v392 = vunpack.c.h.b16 %v370
      %v393 = vunpack.c.l.b16 %v371
      %v394 = vunpack.c.h.b16 %v371
      %v395 = vunpack.c.l.b16 %v372
      %v396 = vunpack.c.h.b16 %v372
      %v397 = vpack.c.b16 %v381, %v381
      %v398 = vpack.c.b16 %v382, %v382
      %v399 = vpack.c.b16 %v383, %v383
      %v400 = vpack.c.b16 %v384, %v384
      %v401 = vpack.c.b16 %v385, %v385
      %v402 = vpack.c.b16 %v386, %v386
      %v403 = vpack.c.b16 %v387, %v387
      %v404 = vpack.c.b16 %v388, %v388
      %v405 = vpack.c.b16 %v389, %v389
      %v406 = vpack.c.b16 %v390, %v390
      %v407 = vpack.c.b16 %v391, %v391
      %v408 = vpack.c.b16 %v392, %v392
      %v409 = vpack.c.b16 %v393, %v393
      %v410 = vpack.c.b16 %v394, %v394
      %v411 = vpack.c.b16 %v395, %v395
      %v412 = vpack.c.b16 %v396, %v396
      %429 = vst [vmem:[%s172] sm:$0xf] %v397
      %430 = vst [vmem:[%s172 + $0x4] sm:$0xf] %v398
      %431 = vst [vmem:[%s172 + $0x8] sm:$0xf] %v399
      %432 = vst [vmem:[%s172 + $0xc] sm:$0xf] %v400
      %433 = vst [vmem:[%s172 + $0x10] sm:$0xf] %v401
      %434 = vst [vmem:[%s172 + $0x14] sm:$0xf] %v402
      %435 = vst [vmem:[%s172 + $0x18] sm:$0xf] %v403
      %436 = vst [vmem:[%s172 + $0x1c] sm:$0xf] %v404
      %437 = vst [vmem:[%s172 + $0x20] sm:$0xf] %v405
      %438 = vst [vmem:[%s172 + $0x24] sm:$0xf] %v406
      %439 = vst [vmem:[%s172 + $0x28] sm:$0xf] %v407
      %440 = vst [vmem:[%s172 + $0x2c] sm:$0xf] %v408
      %441 = vst [vmem:[%s172 + $0x30] sm:$0xf] %v409
      %442 = vst [vmem:[%s172 + $0x34] sm:$0xf] %v410
      %443 = vst [vmem:[%s172 + $0x38] sm:$0xf] %v411
      %444 = vst [vmem:[%s172 + $0x3c] sm:$0xf] %v412
      %s445 = smul.u32 16, %s14
      %p446 = scmp.lt.s32.totalorder %s445, 31
      %s447 = scalar_select %p446, %s445, 31
      %s448 = smul.addr %s447, 4
      %s449 = scalar_lea.vmem %s3, %s448
      // Predicated region
      $region33: #{fno2d.10} parent=31 // pred_check
        %p450 = pneg %p100
      $region34: #{fno2d.10} parent=31 // pred_check_branch
        %452 = sbr.rel (%p450) target = $region36
      $region35: #{fno2d.10} parent=31 // pred_region
        %s453 = smul.u32 16, %s14
      $region36: #{fno2d.10} parent=31 // pred_fallthru
        _
    $region32: #{fno2d.10} parent=5 // pred_fallthru
      _
    %p454 = scmp.le.s32.totalorder 2, %s9
    // Predicated region
    $region37: #{fno2d.10} parent=5 // pred_check
      %p455 = pneg %p454
    $region38: #{fno2d.10} parent=5 // pred_check_branch
      %457 = sbr.rel (%p455) target = $region40
    $region39: #{fno2d.10} parent=5 // pred_region
      %s458 = ssub.s32 %s9, 2
      // Predicated region
      $region41: #{fno2d.10} parent=39 // pred_check
        %p459 = pneg %p106
      $region42: #{fno2d.10} parent=39 // pred_check_branch
        %461 = sbr.rel (%p459) target = $region44
      $region43: #{fno2d.10} parent=39 // pred_region
        %s462 = smul.u32 16, %s15
        %p463 = scmp.lt.s32.totalorder %s462, 31
        %s464 = scalar_select %p463, %s462, 31
        %s465 = smul.addr %s464, 4
        %s466 = scalar_lea.vmem %s3, %s465
      $region44: #{fno2d.10} parent=39 // pred_fallthru
        _
    $region40: #{fno2d.10} parent=5 // pred_fallthru
      _
  $region6: #{fno2d.10} parent=0 // loop_footer
    %s13 = sadd.s32 1, %s9
  $region7: #{fno2d.10} parent=0 // loop_footer_branch
    %8 = sbr.rel target = $region3
  $region8: #{fno2d.10} parent=0 // loop_exit
    _

// kernel: reverse.8
$region0: #{reverse.8}
  #allocation0 [shape = 's32[1]{0}', space=sflag, size = 0x4, scoped, tag = 'scoped memory for reverse.8']
  %s0 = inlined_call_operand.vmem [shape: f32[2,64,16,7], index: 0, kind: input, shape index: {}]
  %s1 = inlined_call_operand.vmem [shape: f32[2,64,16,7], index: 1, kind: output, shape index: {}]
  %s2 = scalar_lea.vmem %s0, 96
  %v3 = vld [vmem:[%s2] sm:$0xff]
  %4 = vst [vmem:[%s1] sm:$0xff] %v3
  %s5 = scalar_lea.vmem %s0, 208
  %v6 = vld [vmem:[%s5] sm:$0xff]
  %s7 = scalar_lea.vmem %s1, 112
  %8 = vst [vmem:[%s7] sm:$0xff] %v6
  %s9 = scalar_lea.vmem %s0, 80
  %v10 = vld [vmem:[%s9] sm:$0xff]
  %s11 = scalar_lea.vmem %s1, 16
  %12 = vst [vmem:[%s11] sm:$0xff] %v10
  %s13 = scalar_lea.vmem %s0, 192
  %v14 = vld [vmem:[%s13] sm:$0xff]
  %s15 = scalar_lea.vmem %s1, 128
  %16 = vst [vmem:[%s15] sm:$0xff] %v14
  %s17 = scalar_lea.vmem %s0, 64
  %v18 = vld [vmem:[%s17] sm:$0xff]
  %s19 = scalar_lea.vmem %s1, 32
  %20 = vst [vmem:[%s19] sm:$0xff] %v18
  %s21 = scalar_lea.vmem %s0, 176
  %v22 = vld [vmem:[%s21] sm:$0xff]
  %s23 = scalar_lea.vmem %s1, 144
  %24 = vst [vmem:[%s23] sm:$0xff] %v22
  %s25 = scalar_lea.vmem %s0, 48
  %v26 = vld [vmem:[%s25] sm:$0xff]
  %s27 = scalar_lea.vmem %s1, 48
  %28 = vst [vmem:[%s27] sm:$0xff] %v26
  %s29 = scalar_lea.vmem %s0, 160
  %v30 = vld [vmem:[%s29] sm:$0xff]
  %s31 = scalar_lea.vmem %s1, 160
  %32 = vst [vmem:[%s31] sm:$0xff] %v30
  %s33 = scalar_lea.vmem %s0, 32
  %v34 = vld [vmem:[%s33] sm:$0xff]
  %s35 = scalar_lea.vmem %s1, 64
  %36 = vst [vmem:[%s35] sm:$0xff] %v34
  %s37 = scalar_lea.vmem %s0, 144
  %v38 = vld [vmem:[%s37] sm:$0xff]
  %s39 = scalar_lea.vmem %s1, 176
  %40 = vst [vmem:[%s39] sm:$0xff] %v38
  %s41 = scalar_lea.vmem %s0, 16
  %v42 = vld [vmem:[%s41] sm:$0xff]
  %s43 = scalar_lea.vmem %s1, 80
  %44 = vst [vmem:[%s43] sm:$0xff] %v42
  %s45 = scalar_lea.vmem %s0, 128
  %v46 = vld [vmem:[%s45] sm:$0xff]
  %s47 = scalar_lea.vmem %s1, 192
  %48 = vst [vmem:[%s47] sm:$0xff] %v46
  %v49 = vld [vmem:[%s0] sm:$0xff]
  %s50 = scalar_lea.vmem %s1, 96
  %51 = vst [vmem:[%s50] sm:$0xff] %v49
  %s52 = scalar_lea.vmem %s0, 112
  %v53 = vld [vmem:[%s52] sm:$0xff]
  %s54 = scalar_lea.vmem %s1, 208
  %55 = vst [vmem:[%s54] sm:$0xff] %v53
  %s56 = scalar_lea.vmem %s0, 104
  %v57 = vld [vmem:[%s56] sm:$0xff]
  %s58 = scalar_lea.vmem %s1, 8
  %59 = vst [vmem:[%s58] sm:$0xff] %v57
  %s60 = scalar_lea.vmem %s0, 216
  %v61 = vld [vmem:[%s60] sm:$0xff]
  %s62 = scalar_lea.vmem %s1, 120
  %63 = vst [vmem:[%s62] sm:$0xff] %v61
  %s64 = scalar_lea.vmem %s0, 88
  %v65 = vld [vmem:[%s64] sm:$0xff]
  %s66 = scalar_lea.vmem %s1, 24
  %67 = vst [vmem:[%s66] sm:$0xff] %v65
  %s68 = scalar_lea.vmem %s0, 200
  %v69 = vld [vmem:[%s68] sm:$0xff]
  %s70 = scalar_lea.vmem %s1, 136
  %71 = vst [vmem:[%s70] sm:$0xff] %v69
  %s72 = scalar_lea.vmem %s0, 72
  %v73 = vld [vmem:[%s72] sm:$0xff]
  %s74 = scalar_lea.vmem %s1, 40
  %75 = vst [vmem:[%s74] sm:$0xff] %v73
  %s76 = scalar_lea.vmem %s0, 184
  %v77 = vld [vmem:[%s76] sm:$0xff]
  %s78 = scalar_lea.vmem %s1, 152
  %79 = vst [vmem:[%s78] sm:$0xff] %v77
  %s80 = scalar_lea.vmem %s0, 56
  %v81 = vld [vmem:[%s80] sm:$0xff]
  %s82 = scalar_lea.vmem %s1, 56
  %83 = vst [vmem:[%s82] sm:$0xff] %v81
  %s84 = scalar_lea.vmem %s0, 168
  %v85 = vld [vmem:[%s84] sm:$0xff]
  %s86 = scalar_lea.vmem %s1, 168
  %87 = vst [vmem:[%s86] sm:$0xff] %v85
  %s88 = scalar_lea.vmem %s0, 40
  %v89 = vld [vmem:[%s88] sm:$0xff]
  %s90 = scalar_lea.vmem %s1, 72
  %91 = vst [vmem:[%s90] sm:$0xff] %v89
  %s92 = scalar_lea.vmem %s0, 152
  %v93 = vld [vmem:[%s92] sm:$0xff]
  %s94 = scalar_lea.vmem %s1, 184
  %95 = vst [vmem:[%s94] sm:$0xff] %v93
  %s96 = scalar_lea.vmem %s0, 24
  %v97 = vld [vmem:[%s96] sm:$0xff]
  %s98 = scalar_lea.vmem %s1, 88
  %99 = vst [vmem:[%s98] sm:$0xff] %v97
  %s100 = scalar_lea.vmem %s0, 136
  %v101 = vld [vmem:[%s100] sm:$0xff]
  %s102 = scalar_lea.vmem %s1, 200
  %103 = vst [vmem:[%s102] sm:$0xff] %v101
  %s104 = scalar_lea.vmem %s0, 8
  %v105 = vld [vmem:[%s104] sm:$0xff]
  %s106 = scalar_lea.vmem %s1, 104
  %107 = vst [vmem:[%s106] sm:$0xff] %v105
  %s108 = scalar_lea.vmem %s0, 120
  %v109 = vld [vmem:[%s108] sm:$0xff]
  %s110 = scalar_lea.vmem %s1, 216
  %111 = vst [vmem:[%s110] sm:$0xff] %v109

// kernel: fno2d.11
$region0: #{fno2d.11}
  #allocation0 [shape = 'u32[]', space=smem, size = 0x4, offset = 0x4, fixed_abs, tag = 'smem constant byte address 0x4 - core index']
  #allocation1 [shape = 'u32[144,128]{1,0:T(1,128)}', space=vmem, size = 0x12000, scoped, tag = 'internal scratch']
  %s0 = inlined_call_operand.vmem [shape: bf16[2,32,128], index: 0, kind: input, shape index: {}]
  %s1 = inlined_call_operand.vmem [shape: bf16[32,128,128], index: 1, kind: input, shape index: {}]
  %s2 = inlined_call_operand.vmem [shape: f32[2,32,128], index: 2, kind: output, shape index: {}]
  %s3 = sld [smem:[#allocation0]]
  $region116: #{fno2d.11} parent=0
    _
  %s5 = ssub.s32 1, %s3
  %s6 = scalar_select 0, %s5, %s3
  $region1: #{fno2d.11} parent=0
    #allocation2 [shape = 'u8[16384]{0}', space=vmem, size = 0x4000, scoped, tag = 'input window, operand 0']
    #allocation3 [shape = 'u8[32768]{0}', space=vmem, size = 0x8000, scoped, tag = 'output window, operand 0']
    loop: start=0, step=1, limit=4
    $region2: #{fno2d.11} parent=1 // loop_pre_header
      _
    $region3: #{fno2d.11} parent=1 // loop_header
      %s8 = sphi 0, %s12
      %p9 = scmp.ge.s32.totalorder %s8, 4
      %s18 = sphi 0, %s20
      %s21 = sphi 0, %s18
      %s22 = sphi 0, %s21
      %s38 = sphi 0, %s22
      %s44 = sphi 0, %s46
      %s47 = sphi 0, %s44
      %s48 = sphi 0, %s47
      %s64 = sphi 0, %s48
      %s70 = sphi 0, %s72
      %s73 = sphi 0, %s70
      %s74 = sphi 0, %s73
      %s90 = sphi 0, %s74
    $region4: #{fno2d.11} parent=1 // loop_header_branch
      %11 = sbr.rel (%p9) target = $region8
    $region5: #{fno2d.11} parent=1 // loop_body
      %s13 = ssub.s32 %s8, 1
      %s14 = ssub.s32 %s8, 2
      %s15 = sadd.s32 %s8, 1
      %s16 = ssub.s32 %s8, %s15
      %p17 = scmp.eq.s32.totalorder %s16, 0
      %s19 = sadd.s32 %s18, 1
      %s20 = scalar_select %p17, %s18, %s19
      %p23 = pneg %p17
      %p24 = scmp.eq.s32.totalorder %s8, 1
      %p25 = por %p23, %p24
      %p26 = scmp.ne.s32.totalorder %s18, %s21
      %p27 = scmp.eq.s32.totalorder %s8, 0
      %p28 = por %p26, %p27
      %p29 = scmp.ne.s32.totalorder %s18, %s21
      %p30 = scmp.eq.s32.totalorder %s13, 1
      %p31 = por %p29, %p30
      %p32 = scmp.ne.s32.totalorder %s21, %s22
      %p33 = scmp.eq.s32.totalorder %s13, 0
      %p34 = por %p32, %p33
      %p35 = scmp.ne.s32.totalorder %s21, %s22
      %p36 = scmp.eq.s32.totalorder %s14, 1
      %p37 = por %p35, %p36
      %p39 = scmp.ne.s32.totalorder %s22, %s38
      %p40 = scmp.eq.s32.totalorder %s14, 0
      %p41 = por %p39, %p40
      %s42 = ssub.s32 %s8, %s15
      %p43 = scmp.eq.s32.totalorder %s42, 0
      %s45 = sadd.s32 %s44, 1
      %s46 = scalar_select %p43, %s44, %s45
      %p49 = pneg %p43
      %p50 = scmp.eq.s32.totalorder %s8, 1
      %p51 = por %p49, %p50
      %p52 = scmp.ne.s32.totalorder %s44, %s47
      %p53 = scmp.eq.s32.totalorder %s8, 0
      %p54 = por %p52, %p53
      %p55 = scmp.ne.s32.totalorder %s44, %s47
      %p56 = scmp.eq.s32.totalorder %s13, 1
      %p57 = por %p55, %p56
      %p58 = scmp.ne.s32.totalorder %s47, %s48
      %p59 = scmp.eq.s32.totalorder %s13, 0
      %p60 = por %p58, %p59
      %p61 = scmp.ne.s32.totalorder %s47, %s48
      %p62 = scmp.eq.s32.totalorder %s14, 1
      %p63 = por %p61, %p62
      %p65 = scmp.ne.s32.totalorder %s48, %s64
      %p66 = scmp.eq.s32.totalorder %s14, 0
      %p67 = por %p65, %p66
      %s68 = ssub.s32 %s8, %s15
      %p69 = scmp.eq.s32.totalorder %s68, 0
      %s71 = sadd.s32 %s70, 1
      %s72 = scalar_select %p69, %s70, %s71
      %p75 = pneg %p69
      %p76 = scmp.eq.s32.totalorder %s8, 1
      %p77 = por %p75, %p76
      %p78 = scmp.ne.s32.totalorder %s70, %s73
      %p79 = scmp.eq.s32.totalorder %s8, 0
      %p80 = por %p78, %p79
      %p81 = scmp.ne.s32.totalorder %s70, %s73
      %p82 = scmp.eq.s32.totalorder %s13, 1
      %p83 = por %p81, %p82
      %p84 = scmp.ne.s32.totalorder %s73, %s74
      %p85 = scmp.eq.s32.totalorder %s13, 0
      %p86 = por %p84, %p85
      %p87 = scmp.ne.s32.totalorder %s73, %s74
      %p88 = scmp.eq.s32.totalorder %s14, 1
      %p89 = por %p87, %p88
      %p91 = scmp.ne.s32.totalorder %s74, %s90
      %p92 = scmp.eq.s32.totalorder %s14, 0
      %p93 = por %p91, %p92
      %p94 = scmp.le.s32.totalorder 1, %s8
      %p95 = scmp.lt.s32.totalorder %s8, 3
      %p96 = pnand %p94, %p95
      %p97 = pneg %p96
      // Predicated region
      $region9: #{fno2d.11} parent=5 // pred_check
        _
      $region10: #{fno2d.11} parent=5 // pred_check_branch
        %99 = sbr.rel (%p96) target = $region12
      $region11: #{fno2d.11} parent=5 // pred_region
        %s100 = ssub.s32 %s8, 1
      $region12: #{fno2d.11} parent=5 // pred_fallthru
        _
      %p101 = scmp.lt.s32.totalorder %s8, 2
      // Predicated region
      $region13: #{fno2d.11} parent=5 // pred_check
        %p102 = pneg %p101
      $region14: #{fno2d.11} parent=5 // pred_check_branch
        %104 = sbr.rel (%p102) target = $region16
      $region15: #{fno2d.11} parent=5 // pred_region
        // Predicated region
        $region17: #{fno2d.11} parent=15 // pred_check
          %p105 = pneg %p28
        $region18: #{fno2d.11} parent=15 // pred_check_branch
          %107 = sbr.rel (%p105) target = $region20
        $region19: #{fno2d.11} parent=15 // pred_region
          %s108 = sand.u32 %s18, 1
          %s109 = sand.u32 %s18, 1
          %s110 = smul.addr %s109, 16
          %s111 = scalar_lea.vmem [#allocation2], %s110
          %s112 = smul.u32 2, %s8
          %s113 = smul.addr %s112, 4
          %s114 = scalar_lea.vmem %s0, %s113
          // Predicated region
          $region21: #{fno2d.11} parent=19 // pred_check
            _
          $region22: #{fno2d.11} parent=19 // pred_check_branch
            %116 = sbr.rel (0) target = $region24
          $region23: #{fno2d.11} parent=19 // pred_region
            // Predicated region
            $region25: #{fno2d.11} parent=23 // pred_check
              _
            $region26: #{fno2d.11} parent=23 // pred_check_branch
              %118 = sbr.rel target = $region28
            $region27: #{fno2d.11} parent=23 // pred_region
              // Predicated region
              $region40: #{fno2d.11} parent=27 // pred_check
                _
              $region41: #{fno2d.11} parent=27 // pred_check_branch
                %139 = sbr.rel (0) target = $region43
              $region42: #{fno2d.11} parent=27 // pred_region
                loop: start=0, step=1, limit=1
                $region44: #{fno2d.11} parent=42 // loop_pre_header
                  _
                $region45: #{fno2d.11} parent=42 // loop_header
                  %s141 = sphi 0, %s145
                  %p142 = scmp.ge.s32.totalorder %s141, 1
                  %s146 = sphi %s114, %s114
                  %s147 = sphi %s111, %s111
                $region46: #{fno2d.11} parent=42 // loop_header_branch
                  %144 = sbr.rel (%p142) target = $region50
                $region47: #{fno2d.11} parent=42 // loop_body
                  _
                $region48: #{fno2d.11} parent=42 // loop_footer
                  %s145 = sadd.s32 1, %s141
                $region49: #{fno2d.11} parent=42 // loop_footer_branch
                  %140 = sbr.rel target = $region45
                $region50: #{fno2d.11} parent=42 // loop_exit
                  _
                loop: start=0, step=1, limit=1
                $region51: #{fno2d.11} parent=42 // loop_pre_header
                  _
                $region52: #{fno2d.11} parent=42 // loop_header
                  %s150 = sphi 0, %s154
                  %p151 = scmp.ge.s32.totalorder %s150, 1
                  %s155 = sphi %s114, %s114
                  %s156 = sphi %s111, %s111
                $region53: #{fno2d.11} parent=42 // loop_header_branch
                  %153 = sbr.rel (%p151) target = $region57
                $region54: #{fno2d.11} parent=42 // loop_body
                  %v157 = vld [vmem:[%s155] sm:$0xf]
                  %158 = vst [vmem:[%s156] sm:$0xf] %v157
                  %v159 = vld [vmem:[%s155 + $0x4] sm:$0xf]
                  %160 = vst [vmem:[%s156 + $0x4] sm:$0xf] %v159
                  %v161 = vld [vmem:[%s155 + $0x10] sm:$0xf]
                  %162 = vst [vmem:[%s156 + $0x8] sm:$0xf] %v161
                  %v163 = vld [vmem:[%s155 + $0x14] sm:$0xf]
                  %164 = vst [vmem:[%s156 + $0xc] sm:$0xf] %v163
                $region55: #{fno2d.11} parent=42 // loop_footer
                  %s154 = sadd.s32 1, %s150
                $region56: #{fno2d.11} parent=42 // loop_footer_branch
                  %149 = sbr.rel target = $region52
                $region57: #{fno2d.11} parent=42 // loop_exit
                  _
              $region43: #{fno2d.11} parent=27 // pred_fallthru
                _
            $region28: #{fno2d.11} parent=23 // pred_fallthru
              _
            // Predicated region
            $region29: #{fno2d.11} parent=23 // pred_check
              _
            $region30: #{fno2d.11} parent=23 // pred_check_branch
              %120 = sbr.rel (0) target = $region32
            $region31: #{fno2d.11} parent=23 // pred_region
              loop: start=0, step=1, limit=1
              $region33: #{fno2d.11} parent=31 // loop_pre_header
                _
              $region34: #{fno2d.11} parent=31 // loop_header
                %s123 = sphi 0, %s127
                %p124 = scmp.ge.s32.totalorder %s123, 1
                %s128 = sphi %s114, %s114
                %s129 = sphi %s111, %s111
              $region35: #{fno2d.11} parent=31 // loop_header_branch
                %126 = sbr.rel (%p124) target = $region39
              $region36: #{fno2d.11} parent=31 // loop_body
                %v130 = vld [vmem:[%s128] sm:$0xf]
                %131 = vst [vmem:[%s129] sm:$0xf] %v130
                %v132 = vld [vmem:[%s128 + $0x4] sm:$0xf]
                %133 = vst [vmem:[%s129 + $0x4] sm:$0xf] %v132
                %v134 = vld [vmem:[%s128 + $0x10] sm:$0xf]
                %135 = vst [vmem:[%s129 + $0x8] sm:$0xf] %v134
                %v136 = vld [vmem:[%s128 + $0x14] sm:$0xf]
                %137 = vst [vmem:[%s129 + $0xc] sm:$0xf] %v136
              $region37: #{fno2d.11} parent=31 // loop_footer
                %s127 = sadd.s32 1, %s123
              $region38: #{fno2d.11} parent=31 // loop_footer_branch
                %122 = sbr.rel target = $region34
              $region39: #{fno2d.11} parent=31 // loop_exit
                _
            $region32: #{fno2d.11} parent=23 // pred_fallthru
              _
          $region24: #{fno2d.11} parent=19 // pred_fallthru
            _
          %165 = vnop
        $region20: #{fno2d.11} parent=15 // pred_fallthru
          _
        // Predicated region
        $region58: #{fno2d.11} parent=15 // pred_check
          %p166 = pneg %p54
        $region59: #{fno2d.11} parent=15 // pred_check_branch
          %168 = sbr.rel (%p166) target = $region61
        $region60: #{fno2d.11} parent=15 // pred_region
          %s169 = smul.u32 16, %s8
          %p170 = scmp.lt.s32.totalorder %s169, 31
          %s171 = scalar_select %p170, %s169, 31
          %s172 = smul.addr %s171, 16
          %s173 = smul.addr %s172, 4
          %s174 = scalar_lea.vmem %s1, %s173
          %s175 = smul.u32 16, %s8
        $region61: #{fno2d.11} parent=15 // pred_fallthru
          _
      $region16: #{fno2d.11} parent=5 // pred_fallthru
        _
      %p176 = scmp.le.s32.totalorder 1, %s8
      %p177 = scmp.lt.s32.totalorder %s8, 3
      %p178 = pnand %p176, %p177
      %p179 = pneg %p178
      // Predicated region
      $region62: #{fno2d.11} parent=5 // pred_check
        _
      $region63: #{fno2d.11} parent=5 // pred_check_branch
        %181 = sbr.rel (%p178) target = $region65
      $region64: #{fno2d.11} parent=5 // pred_region
        %s182 = ssub.s32 %s8, 1
        %s183 = sand.u32 %s21, 1
        %s184 = sand.u32 %s21, 1
        %s185 = smul.addr %s184, 16
        %s186 = scalar_lea.vmem [#allocation2], %s185
        // Predicated region
        $region66: #{fno2d.11} parent=64 // pred_check
          %p187 = pneg %p34
        $region67: #{fno2d.11} parent=64 // pred_check_branch
          %189 = sbr.rel (%p187) target = $region69
        $region68: #{fno2d.11} parent=64 // pred_region
          _
        $region69: #{fno2d.11} parent=64 // pred_fallthru
          _
        %s190 = sand.u32 %s21, 1
        %s191 = sand.u32 %s21, 1
        %s192 = smul.addr %s191, 16
        %s193 = scalar_lea.vmem [#allocation2], %s192
        %p194 = pneg %p34
        %p195 = pneg %p31
        %s196 = smul.u32 16, %s13
        %p197 = scmp.lt.s32.totalorder %s196, 31
        %s198 = scalar_select %p197, %s196, 31
        %s199 = smul.addr %s198, 16
        %s200 = smul.addr %s199, 4
        %s201 = scalar_lea.vmem %s1, %s200
        %p202 = pneg %p60
        %p203 = pneg %p57
        %p204 = pneg %p86
        %p205 = pneg %p83
        %s206 = sand.u32 %s73, 1
        %s207 = sand.u32 %s73, 1
        %s208 = smul.addr %s207, 32
        %s209 = scalar_lea.vmem [#allocation3], %s208
        %s210 = smul.u32 2, %s13
        %s211 = smul.u32 16, %s13
        %p212 = scmp.lt.s32.totalorder %s211, 31
        %s213 = scalar_select %p212, %s211, 31
        %s214 = smul.addr %s213, 16
        %s215 = smul.addr %s214, 4
        %s216 = scalar_lea.vmem %s1, %s215
        %s217 = smul.u32 16, %s13
        %s218 = smul.u32 2, %s13
        %v220 = vld [vmem:[%s186] sm:$0x1]
        %v221 = vld [vmem:[%s186 + $0x8] sm:$0x1]
        %v222 = vld [vmem:[%s216] sm:$0xf]
        %v223 = vld [vmem:[%s216 + $0x4] sm:$0xf]
        %v224 = vld [vmem:[%s216 + $0x8] sm:$0xf]
        %v225 = vld [vmem:[%s216 + $0xc] sm:$0xf]
        %v226 = vld [vmem:[%s216 + $0x10] sm:$0xf]
        %v227 = vld [vmem:[%s216 + $0x14] sm:$0xf]
        %v228 = vld [vmem:[%s216 + $0x18] sm:$0xf]
        %v229 = vld [vmem:[%s216 + $0x1c] sm:$0xf]
        %v230 = vld [vmem:[%s216 + $0x20] sm:$0xf]
        %v231 = vld [vmem:[%s216 + $0x24] sm:$0xf]
        %v232 = vld [vmem:[%s216 + $0x28] sm:$0xf]
        %v233 = vld [vmem:[%s216 + $0x2c] sm:$0xf]
        %v234 = vld [vmem:[%s216 + $0x30] sm:$0xf]
        %v235 = vld [vmem:[%s216 + $0x34] sm:$0xf]
        %v236 = vld [vmem:[%s216 + $0x38] sm:$0xf]
        %v237 = vld [vmem:[%s216 + $0x3c] sm:$0xf]
        %v240 = vunpack.c.l.b16 %v220
        %v241 = vunpack.c.l.b16 %v221
        %v242 = vpack.c.b16 %v240, %v240
        %v243 = vpack.c.b16 %v241, %v241
        %v244 = vunpack.c.l.b16 %v242
        %v245 = vunpack.c.l.b16 %v243
        %v246 = vrot.slane %v245, 7
        %vm247 = vcmask 1041409
        %v248 = vsel %vm247, %v246, %v244
        %v249 = vpack.c.b16 %v248, %v248
        %v267 = vunpack.c.l.b16 %v222
        %v268 = vunpack.c.l.b16 %v223
        %v269 = vunpack.c.l.b16 %v224
        %v270 = vunpack.c.l.b16 %v225
        %v271 = vunpack.c.l.b16 %v226
        %v272 = vunpack.c.l.b16 %v227
        %v273 = vunpack.c.l.b16 %v228
        %v274 = vunpack.c.l.b16 %v229
        %v275 = vunpack.c.l.b16 %v230
        %v276 = vunpack.c.l.b16 %v231
        %v277 = vunpack.c.l.b16 %v232
        %v278 = vunpack.c.l.b16 %v233
        %v279 = vunpack.c.l.b16 %v234
        %v280 = vunpack.c.l.b16 %v235
        %v281 = vunpack.c.l.b16 %v236
        %v282 = vunpack.c.l.b16 %v237
        %v283 = vpack.c.b16 %v268, %v267
        %v284 = vpack.c.b16 %v270, %v269
        %v285 = vpack.c.b16 %v272, %v271
        %v286 = vpack.c.b16 %v274, %v273
        %v287 = vpack.c.b16 %v276, %v275
        %v288 = vpack.c.b16 %v278, %v277
        %v289 = vpack.c.b16 %v280, %v279
        %v290 = vpack.c.b16 %v282, %v281
        %299 = vmatprep.subr.bf16.mxu0 0
        %300 = vmatpush1.bf16.msra.mxu0 %v283
        %301 = vmatprep.subr.bf16.mxu0 0
        %302 = vmatpush1.bf16.msra.mxu0 %v284
        %303 = vmatprep.subr.bf16.mxu0 0
        %304 = vmatpush1.bf16.msra.mxu0 %v285
        %305 = vmatprep.subr.bf16.mxu0 0
        %306 = vmatpush1.bf16.msra.mxu0 %v286
        %307 = vmatprep.subr.bf16.mxu0 0
        %308 = vmatpush1.bf16.msra.mxu0 %v287
        %309 = vmatprep.subr.bf16.mxu0 0
        %310 = vmatpush1.bf16.msra.mxu0 %v288
        %311 = vmatprep.subr.bf16.mxu0 0
        %312 = vmatpush1.bf16.msra.mxu0 %v289
        %313 = vmatprep.subr.bf16.mxu0 0
        %314 = vmatpush1.bf16.msra.mxu0 %v290
        %315 = vmatprep.subr.bf16.mxu0 0
        %316 = vmatpush1.bf16.msra.mxu0 0
        %317 = vmatprep.subr.bf16.mxu0 0
        %318 = vmatpush1.bf16.msra.mxu0 0
        %319 = vmatprep.subr.bf16.mxu0 0
        %320 = vmatpush1.bf16.msra.mxu0 0
        %321 = vmatprep.subr.bf16.mxu0 0
        %322 = vmatpush1.bf16.msra.mxu0 0
        %323 = vmatprep.subr.bf16.mxu0 0
        %324 = vmatpush1.bf16.msra.mxu0 0
        %325 = vmatprep.subr.bf16.mxu0 0
        %326 = vmatpush1.bf16.msra.mxu0 0
        %327 = vmatprep.subr.bf16.mxu0 0
        %328 = vmatpush1.bf16.msra.mxu0 0
        %329 = vmatprep.subr.bf16.mxu0 0
        %330 = vmatpush1.bf16.msra.mxu0 0
        %331 = vmatprep.mubr.bf16.mxu0 0
        %332 = vmatmul.mubr.bf16.gmra.mrb[0].mxu0 %v249
        %v333 = vpop.f32.mrb[0].mxu0
        %v334 = vadd.f32 0.0, %v333
        %v335 = vpop.f32.mrb[0].mxu0
        %v336 = vpop.f32.mrb[0].mxu0
        %v337 = vpop.f32.mrb[0].mxu0
        %338 = vdwg.mxu0
        %v341 = vunpack.c.l.s4 1966171168
        %v342 = vunpack.c.0.s8 %v341
        %v343 = vlaneseq
        %v344 = vshrl.u32 %v343, 7
        %v345 = vsub.s32 %v342, %v344
        %v346 = vrot.slane %v334, %v345
        %v347 = vcombine.high %v346, %v346
        %v349 = vunpack.c.l.s4 1966171168
        %v350 = vunpack.c.0.s8 %v349
        %v351 = vlaneseq
        %v352 = vshrl.u32 %v351, 7
        %v353 = vsub.s32 %v350, %v352
        %v354 = vrot.slane %v346, %v353
        %v356 = vunpack.c.l.s4 1966171168
        %v357 = vunpack.c.0.s8 %v356
        %v358 = vlaneseq
        %v359 = vshrl.u32 %v358, 7
        %v360 = vsub.s32 %v357, %v359
        %v361 = vrot.slane %v347, %v360
        %364 = vst [vmem:[%s209] sm:$0x1] %v354
        %365 = vst [vmem:[%s209 + $0x10] sm:$0x1] %v361
        %v366 = vld [vmem:[%s186] sm:$0x1]
        %v367 = vld [vmem:[%s186 + $0x8] sm:$0x1]
        %s368 = scalar_lea.vmem %s216, 64
        %v369 = vld [vmem:[%s368] sm:$0xf]
        %v370 = vld [vmem:[%s368 + $0x4] sm:$0xf]
        %v371 = vld [vmem:[%s368 + $0x8] sm:$0xf]
        %v372 = vld [vmem:[%s368 + $0xc] sm:$0xf]
        %v373 = vld [vmem:[%s368 + $0x10] sm:$0xf]
        %v374 = vld [vmem:[%s368 + $0x14] sm:$0xf]
        %v375 = vld [vmem:[%s368 + $0x18] sm:$0xf]
        %v376 = vld [vmem:[%s368 + $0x1c] sm:$0xf]
        %v377 = vld [vmem:[%s368 + $0x20] sm:$0xf]
        %v378 = vld [vmem:[%s368 + $0x24] sm:$0xf]
        %v379 = vld [vmem:[%s368 + $0x28] sm:$0xf]
        %v380 = vld [vmem:[%s368 + $0x2c] sm:$0xf]
        %v381 = vld [vmem:[%s368 + $0x30] sm:$0xf]
        %v382 = vld [vmem:[%s368 + $0x34] sm:$0xf]
        %v383 = vld [vmem:[%s368 + $0x38] sm:$0xf]
        %v384 = vld [vmem:[%s368 + $0x3c] sm:$0xf]
        %v387 = vunpack.c.l.b16 %v366
        %v388 = vunpack.c.l.b16 %v367
        %v389 = vpack.c.b16 %v387, %v387
        %v390 = vpack.c.b16 %v388, %v388
        %v391 = vunpack.c.l.b16 %v389
        %v392 = vunpack.c.l.b16 %v390
        %v393 = vrot.slane %v391, 1
        %v394 = vsel %vm247, %v392, %v393
        %v395 = vpack.c.b16 %v394, %v394
        %v413 = vunpack.c.l.b16 %v369
        %v414 = vunpack.c.l.b16 %v370
        %v415 = vunpack.c.l.b16 %v371
        %v416 = vunpack.c.l.b16 %v372
        %v417 = vunpack.c.l.b16 %v373
        %v418 = vunpack.c.l.b16 %v374
        %v419 = vunpack.c.l.b16 %v375
        %v420 = vunpack.c.l.b16 %v376
        %v421 = vunpack.c.l.b16 %v377
        %v422 = vunpack.c.l.b16 %v378
        %v423 = vunpack.c.l.b16 %v379
        %v424 = vunpack.c.l.b16 %v380
        %v425 = vunpack.c.l.b16 %v381
        %v426 = vunpack.c.l.b16 %v382
        %v427 = vunpack.c.l.b16 %v383
        %v428 = vunpack.c.l.b16 %v384
        %v429 = vpack.c.b16 %v414, %v413
        %v430 = vpack.c.b16 %v416, %v415
        %v431 = vpack.c.b16 %v418, %v417
        %v432 = vpack.c.b16 %v420, %v419
        %v433 = vpack.c.b16 %v422, %v421
        %v434 = vpack.c.b16 %v424, %v423
        %v435 = vpack.c.b16 %v426, %v425
        %v436 = vpack.c.b16 %v428, %v427
        %445 = vmatprep.subr.bf16.mxu0 0
        %446 = vmatpush1.bf16.msra.mxu0 %v429
        %447 = vmatprep.subr.bf16.mxu0 0
        %448 = vmatpush1.bf16.msra.mxu0 %v430
        %449 = vmatprep.subr.bf16.mxu0 0
        %450 = vmatpush1.bf16.msra.mxu0 %v431
        %451 = vmatprep.subr.bf16.mxu0 0
        %452 = vmatpush1.bf16.msra.mxu0 %v432
        %453 = vmatprep.subr.bf16.mxu0 0
        %454 = vmatpush1.bf16.msra.mxu0 %v433
        %455 = vmatprep.subr.bf16.mxu0 0
        %456 = vmatpush1.bf16.msra.mxu0 %v434
        %457 = vmatprep.subr.bf16.mxu0 0
        %458 = vmatpush1.bf16.msra.mxu0 %v435
        %459 = vmatprep.subr.bf16.mxu0 0
        %460 = vmatpush1.bf16.msra.mxu0 %v436
        %461 = vmatprep.subr.bf16.mxu0 0
        %462 = vmatpush1.bf16.msra.mxu0 0
        %463 = vmatprep.subr.bf16.mxu0 0
        %464 = vmatpush1.bf16.msra.mxu0 0
        %465 = vmatprep.subr.bf16.mxu0 0
        %466 = vmatpush1.bf16.msra.mxu0 0
        %467 = vmatprep.subr.bf16.mxu0 0
        %468 = vmatpush1.bf16.msra.mxu0 0
        %469 = vmatprep.subr.bf16.mxu0 0
        %470 = vmatpush1.bf16.msra.mxu0 0
        %471 = vmatprep.subr.bf16.mxu0 0
        %472 = vmatpush1.bf16.msra.mxu0 0
        %473 = vmatprep.subr.bf16.mxu0 0
        %474 = vmatpush1.bf16.msra.mxu0 0
        %475 = vmatprep.subr.bf16.mxu0 0
        %476 = vmatpush1.bf16.msra.mxu0 0
        %477 = vmatprep.mubr.bf16.mxu0 0
        %478 = vmatmul.mubr.bf16.gmra.mrb[0].mxu0 %v395
        %v479 = vpop.f32.mrb[0].mxu0
        %v480 = vadd.f32 0.0, %v479
        %v481 = vpop.f32.mrb[0].mxu0
        %v482 = vpop.f32.mrb[0].mxu0
        %v483 = vpop.f32.mrb[0].mxu0
        %484 = vdwg.mxu0
        %v487 = vunpack.c.l.s4 1966171168
        %v488 = vunpack.c.0.s8 %v487
        %v489 = vlaneseq
        %v490 = vshrl.u32 %v489, 7
        %v491 = vsub.s32 %v488, %v490
        %v492 = vrot.slane %v480, %v491
        %v493 = vcombine.high %v492, %v492
        %v495 = vunpack.c.l.s4 1966171168
        %v496 = vunpack.c.0.s8 %v495
        %v497 = vlaneseq
        %v498 = vshrl.u32 %v497, 7
        %v499 = vsub.s32 %v496, %v498
        %v500 = vrot.slane %v492, %v499
        %v502 = vunpack.c.l.s4 1966171168
        %v503 = vunpack.c.0.s8 %v502
        %v504 = vlaneseq
        %v505 = vshrl.u32 %v504, 7
        %v506 = vsub.s32 %v503, %v505
        %v507 = vrot.slane %v493, %v506
        %510 = vst [vmem:[%s209 + $0x1] sm:$0x1] %v500
        %511 = vst [vmem:[%s209 + $0x11] sm:$0x1] %v507
        %v512 = vld [vmem:[%s186] sm:$0x2]
        %v513 = vld [vmem:[%s186 + $0x8] sm:$0x2]
        %s514 = scalar_lea.vmem %s216, 128
        %v515 = vld [vmem:[%s514] sm:$0xf]
        %v516 = vld [vmem:[%s514 + $0x4] sm:$0xf]
        %v517 = vld [vmem:[%s514 + $0x8] sm:$0xf]
        %v518 = vld [vmem:[%s514 + $0xc] sm:$0xf]
        %v519 = vld [vmem:[%s514 + $0x10] sm:$0xf]
        %v520 = vld [vmem:[%s514 + $0x14] sm:$0xf]
        %v521 = vld [vmem:[%s514 + $0x18] sm:$0xf]
        %v522 = vld [vmem:[%s514 + $0x1c] sm:$0xf]
        %v523 = vld [vmem:[%s514 + $0x20] sm:$0xf]
        %v524 = vld [vmem:[%s514 + $0x24] sm:$0xf]
        %v525 = vld [vmem:[%s514 + $0x28] sm:$0xf]
        %v526 = vld [vmem:[%s514 + $0x2c] sm:$0xf]
        %v527 = vld [vmem:[%s514 + $0x30] sm:$0xf]
        %v528 = vld [vmem:[%s514 + $0x34] sm:$0xf]
        %v529 = vld [vmem:[%s514 + $0x38] sm:$0xf]
        %v530 = vld [vmem:[%s514 + $0x3c] sm:$0xf]
        %v533 = vunpack.c.l.b16 %v512
        %v534 = vunpack.c.l.b16 %v513
        %v535 = vpack.c.b16 %v533, %v533
        %v536 = vpack.c.b16 %v534, %v534
        %v537 = vunpack.c.l.b16 %v535
        %v538 = vunpack.c.l.b16 %v536
        %v539 = vrot.slane %v537, 2
        %v540 = vrot.slane %v538, 1
        %v541 = vsel %vm247, %v540, %v539
        %v542 = vpack.c.b16 %v541, %v541
        %v560 = vunpack.c.l.b16 %v515
        %v561 = vunpack.c.l.b16 %v516
        %v562 = vunpack.c.l.b16 %v517
        %v563 = vunpack.c.l.b16 %v518
        %v564 = vunpack.c.l.b16 %v519
        %v565 = vunpack.c.l.b16 %v520
        %v566 = vunpack.c.l.b16 %v521
        %v567 = vunpack.c.l.b16 %v522
        %v568 = vunpack.c.l.b16 %v523
        %v569 = vunpack.c.l.b16 %v524
        %v570 = vunpack.c.l.b16 %v525
        %v571 = vunpack.c.l.b16 %v526
        %v572 = vunpack.c.l.b16 %v527
        %v573 = vunpack.c.l.b16 %v528
        %v574 = vunpack.c.l.b16 %v529
        %v575 = vunpack.c.l.b16 %v530
        %v576 = vpack.c.b16 %v561, %v560
        %v577 = vpack.c.b16 %v563, %v562
        %v578 = vpack.c.b16 %v565, %v564
        %v579 = vpack.c.b16 %v567, %v566
        %v580 = vpack.c.b16 %v569, %v568
        %v581 = vpack.c.b16 %v571, %v570
        %v582 = vpack.c.b16 %v573, %v572
        %v583 = vpack.c.b16 %v575, %v574
        %592 = vmatprep.subr.bf16.mxu0 0
        %593 = vmatpush1.bf16.msra.mxu0 %v576
        %594 = vmatprep.subr.bf16.mxu0 0
        %595 = vmatpush1.bf16.msra.mxu0 %v577
        %596 = vmatprep.subr.bf16.mxu0 0
        %597 = vmatpush1.bf16.msra.mxu0 %v578
        %598 = vmatprep.subr.bf16.mxu0 0
        %599 = vmatpush1.bf16.msra.mxu0 %v579
        %600 = vmatprep.subr.bf16.mxu0 0
        %601 = vmatpush1.bf16.msra.mxu0 %v580
        %602 = vmatprep.subr.bf16.mxu0 0
        %603 = vmatpush1.bf16.msra.mxu0 %v581
        %604 = vmatprep.subr.bf16.mxu0 0
        %605 = vmatpush1.bf16.msra.mxu0 %v582
        %606 = vmatprep.subr.bf16.mxu0 0
        %607 = vmatpush1.bf16.msra.mxu0 %v583
        %608 = vmatprep.subr.bf16.mxu0 0
        %609 = vmatpush1.bf16.msra.mxu0 0
        %610 = vmatprep.subr.bf16.mxu0 0
        %611 = vmatpush1.bf16.msra.mxu0 0
        %612 = vmatprep.subr.bf16.mxu0 0
        %613 = vmatpush1.bf16.msra.mxu0 0
        %614 = vmatprep.subr.bf16.mxu0 0
        %615 = vmatpush1.bf16.msra.mxu0 0
        %616 = vmatprep.subr.bf16.mxu0 0
        %617 = vmatpush1.bf16.msra.mxu0 0
        %618 = vmatprep.subr.bf16.mxu0 0
        %619 = vmatpush1.bf16.msra.mxu0 0
        %620 = vmatprep.subr.bf16.mxu0 0
        %621 = vmatpush1.bf16.msra.mxu0 0
        %622 = vmatprep.subr.bf16.mxu0 0
        %623 = vmatpush1.bf16.msra.mxu0 0
        %624 = vmatprep.mubr.bf16.mxu0 0
        %625 = vmatmul.mubr.bf16.gmra.mrb[0].mxu0 %v542
        %v626 = vpop.f32.mrb[0].mxu0
        %v627 = vadd.f32 0.0, %v626
        %v628 = vpop.f32.mrb[0].mxu0
        %v629 = vpop.f32.mrb[0].mxu0
        %v630 = vpop.f32.mrb[0].mxu0
        %631 = vdwg.mxu0
        %v634 = vunpack.c.l.s4 1966171168
        %v635 = vunpack.c.0.s8 %v634
        %v636 = vlaneseq
        %v637 = vshrl.u32 %v636, 7
        %v638 = vsub.s32 %v635, %v637
        %v639 = vrot.slane %v627, %v638
        %v640 = vcombine.high %v639, %v639
        %v642 = vunpack.c.l.s4 1966171168
        %v643 = vunpack.c.0.s8 %v642
        %v644 = vlaneseq
        %v645 = vshrl.u32 %v644, 7
        %v646 = vsub.s32 %v643, %v645
        %v647 = vrot.slane %v639, %v646
        %v649 = vunpack.c.l.s4 1966171168
        %v650 = vunpack.c.0.s8 %v649
        %v651 = vlaneseq
        %v652 = vshrl.u32 %v651, 7
        %v653 = vsub.s32 %v650, %v652
        %v654 = vrot.slane %v640, %v653
        %657 = vst [vmem:[%s209 + $0x2] sm:$0x1] %v647
        %658 = vst [vmem:[%s209 + $0x12] sm:$0x1] %v654
        %v659 = vld [vmem:[%s186] sm:$0x2]
        %v660 = vld [vmem:[%s186 + $0x8] sm:$0x2]
        %s661 = scalar_lea.vmem %s216, 192
        %v662 = vld [vmem:[%s661] sm:$0xf]
        %v663 = vld [vmem:[%s661 + $0x4] sm:$0xf]
        %v664 = vld [vmem:[%s661 + $0x8] sm:$0xf]
        %v665 = vld [vmem:[%s661 + $0xc] sm:$0xf]
        %v666 = vld [vmem:[%s661 + $0x10] sm:$0xf]
        %v667 = vld [vmem:[%s661 + $0x14] sm:$0xf]
        %v668 = vld [vmem:[%s661 + $0x18] sm:$0xf]
        %v669 = vld [vmem:[%s661 + $0x1c] sm:$0xf]
        %v670 = vld [vmem:[%s661 + $0x20] sm:$0xf]
        %v671 = vld [vmem:[%s661 + $0x24] sm:$0xf]
        %v672 = vld [vmem:[%s661 + $0x28] sm:$0xf]
        %v673 = vld [vmem:[%s661 + $0x2c] sm:$0xf]
        %v674 = vld [vmem:[%s661 + $0x30] sm:$0xf]
        %v675 = vld [vmem:[%s661 + $0x34] sm:$0xf]
        %v676 = vld [vmem:[%s661 + $0x38] sm:$0xf]
        %v677 = vld [vmem:[%s661 + $0x3c] sm:$0xf]
        %v680 = vunpack.c.l.b16 %v659
        %v681 = vunpack.c.l.b16 %v660
        %v682 = vpack.c.b16 %v680, %v680
        %v683 = vpack.c.b16 %v681, %v681
        %v684 = vunpack.c.l.b16 %v682
        %v685 = vunpack.c.l.b16 %v683
        %v686 = vrot.slane %v684, 3
        %v687 = vrot.slane %v685, 2
        %v688 = vsel %vm247, %v687, %v686
        %v689 = vpack.c.b16 %v688, %v688
        %v707 = vunpack.c.l.b16 %v662
        %v708 = vunpack.c.l.b16 %v663
        %v709 = vunpack.c.l.b16 %v664
        %v710 = vunpack.c.l.b16 %v665
        %v711 = vunpack.c.l.b16 %v666
        %v712 = vunpack.c.l.b16 %v667
        %v713 = vunpack.c.l.b16 %v668
        %v714 = vunpack.c.l.b16 %v669
        %v715 = vunpack.c.l.b16 %v670
        %v716 = vunpack.c.l.b16 %v671
        %v717 = vunpack.c.l.b16 %v672
        %v718 = vunpack.c.l.b16 %v673
        %v719 = vunpack.c.l.b16 %v674
        %v720 = vunpack.c.l.b16 %v675
        %v721 = vunpack.c.l.b16 %v676
        %v722 = vunpack.c.l.b16 %v677
        %v723 = vpack.c.b16 %v708, %v707
        %v724 = vpack.c.b16 %v710, %v709
        %v725 = vpack.c.b16 %v712, %v711
        %v726 = vpack.c.b16 %v714, %v713
        %v727 = vpack.c.b16 %v716, %v715
        %v728 = vpack.c.b16 %v718, %v717
        %v729 = vpack.c.b16 %v720, %v719
        %v730 = vpack.c.b16 %v722, %v721
        %739 = vmatprep.subr.bf16.mxu0 0
        %740 = vmatpush1.bf16.msra.mxu0 %v723
        %741 = vmatprep.subr.bf16.mxu0 0
        %742 = vmatpush1.bf16.msra.mxu0 %v724
        %743 = vmatprep.subr.bf16.mxu0 0
        %744 = vmatpush1.bf16.msra.mxu0 %v725
        %745 = vmatprep.subr.bf16.mxu0 0
        %746 = vmatpush1.bf16.msra.mxu0 %v726
        %747 = vmatprep.subr.bf16.mxu0 0
        %748 = vmatpush1.bf16.msra.mxu0 %v727
        %749 = vmatprep.subr.bf16.mxu0 0
        %750 = vmatpush1.bf16.msra.mxu0 %v728
        %751 = vmatprep.subr.bf16.mxu0 0
        %752 = vmatpush1.bf16.msra.mxu0 %v729
        %753 = vmatprep.subr.bf16.mxu0 0
        %754 = vmatpush1.bf16.msra.mxu0 %v730
        %755 = vmatprep.subr.bf16.mxu0 0
        %756 = vmatpush1.bf16.msra.mxu0 0
        %757 = vmatprep.subr.bf16.mxu0 0
        %758 = vmatpush1.bf16.msra.mxu0 0
        %759 = vmatprep.subr.bf16.mxu0 0
        %760 = vmatpush1.bf16.msra.mxu0 0
        %761 = vmatprep.subr.bf16.mxu0 0
        %762 = vmatpush1.bf16.msra.mxu0 0
        %763 = vmatprep.subr.bf16.mxu0 0
        %764 = vmatpush1.bf16.msra.mxu0 0
        %765 = vmatprep.subr.bf16.mxu0 0
        %766 = vmatpush1.bf16.msra.mxu0 0
        %767 = vmatprep.subr.bf16.mxu0 0
        %768 = vmatpush1.bf16.msra.mxu0 0
        %769 = vmatprep.subr.bf16.mxu0 0
        %770 = vmatpush1.bf16.msra.mxu0 0
        %771 = vmatprep.mubr.bf16.mxu0 0
        %772 = vmatmul.mubr.bf16.gmra.mrb[0].mxu0 %v689
        %v773 = vpop.f32.mrb[0].mxu0
        %v774 = vadd.f32 0.0, %v773
        %v775 = vpop.f32.mrb[0].mxu0
        %v776 = vpop.f32.mrb[0].mxu0
        %v777 = vpop.f32.mrb[0].mxu0
        %778 = vdwg.mxu0
        %v781 = vunpack.c.l.s4 1966171168
        %v782 = vunpack.c.0.s8 %v781
        %v783 = vlaneseq
        %v784 = vshrl.u32 %v783, 7
        %v785 = vsub.s32 %v782, %v784
        %v786 = vrot.slane %v774, %v785
        %v787 = vcombine.high %v786, %v786
        %v789 = vunpack.c.l.s4 1966171168
        %v790 = vunpack.c.0.s8 %v789
        %v791 = vlaneseq
        %v792 = vshrl.u32 %v791, 7
        %v793 = vsub.s32 %v790, %v792
        %v794 = vrot.slane %v786, %v793
        %v796 = vunpack.c.l.s4 1966171168
        %v797 = vunpack.c.0.s8 %v796
        %v798 = vlaneseq
        %v799 = vshrl.u32 %v798, 7
        %v800 = vsub.s32 %v797, %v799
        %v801 = vrot.slane %v787, %v800
        %804 = vst [vmem:[%s209 + $0x3] sm:$0x1] %v794
        %805 = vst [vmem:[%s209 + $0x13] sm:$0x1] %v801
        %v806 = vld [vmem:[%s186] sm:$0x4]
        %v807 = vld [vmem:[%s186 + $0x8] sm:$0x4]
        %s808 = scalar_lea.vmem %s216, 256
        %v809 = vld [vmem:[%s808] sm:$0xf]
        %v810 = vld [vmem:[%s808 + $0x4] sm:$0xf]
        %v811 = vld [vmem:[%s808 + $0x8] sm:$0xf]
        %v812 = vld [vmem:[%s808 + $0xc] sm:$0xf]
        %v813 = vld [vmem:[%s808 + $0x10] sm:$0xf]
        %v814 = vld [vmem:[%s808 + $0x14] sm:$0xf]
        %v815 = vld [vmem:[%s808 + $0x18] sm:$0xf]
        %v816 = vld [vmem:[%s808 + $0x1c] sm:$0xf]
        %v817 = vld [vmem:[%s808 + $0x20] sm:$0xf]
        %v818 = vld [vmem:[%s808 + $0x24] sm:$0xf]
        %v819 = vld [vmem:[%s808 + $0x28] sm:$0xf]
        %v820 = vld [vmem:[%s808 + $0x2c] sm:$0xf]
        %v821 = vld [vmem:[%s808 + $0x30] sm:$0xf]
        %v822 = vld [vmem:[%s808 + $0x34] sm:$0xf]
        %v823 = vld [vmem:[%s808 + $0x38] sm:$0xf]
        %v824 = vld [vmem:[%s808 + $0x3c] sm:$0xf]
        %v827 = vunpack.c.l.b16 %v806
        %v828 = vunpack.c.l.b16 %v807
        %v829 = vpack.c.b16 %v827, %v827
        %v830 = vpack.c.b16 %v828, %v828
        %v831 = vunpack.c.l.b16 %v829
        %v832 = vunpack.c.l.b16 %v830
        %v833 = vrot.slane %v831, 4
        %v834 = vrot.slane %v832, 3
        %v835 = vsel %vm247, %v834, %v833
        %v836 = vpack.c.b16 %v835, %v835
        %v854 = vunpack.c.l.b16 %v809
        %v855 = vunpack.c.l.b16 %v810
        %v856 = vunpack.c.l.b16 %v811
        %v857 = vunpack.c.l.b16 %v812
        %v858 = vunpack.c.l.b16 %v813
        %v859 = vunpack.c.l.b16 %v814
        %v860 = vunpack.c.l.b16 %v815
        %v861 = vunpack.c.l.b16 %v816
        %v862 = vunpack.c.l.b16 %v817
        %v863 = vunpack.c.l.b16 %v818
        %v864 = vunpack.c.l.b16 %v819
        %v865 = vunpack.c.l.b16 %v820
        %v866 = vunpack.c.l.b16 %v821
        %v867 = vunpack.c.l.b16 %v822
        %v868 = vunpack.c.l.b16 %v823
        %v869 = vunpack.c.l.b16 %v824
        %v870 = vpack.c.b16 %v855, %v854
        %v871 = vpack.c.b16 %v857, %v856
        %v872 = vpack.c.b16 %v859, %v858
        %v873 = vpack.c.b16 %v861, %v860
        %v874 = vpack.c.b16 %v863, %v862
        %v875 = vpack.c.b16 %v865, %v864
        %v876 = vpack.c.b16 %v867, %v866
        %v877 = vpack.c.b16 %v869, %v868
        %886 = vmatprep.subr.bf16.mxu0 0
        %887 = vmatpush1.bf16.msra.mxu0 %v870
        %888 = vmatprep.subr.bf16.mxu0 0
        %889 = vmatpush1.bf16.msra.mxu0 %v871
        %890 = vmatprep.subr.bf16.mxu0 0
        %891 = vmatpush1.bf16.msra.mxu0 %v872
        %892 = vmatprep.subr.bf16.mxu0 0
        %893 = vmatpush1.bf16.msra.mxu0 %v873
        %894 = vmatprep.subr.bf16.mxu0 0
        %895 = vmatpush1.bf16.msra.mxu0 %v874
        %896 = vmatprep.subr.bf16.mxu0 0
        %897 = vmatpush1.bf16.msra.mxu0 %v875
        %898 = vmatprep.subr.bf16.mxu0 0
        %899 = vmatpush1.bf16.msra.mxu0 %v876
        %900 = vmatprep.subr.bf16.mxu0 0
        %901 = vmatpush1.bf16.msra.mxu0 %v877
        %902 = vmatprep.subr.bf16.mxu0 0
        %903 = vmatpush1.bf16.msra.mxu0 0
        %904 = vmatprep.subr.bf16.mxu0 0
        %905 = vmatpush1.bf16.msra.mxu0 0
        %906 = vmatprep.subr.bf16.mxu0 0
        %907 = vmatpush1.bf16.msra.mxu0 0
        %908 = vmatprep.subr.bf16.mxu0 0
        %909 = vmatpush1.bf16.msra.mxu0 0
        %910 = vmatprep.subr.bf16.mxu0 0
        %911 = vmatpush1.bf16.msra.mxu0 0
        %912 = vmatprep.subr.bf16.mxu0 0
        %913 = vmatpush1.bf16.msra.mxu0 0
        %914 = vmatprep.subr.bf16.mxu0 0
        %915 = vmatpush1.bf16.msra.mxu0 0
        %916 = vmatprep.subr.bf16.mxu0 0
        %917 = vmatpush1.bf16.msra.mxu0 0
        %918 = vmatprep.mubr.bf16.mxu0 0
        %919 = vmatmul.mubr.bf16.gmra.mrb[0].mxu0 %v836
        %v920 = vpop.f32.mrb[0].mxu0
        %v921 = vadd.f32 0.0, %v920
        %v922 = vpop.f32.mrb[0].mxu0
        %v923 = vpop.f32.mrb[0].mxu0
        %v924 = vpop.f32.mrb[0].mxu0
        %925 = vdwg.mxu0
        %v928 = vunpack.c.l.s4 1966171168
        %v929 = vunpack.c.0.s8 %v928
        %v930 = vlaneseq
        %v931 = vshrl.u32 %v930, 7
        %v932 = vsub.s32 %v929, %v931
        %v933 = vrot.slane %v921, %v932
        %v934 = vcombine.high %v933, %v933
        %v936 = vunpack.c.l.s4 1966171168
        %v937 = vunpack.c.0.s8 %v936
        %v938 = vlaneseq
        %v939 = vshrl.u32 %v938, 7
        %v940 = vsub.s32 %v937, %v939
        %v941 = vrot.slane %v933, %v940
        %v943 = vunpack.c.l.s4 1966171168
        %v944 = vunpack.c.0.s8 %v943
        %v945 = vlaneseq
        %v946 = vshrl.u32 %v945, 7
        %v947 = vsub.s32 %v944, %v946
        %v948 = vrot.slane %v934, %v947
        %951 = vst [vmem:[%s209 + $0x4] sm:$0x1] %v941
        %952 = vst [vmem:[%s209 + $0x14] sm:$0x1] %v948
        %v953 = vld [vmem:[%s186] sm:$0x4]
        %v954 = vld [vmem:[%s186 + $0x8] sm:$0x4]
        %s955 = scalar_lea.vmem %s216, 320
        %v956 = vld [vmem:[%s955] sm:$0xf]
        %v957 = vld [vmem:[%s955 + $0x4] sm:$0xf]
        %v958 = vld [vmem:[%s955 + $0x8] sm:$0xf]
        %v959 = vld [vmem:[%s955 + $0xc] sm:$0xf]
        %v960 = vld [vmem:[%s955 + $0x10] sm:$0xf]
        %v961 = vld [vmem:[%s955 + $0x14] sm:$0xf]
        %v962 = vld [vmem:[%s955 + $0x18] sm:$0xf]
        %v963 = vld [vmem:[%s955 + $0x1c] sm:$0xf]
        %v964 = vld [vmem:[%s955 + $0x20] sm:$0xf]
        %v965 = vld [vmem:[%s955 + $0x24] sm:$0xf]
        %v966 = vld [vmem:[%s955 + $0x28] sm:$0xf]
        %v967 = vld [vmem:[%s955 + $0x2c] sm:$0xf]
        %v968 = vld [vmem:[%s955 + $0x30] sm:$0xf]
        %v969 = vld [vmem:[%s955 + $0x34] sm:$0xf]
        %v970 = vld [vmem:[%s955 + $0x38] sm:$0xf]
        %v971 = vld [vmem:[%s955 + $0x3c] sm:$0xf]
        %v974 = vunpack.c.l.b16 %v953
        %v975 = vunpack.c.l.b16 %v954
        %v976 = vpack.c.b16 %v974, %v974
        %v977 = vpack.c.b16 %v975, %v975
        %v978 = vunpack.c.l.b16 %v976
        %v979 = vunpack.c.l.b16 %v977
        %v980 = vrot.slane %v978, 5
        %v981 = vrot.slane %v979, 4
        %v982 = vsel %vm247, %v981, %v980
        %v983 = vpack.c.b16 %v982, %v982
        %v1001 = vunpack.c.l.b16 %v956
        %v1002 = vunpack.c.l.b16 %v957
        %v1003 = vunpack.c.l.b16 %v958
        %v1004 = vunpack.c.l.b16 %v959
        %v1005 = vunpack.c.l.b16 %v960
        %v1006 = vunpack.c.l.b16 %v961
        %v1007 = vunpack.c.l.b16 %v962
        %v1008 = vunpack.c.l.b16 %v963
        %v1009 = vunpack.c.l.b16 %v964
        %v1010 = vunpack.c.l.b16 %v965
        %v1011 = vunpack.c.l.b16 %v966
        %v1012 = vunpack.c.l.b16 %v967
        %v1013 = vunpack.c.l.b16 %v968
        %v1014 = vunpack.c.l.b16 %v969
        %v1015 = vunpack.c.l.b16 %v970
        %v1016 = vunpack.c.l.b16 %v971
        %v1017 = vpack.c.b16 %v1002, %v1001
        %v1018 = vpack.c.b16 %v1004, %v1003
        %v1019 = vpack.c.b16 %v1006, %v1005
        %v1020 = vpack.c.b16 %v1008, %v1007
        %v1021 = vpack.c.b16 %v1010, %v1009
        %v1022 = vpack.c.b16 %v1012, %v1011
        %v1023 = vpack.c.b16 %v1014, %v1013
        %v1024 = vpack.c.b16 %v1016, %v1015
        %1033 = vmatprep.subr.bf16.mxu0 0
        %1034 = vmatpush1.bf16.msra.mxu0 %v1017
        %1035 = vmatprep.subr.bf16.mxu0 0
        %1036 = vmatpush1.bf16.msra.mxu0 %v1018
        %1037 = vmatprep.subr.bf16.mxu0 0
        %1038 = vmatpush1.bf16.msra.mxu0 %v1019
        %1039 = vmatprep.subr.bf16.mxu0 0
        %1040 = vmatpush1.bf16.msra.mxu0 %v1020
        %1041 = vmatprep.subr.bf16.mxu0 0
        %1042 = vmatpush1.bf16.msra.mxu0 %v1021
        %1043 = vmatprep.subr.bf16.mxu0 0
        %1044 = vmatpush1.bf16.msra.mxu0 %v1022
        %1045 = vmatprep.subr.bf16.mxu0 0
        %1046 = vmatpush1.bf16.msra.mxu0 %v1023
        %1047 = vmatprep.subr.bf16.mxu0 0
        %1048 = vmatpush1.bf16.msra.mxu0 %v1024
        %1049 = vmatprep.subr.bf16.mxu0 0
        %1050 = vmatpush1.bf16.msra.mxu0 0
        %1051 = vmatprep.subr.bf16.mxu0 0
        %1052 = vmatpush1.bf16.msra.mxu0 0
        %1053 = vmatprep.subr.bf16.mxu0 0
        %1054 = vmatpush1.bf16.msra.mxu0 0
        %1055 = vmatprep.subr.bf16.mxu0 0
        %1056 = vmatpush1.bf16.msra.mxu0 0
        %1057 = vmatprep.subr.bf16.mxu0 0
        %1058 = vmatpush1.bf16.msra.mxu0 0
        %1059 = vmatprep.subr.bf16.mxu0 0
        %1060 = vmatpush1.bf16.msra.mxu0 0
        %1061 = vmatprep.subr.bf16.mxu0 0
        %1062 = vmatpush1.bf16.msra.mxu0 0
        %1063 = vmatprep.subr.bf16.mxu0 0
        %1064 = vmatpush1.bf16.msra.mxu0 0
        %1065 = vmatprep.mubr.bf16.mxu0 0
        %1066 = vmatmul.mubr.bf16.gmra.mrb[0].mxu0 %v983
        %v1067 = vpop.f32.mrb[0].mxu0
        %v1068 = vadd.f32 0.0, %v1067
        %v1069 = vpop.f32.mrb[0].mxu0
        %v1070 = vpop.f32.mrb[0].mxu0
        %v1071 = vpop.f32.mrb[0].mxu0
        %1072 = vdwg.mxu0
        %v1075 = vunpack.c.l.s4 1966171168
        %v1076 = vunpack.c.0.s8 %v1075
        %v1077 = vlaneseq
        %v1078 = vshrl.u32 %v1077, 7
        %v1079 = vsub.s32 %v1076, %v1078
        %v1080 = vrot.slane %v1068, %v1079
        %v1081 = vcombine.high %v1080, %v1080
        %v1083 = vunpack.c.l.s4 1966171168
        %v1084 = vunpack.c.0.s8 %v1083
        %v1085 = vlaneseq
        %v1086 = vshrl.u32 %v1085, 7
        %v1087 = vsub.s32 %v1084, %v1086
        %v1088 = vrot.slane %v1080, %v1087
        %v1090 = vunpack.c.l.s4 1966171168
        %v1091 = vunpack.c.0.s8 %v1090
        %v1092 = vlaneseq
        %v1093 = vshrl.u32 %v1092, 7
        %v1094 = vsub.s32 %v1091, %v1093
        %v1095 = vrot.slane %v1081, %v1094
        %1098 = vst [vmem:[%s209 + $0x5] sm:$0x1] %v1088
        %1099 = vst [vmem:[%s209 + $0x15] sm:$0x1] %v1095
        %v1100 = vld [vmem:[%s186] sm:$0x8]
        %v1101 = vld [vmem:[%s186 + $0x8] sm:$0x8]
        %s1102 = scalar_lea.vmem %s216, 384
        %v1103 = vld [vmem:[%s1102] sm:$0xf]
        %v1104 = vld [vmem:[%s1102 + $0x4] sm:$0xf]
        %v1105 = vld [vmem:[%s1102 + $0x8] sm:$0xf]
        %v1106 = vld [vmem:[%s1102 + $0xc] sm:$0xf]
        %v1107 = vld [vmem:[%s1102 + $0x10] sm:$0xf]
        %v1108 = vld [vmem:[%s1102 + $0x14] sm:$0xf]
        %v1109 = vld [vmem:[%s1102 + $0x18] sm:$0xf]
        %v1110 = vld [vmem:[%s1102 + $0x1c] sm:$0xf]
        %v1111 = vld [vmem:[%s1102 + $0x20] sm:$0xf]
        %v1112 = vld [vmem:[%s1102 + $0x24] sm:$0xf]
        %v1113 = vld [vmem:[%s1102 + $0x28] sm:$0xf]
        %v1114 = vld [vmem:[%s1102 + $0x2c] sm:$0xf]
        %v1115 = vld [vmem:[%s1102 + $0x30] sm:$0xf]
        %v1116 = vld [vmem:[%s1102 + $0x34] sm:$0xf]
        %v1117 = vld [vmem:[%s1102 + $0x38] sm:$0xf]
        %v1118 = vld [vmem:[%s1102 + $0x3c] sm:$0xf]
        %v1121 = vunpack.c.l.b16 %v1100
        %v1122 = vunpack.c.l.b16 %v1101
        %v1123 = vpack.c.b16 %v1121, %v1121
        %v1124 = vpack.c.b16 %v1122, %v1122
        %v1125 = vunpack.c.l.b16 %v1123
        %v1126 = vunpack.c.l.b16 %v1124
        %v1127 = vrot.slane %v1125, 6
        %v1128 = vrot.slane %v1126, 5
        %v1129 = vsel %vm247, %v1128, %v1127
        %v1130 = vpack.c.b16 %v1129, %v1129
        %v1148 = vunpack.c.l.b16 %v1103
        %v1149 = vunpack.c.l.b16 %v1104
        %v1150 = vunpack.c.l.b16 %v1105
        %v1151 = vunpack.c.l.b16 %v1106
        %v1152 = vunpack.c.l.b16 %v1107
        %v1153 = vunpack.c.l.b16 %v1108
        %v1154 = vunpack.c.l.b16 %v1109
        %v1155 = vunpack.c.l.b16 %v1110
        %v1156 = vunpack.c.l.b16 %v1111
        %v1157 = vunpack.c.l.b16 %v1112
        %v1158 = vunpack.c.l.b16 %v1113
        %v1159 = vunpack.c.l.b16 %v1114
        %v1160 = vunpack.c.l.b16 %v1115
        %v1161 = vunpack.c.l.b16 %v1116
        %v1162 = vunpack.c.l.b16 %v1117
        %v1163 = vunpack.c.l.b16 %v1118
        %v1164 = vpack.c.b16 %v1149, %v1148
        %v1165 = vpack.c.b16 %v1151, %v1150
        %v1166 = vpack.c.b16 %v1153, %v1152
        %v1167 = vpack.c.b16 %v1155, %v1154
        %v1168 = vpack.c.b16 %v1157, %v1156
        %v1169 = vpack.c.b16 %v1159, %v1158
        %v1170 = vpack.c.b16 %v1161, %v1160
        %v1171 = vpack.c.b16 %v1163, %v1162
        %1180 = vmatprep.subr.bf16.mxu0 0
        %1181 = vmatpush1.bf16.msra.mxu0 %v1164
        %1182 = vmatprep.subr.bf16.mxu0 0
        %1183 = vmatpush1.bf16.msra.mxu0 %v1165
        %1184 = vmatprep.subr.bf16.mxu0 0
        %1185 = vmatpush1.bf16.msra.mxu0 %v1166
        %1186 = vmatprep.subr.bf16.mxu0 0
        %1187 = vmatpush1.bf16.msra.mxu0 %v1167
        %1188 = vmatprep.subr.bf16.mxu0 0
        %1189 = vmatpush1.bf16.msra.mxu0 %v1168
        %1190 = vmatprep.subr.bf16.mxu0 0
        %1191 = vmatpush1.bf16.msra.mxu0 %v1169
        %1192 = vmatprep.subr.bf16.mxu0 0
        %1193 = vmatpush1.bf16.msra.mxu0 %v1170
        %1194 = vmatprep.subr.bf16.mxu0 0
        %1195 = vmatpush1.bf16.msra.mxu0 %v1171
        %1196 = vmatprep.subr.bf16.mxu0 0
        %1197 = vmatpush1.bf16.msra.mxu0 0
        %1198 = vmatprep.subr.bf16.mxu0 0
        %1199 = vmatpush1.bf16.msra.mxu0 0
        %1200 = vmatprep.subr.bf16.mxu0 0
        %1201 = vmatpush1.bf16.msra.mxu0 0
        %1202 = vmatprep.subr.bf16.mxu0 0
        %1203 = vmatpush1.bf16.msra.mxu0 0
        %1204 = vmatprep.subr.bf16.mxu0 0
        %1205 = vmatpush1.bf16.msra.mxu0 0
        %1206 = vmatprep.subr.bf16.mxu0 0
        %1207 = vmatpush1.bf16.msra.mxu0 0
        %1208 = vmatprep.subr.bf16.mxu0 0
        %1209 = vmatpush1.bf16.msra.mxu0 0
        %1210 = vmatprep.subr.bf16.mxu0 0
        %1211 = vmatpush1.bf16.msra.mxu0 0
        %1212 = vmatprep.mubr.bf16.mxu0 0
        %1213 = vmatmul.mubr.bf16.gmra.mrb[0].mxu0 %v1130
        %v1214 = vpop.f32.mrb[0].mxu0
        %v1215 = vadd.f32 0.0, %v1214
        %v1216 = vpop.f32.mrb[0].mxu0
        %v1217 = vpop.f32.mrb[0].mxu0
        %v1218 = vpop.f32.mrb[0].mxu0
        %1219 = vdwg.mxu0
        %v1222 = vunpack.c.l.s4 1966171168
        %v1223 = vunpack.c.0.s8 %v1222
        %v1224 = vlaneseq
        %v1225 = vshrl.u32 %v1224, 7
        %v1226 = vsub.s32 %v1223, %v1225
        %v1227 = vrot.slane %v1215, %v1226
        %v1228 = vcombine.high %v1227, %v1227
        %v1230 = vunpack.c.l.s4 1966171168
        %v1231 = vunpack.c.0.s8 %v1230
        %v1232 = vlaneseq
        %v1233 = vshrl.u32 %v1232, 7
        %v1234 = vsub.s32 %v1231, %v1233
        %v1235 = vrot.slane %v1227, %v1234
        %v1237 = vunpack.c.l.s4 1966171168
        %v1238 = vunpack.c.0.s8 %v1237
        %v1239 = vlaneseq
        %v1240 = vshrl.u32 %v1239, 7
        %v1241 = vsub.s32 %v1238, %v1240
        %v1242 = vrot.slane %v1228, %v1241
        %1245 = vst [vmem:[%s209 + $0x6] sm:$0x1] %v1235
        %1246 = vst [vmem:[%s209 + $0x16] sm:$0x1] %v1242
        %v1247 = vld [vmem:[%s186] sm:$0x8]
        %v1248 = vld [vmem:[%s186 + $0x8] sm:$0x8]
        %s1249 = scalar_lea.vmem %s216, 448
        %v1250 = vld [vmem:[%s1249] sm:$0xf]
        %v1251 = vld [vmem:[%s1249 + $0x4] sm:$0xf]
        %v1252 = vld [vmem:[%s1249 + $0x8] sm:$0xf]
        %v1253 = vld [vmem:[%s1249 + $0xc] sm:$0xf]
        %v1254 = vld [vmem:[%s1249 + $0x10] sm:$0xf]
        %v1255 = vld [vmem:[%s1249 + $0x14] sm:$0xf]
        %v1256 = vld [vmem:[%s1249 + $0x18] sm:$0xf]
        %v1257 = vld [vmem:[%s1249 + $0x1c] sm:$0xf]
        %v1258 = vld [vmem:[%s1249 + $0x20] sm:$0xf]
        %v1259 = vld [vmem:[%s1249 + $0x24] sm:$0xf]
        %v1260 = vld [vmem:[%s1249 + $0x28] sm:$0xf]
        %v1261 = vld [vmem:[%s1249 + $0x2c] sm:$0xf]
        %v1262 = vld [vmem:[%s1249 + $0x30] sm:$0xf]
        %v1263 = vld [vmem:[%s1249 + $0x34] sm:$0xf]
        %v1264 = vld [vmem:[%s1249 + $0x38] sm:$0xf]
        %v1265 = vld [vmem:[%s1249 + $0x3c] sm:$0xf]
        %v1268 = vunpack.c.l.b16 %v1247
        %v1269 = vunpack.c.l.b16 %v1248
        %v1270 = vpack.c.b16 %v1268, %v1268
        %v1271 = vpack.c.b16 %v1269, %v1269
        %v1272 = vunpack.c.l.b16 %v1270
        %v1273 = vunpack.c.l.b16 %v1271
        %v1274 = vrot.slane %v1272, 7
        %v1275 = vrot.slane %v1273, 6
        %v1276 = vsel %vm247, %v1275, %v1274
        %v1277 = vpack.c.b16 %v1276, %v1276
        %v1295 = vunpack.c.l.b16 %v1250
        %v1296 = vunpack.c.l.b16 %v1251
        %v1297 = vunpack.c.l.b16 %v1252
        %v1298 = vunpack.c.l.b16 %v1253
        %v1299 = vunpack.c.l.b16 %v1254
        %v1300 = vunpack.c.l.b16 %v1255
        %v1301 = vunpack.c.l.b16 %v1256
        %v1302 = vunpack.c.l.b16 %v1257
        %v1303 = vunpack.c.l.b16 %v1258
        %v1304 = vunpack.c.l.b16 %v1259
        %v1305 = vunpack.c.l.b16 %v1260
        %v1306 = vunpack.c.l.b16 %v1261
        %v1307 = vunpack.c.l.b16 %v1262
        %v1308 = vunpack.c.l.b16 %v1263
        %v1309 = vunpack.c.l.b16 %v1264
        %v1310 = vunpack.c.l.b16 %v1265
        %v1311 = vpack.c.b16 %v1296, %v1295
        %v1312 = vpack.c.b16 %v1298, %v1297
        %v1313 = vpack.c.b16 %v1300, %v1299
        %v1314 = vpack.c.b16 %v1302, %v1301
        %v1315 = vpack.c.b16 %v1304, %v1303
        %v1316 = vpack.c.b16 %v1306, %v1305
        %v1317 = vpack.c.b16 %v1308, %v1307
        %v1318 = vpack.c.b16 %v1310, %v1309
        %1327 = vmatprep.subr.bf16.mxu0 0
        %1328 = vmatpush1.bf16.msra.mxu0 %v1311
        %1329 = vmatprep.subr.bf16.mxu0 0
        %1330 = vmatpush1.bf16.msra.mxu0 %v1312
        %1331 = vmatprep.subr.bf16.mxu0 0
        %1332 = vmatpush1.bf16.msra.mxu0 %v1313
        %1333 = vmatprep.subr.bf16.mxu0 0
        %1334 = vmatpush1.bf16.msra.mxu0 %v1314
        %1335 = vmatprep.subr.bf16.mxu0 0
        %1336 = vmatpush1.bf16.msra.mxu0 %v1315
        %1337 = vmatprep.subr.bf16.mxu0 0
        %1338 = vmatpush1.bf16.msra.mxu0 %v1316
        %1339 = vmatprep.subr.bf16.mxu0 0
        %1340 = vmatpush1.bf16.msra.mxu0 %v1317
        %1341 = vmatprep.subr.bf16.mxu0 0
        %1342 = vmatpush1.bf16.msra.mxu0 %v1318
        %1343 = vmatprep.subr.bf16.mxu0 0
        %1344 = vmatpush1.bf16.msra.mxu0 0
        %1345 = vmatprep.subr.bf16.mxu0 0
        %1346 = vmatpush1.bf16.msra.mxu0 0
        %1347 = vmatprep.subr.bf16.mxu0 0
        %1348 = vmatpush1.bf16.msra.mxu0 0
        %1349 = vmatprep.subr.bf16.mxu0 0
        %1350 = vmatpush1.bf16.msra.mxu0 0
        %1351 = vmatprep.subr.bf16.mxu0 0
        %1352 = vmatpush1.bf16.msra.mxu0 0
        %1353 = vmatprep.subr.bf16.mxu0 0
        %1354 = vmatpush1.bf16.msra.mxu0 0
        %1355 = vmatprep.subr.bf16.mxu0 0
        %1356 = vmatpush1.bf16.msra.mxu0 0
        %1357 = vmatprep.subr.bf16.mxu0 0
        %1358 = vmatpush1.bf16.msra.mxu0 0
        %1359 = vmatprep.mubr.bf16.mxu0 0
        %1360 = vmatmul.mubr.bf16.gmra.mrb[0].mxu0 %v1277
        %v1361 = vpop.f32.mrb[0].mxu0
        %v1362 = vadd.f32 0.0, %v1361
        %v1363 = vpop.f32.mrb[0].mxu0
        %v1364 = vpop.f32.mrb[0].mxu0
        %v1365 = vpop.f32.mrb[0].mxu0
        %1366 = vdwg.mxu0
        %v1369 = vunpack.c.l.s4 1966171168
        %v1370 = vunpack.c.0.s8 %v1369
        %v1371 = vlaneseq
        %v1372 = vshrl.u32 %v1371, 7
        %v1373 = vsub.s32 %v1370, %v1372
        %v1374 = vrot.slane %v1362, %v1373
        %v1375 = vcombine.high %v1374, %v1374
        %v1377 = vunpack.c.l.s4 1966171168
        %v1378 = vunpack.c.0.s8 %v1377
        %v1379 = vlaneseq
        %v1380 = vshrl.u32 %v1379, 7
        %v1381 = vsub.s32 %v1378, %v1380
        %v1382 = vrot.slane %v1374, %v1381
        %v1384 = vunpack.c.l.s4 1966171168
        %v1385 = vunpack.c.0.s8 %v1384
        %v1386 = vlaneseq
        %v1387 = vshrl.u32 %v1386, 7
        %v1388 = vsub.s32 %v1385, %v1387
        %v1389 = vrot.slane %v1375, %v1388
        %1392 = vst [vmem:[%s209 + $0x7] sm:$0x1] %v1382
        %1393 = vst [vmem:[%s209 + $0x17] sm:$0x1] %v1389
        %v1394 = vld [vmem:[%s186 + $0x4] sm:$0x1]
        %v1395 = vld [vmem:[%s186 + $0xc] sm:$0x1]
        %s1396 = scalar_lea.vmem %s216, 512
        %v1397 = vld [vmem:[%s1396] sm:$0xf]
        %v1398 = vld [vmem:[%s1396 + $0x4] sm:$0xf]
        %v1399 = vld [vmem:[%s1396 + $0x8] sm:$0xf]
        %v1400 = vld [vmem:[%s1396 + $0xc] sm:$0xf]
        %v1401 = vld [vmem:[%s1396 + $0x10] sm:$0xf]
        %v1402 = vld [vmem:[%s1396 + $0x14] sm:$0xf]
        %v1403 = vld [vmem:[%s1396 + $0x18] sm:$0xf]
        %v1404 = vld [vmem:[%s1396 + $0x1c] sm:$0xf]
        %v1405 = vld [vmem:[%s1396 + $0x20] sm:$0xf]
        %v1406 = vld [vmem:[%s1396 + $0x24] sm:$0xf]
        %v1407 = vld [vmem:[%s1396 + $0x28] sm:$0xf]
        %v1408 = vld [vmem:[%s1396 + $0x2c] sm:$0xf]
        %v1409 = vld [vmem:[%s1396 + $0x30] sm:$0xf]
        %v1410 = vld [vmem:[%s1396 + $0x34] sm:$0xf]
        %v1411 = vld [vmem:[%s1396 + $0x38] sm:$0xf]
        %v1412 = vld [vmem:[%s1396 + $0x3c] sm:$0xf]
        %v1415 = vunpack.c.l.b16 %v1394
        %v1416 = vunpack.c.l.b16 %v1395
        %v1417 = vpack.c.b16 %v1415, %v1415
        %v1418 = vpack.c.b16 %v1416, %v1416
        %v1419 = vunpack.c.l.b16 %v1417
        %v1420 = vunpack.c.l.b16 %v1418
        %v1421 = vrot.slane %v1420, 7
        %v1422 = vsel %vm247, %v1421, %v1419
        %v1423 = vpack.c.b16 %v1422, %v1422
        %v1441 = vunpack.c.l.b16 %v1397
        %v1442 = vunpack.c.l.b16 %v1398
        %v1443 = vunpack.c.l.b16 %v1399
        %v1444 = vunpack.c.l.b16 %v1400
        %v1445 = vunpack.c.l.b16 %v1401
        %v1446 = vunpack.c.l.b16 %v1402
        %v1447 = vunpack.c.l.b16 %v1403
        %v1448 = vunpack.c.l.b16 %v1404
        %v1449 = vunpack.c.l.b16 %v1405
        %v1450 = vunpack.c.l.b16 %v1406
        %v1451 = vunpack.c.l.b16 %v1407
        %v1452 = vunpack.c.l.b16 %v1408
        %v1453 = vunpack.c.l.b16 %v1409
        %v1454 = vunpack.c.l.b16 %v1410
        %v1455 = vunpack.c.l.b16 %v1411
        %v1456 = vunpack.c.l.b16 %v1412
        %v1457 = vpack.c.b16 %v1442, %v1441
        %v1458 = vpack.c.b16 %v1444, %v1443
        %v1459 = vpack.c.b16 %v1446, %v1445
        %v1460 = vpack.c.b16 %v1448, %v1447
        %v1461 = vpack.c.b16 %v1450, %v1449
        %v1462 = vpack.c.b16 %v1452, %v1451
        %v1463 = vpack.c.b16 %v1454, %v1453
        %v1464 = vpack.c.b16 %v1456, %v1455
        %1473 = vmatprep.subr.bf16.mxu0 0
        %1474 = vmatpush1.bf16.msra.mxu0 %v1457
        %1475 = vmatprep.subr.bf16.mxu0 0
        %1476 = vmatpush1.bf16.msra.mxu0 %v1458
        %1477 = vmatprep.subr.bf16.mxu0 0
        %1478 = vmatpush1.bf16.msra.mxu0 %v1459
        %1479 = vmatprep.subr.bf16.mxu0 0
        %1480 = vmatpush1.bf16.msra.mxu0 %v1460
        %1481 = vmatprep.subr.bf16.mxu0 0
        %1482 = vmatpush1.bf16.msra.mxu0 %v1461
        %1483 = vmatprep.subr.bf16.mxu0 0
        %1484 = vmatpush1.bf16.msra.mxu0 %v1462
        %1485 = vmatprep.subr.bf16.mxu0 0
        %1486 = vmatpush1.bf16.msra.mxu0 %v1463
        %1487 = vmatprep.subr.bf16.mxu0 0
        %1488 = vmatpush1.bf16.msra.mxu0 %v1464
        %1489 = vmatprep.subr.bf16.mxu0 0
        %1490 = vmatpush1.bf16.msra.mxu0 0
        %1491 = vmatprep.subr.bf16.mxu0 0
        %1492 = vmatpush1.bf16.msra.mxu0 0
        %1493 = vmatprep.subr.bf16.mxu0 0
        %1494 = vmatpush1.bf16.msra.mxu0 0
        %1495 = vmatprep.subr.bf16.mxu0 0
        %1496 = vmatpush1.bf16.msra.mxu0 0
        %1497 = vmatprep.subr.bf16.mxu0 0
        %1498 = vmatpush1.bf16.msra.mxu0 0
        %1499 = vmatprep.subr.bf16.mxu0 0
        %1500 = vmatpush1.bf16.msra.mxu0 0
        %1501 = vmatprep.subr.bf16.mxu0 0
        %1502 = vmatpush1.bf16.msra.mxu0 0
        %1503 = vmatprep.subr.bf16.mxu0 0
        %1504 = vmatpush1.bf16.msra.mxu0 0
        %1505 = vmatprep.mubr.bf16.mxu0 0
        %1506 = vmatmul.mubr.bf16.gmra.mrb[0].mxu0 %v1423
        %v1507 = vpop.f32.mrb[0].mxu0
        %v1508 = vadd.f32 0.0, %v1507
        %v1509 = vpop.f32.mrb[0].mxu0
        %v1510 = vpop.f32.mrb[0].mxu0
        %v1511 = vpop.f32.mrb[0].mxu0
        %1512 = vdwg.mxu0
        %v1515 = vunpack.c.l.s4 1966171168
        %v1516 = vunpack.c.0.s8 %v1515
        %v1517 = vlaneseq
        %v1518 = vshrl.u32 %v1517, 7
        %v1519 = vsub.s32 %v1516, %v1518
        %v1520 = vrot.slane %v1508, %v1519
        %v1521 = vcombine.high %v1520, %v1520
        %v1523 = vunpack.c.l.s4 1966171168
        %v1524 = vunpack.c.0.s8 %v1523
        %v1525 = vlaneseq
        %v1526 = vshrl.u32 %v1525, 7
        %v1527 = vsub.s32 %v1524, %v1526
        %v1528 = vrot.slane %v1520, %v1527
        %v1530 = vunpack.c.l.s4 1966171168
        %v1531 = vunpack.c.0.s8 %v1530
        %v1532 = vlaneseq
        %v1533 = vshrl.u32 %v1532, 7
        %v1534 = vsub.s32 %v1531, %v1533
        %v1535 = vrot.slane %v1521, %v1534
        %1538 = vst [vmem:[%s209 + $0x8] sm:$0x1] %v1528
        %1539 = vst [vmem:[%s209 + $0x18] sm:$0x1] %v1535
        %v1540 = vld [vmem:[%s186 + $0x4] sm:$0x1]
        %v1541 = vld [vmem:[%s186 + $0xc] sm:$0x1]
        %s1542 = scalar_lea.vmem %s216, 576
        %v1543 = vld [vmem:[%s1542] sm:$0xf]
        %v1544 = vld [vmem:[%s1542 + $0x4] sm:$0xf]
        %v1545 = vld [vmem:[%s1542 + $0x8] sm:$0xf]
        %v1546 = vld [vmem:[%s1542 + $0xc] sm:$0xf]
        %v1547 = vld [vmem:[%s1542 + $0x10] sm:$0xf]
        %v1548 = vld [vmem:[%s1542 + $0x14] sm:$0xf]
        %v1549 = vld [vmem:[%s1542 + $0x18] sm:$0xf]
        %v1550 = vld [vmem:[%s1542 + $0x1c] sm:$0xf]
        %v1551 = vld [vmem:[%s1542 + $0x20] sm:$0xf]
        %v1552 = vld [vmem:[%s1542 + $0x24] sm:$0xf]
        %v1553 = vld [vmem:[%s1542 + $0x28] sm:$0xf]
        %v1554 = vld [vmem:[%s1542 + $0x2c] sm:$0xf]
        %v1555 = vld [vmem:[%s1542 + $0x30] sm:$0xf]
        %v1556 = vld [vmem:[%s1542 + $0x34] sm:$0xf]
        %v1557 = vld [vmem:[%s1542 + $0x38] sm:$0xf]
        %v1558 = vld [vmem:[%s1542 + $0x3c] sm:$0xf]
        %v1561 = vunpack.c.l.b16 %v1540
        %v1562 = vunpack.c.l.b16 %v1541
        %v1563 = vpack.c.b16 %v1561, %v1561
        %v1564 = vpack.c.b16 %v1562, %v1562
        %v1565 = vunpack.c.l.b16 %v1563
        %v1566 = vunpack.c.l.b16 %v1564
        %v1567 = vrot.slane %v1565, 1
        %v1568 = vsel %vm247, %v1566, %v1567
        %v1569 = vpack.c.b16 %v1568, %v1568
        %v1587 = vunpack.c.l.b16 %v1543
        %v1588 = vunpack.c.l.b16 %v1544
        %v1589 = vunpack.c.l.b16 %v1545
        %v1590 = vunpack.c.l.b16 %v1546
        %v1591 = vunpack.c.l.b16 %v1547
        %v1592 = vunpack.c.l.b16 %v1548
        %v1593 = vunpack.c.l.b16 %v1549
        %v1594 = vunpack.c.l.b16 %v1550
        %v1595 = vunpack.c.l.b16 %v1551
        %v1596 = vunpack.c.l.b16 %v1552
        %v1597 = vunpack.c.l.b16 %v1553
        %v1598 = vunpack.c.l.b16 %v1554
        %v1599 = vunpack.c.l.b16 %v1555
        %v1600 = vunpack.c.l.b16 %v1556
        %v1601 = vunpack.c.l.b16 %v1557
        %v1602 = vunpack.c.l.b16 %v1558
        %v1603 = vpack.c.b16 %v1588, %v1587
        %v1604 = vpack.c.b16 %v1590, %v1589
        %v1605 = vpack.c.b16 %v1592, %v1591
        %v1606 = vpack.c.b16 %v1594, %v1593
        %v1607 = vpack.c.b16 %v1596, %v1595
        %v1608 = vpack.c.b16 %v1598, %v1597
        %v1609 = vpack.c.b16 %v1600, %v1599
        %v1610 = vpack.c.b16 %v1602, %v1601
        %1619 = vmatprep.subr.bf16.mxu0 0
        %1620 = vmatpush1.bf16.msra.mxu0 %v1603
        %1621 = vmatprep.subr.bf16.mxu0 0
        %1622 = vmatpush1.bf16.msra.mxu0 %v1604
        %1623 = vmatprep.subr.bf16.mxu0 0
        %1624 = vmatpush1.bf16.msra.mxu0 %v1605
        %1625 = vmatprep.subr.bf16.mxu0 0
        %1626 = vmatpush1.bf16.msra.mxu0 %v1606
        %1627 = vmatprep.subr.bf16.mxu0 0
        %1628 = vmatpush1.bf16.msra.mxu0 %v1607
        %1629 = vmatprep.subr.bf16.mxu0 0
        %1630 = vmatpush1.bf16.msra.mxu0 %v1608
        %1631 = vmatprep.subr.bf16.mxu0 0
        %1632 = vmatpush1.bf16.msra.mxu0 %v1609
        %1633 = vmatprep.subr.bf16.mxu0 0
        %1634 = vmatpush1.bf16.msra.mxu0 %v1610
        %1635 = vmatprep.subr.bf16.mxu0 0
        %1636 = vmatpush1.bf16.msra.mxu0 0
        %1637 = vmatprep.subr.bf16.mxu0 0
        %1638 = vmatpush1.bf16.msra.mxu0 0
        %1639 = vmatprep.subr.bf16.mxu0 0
        %1640 = vmatpush1.bf16.msra.mxu0 0
        %1641 = vmatprep.subr.bf16.mxu0 0
        %1642 = vmatpush1.bf16.msra.mxu0 0
        %1643 = vmatprep.subr.bf16.mxu0 0
        %1644 = vmatpush1.bf16.msra.mxu0 0
        %1645 = vmatprep.subr.bf16.mxu0 0
        %1646 = vmatpush1.bf16.msra.mxu0 0
        %1647 = vmatprep.subr.bf16.mxu0 0
        %1648 = vmatpush1.bf16.msra.mxu0 0
        %1649 = vmatprep.subr.bf16.mxu0 0
        %1650 = vmatpush1.bf16.msra.mxu0 0
        %1651 = vmatprep.mubr.bf16.mxu0 0
        %1652 = vmatmul.mubr.bf16.gmra.mrb[0].mxu0 %v1569
        %v1653 = vpop.f32.mrb[0].mxu0
        %v1654 = vadd.f32 0.0, %v1653
        %v1655 = vpop.f32.mrb[0].mxu0
        %v1656 = vpop.f32.mrb[0].mxu0
        %v1657 = vpop.f32.mrb[0].mxu0
        %1658 = vdwg.mxu0
        %v1661 = vunpack.c.l.s4 1966171168
        %v1662 = vunpack.c.0.s8 %v1661
        %v1663 = vlaneseq
        %v1664 = vshrl.u32 %v1663, 7
        %v1665 = vsub.s32 %v1662, %v1664
        %v1666 = vrot.slane %v1654, %v1665
        %v1667 = vcombine.high %v1666, %v1666
        %v1669 = vunpack.c.l.s4 1966171168
        %v1670 = vunpack.c.0.s8 %v1669
        %v1671 = vlaneseq
        %v1672 = vshrl.u32 %v1671, 7
        %v1673 = vsub.s32 %v1670, %v1672
        %v1674 = vrot.slane %v1666, %v1673
        %v1676 = vunpack.c.l.s4 1966171168
        %v1677 = vunpack.c.0.s8 %v1676
        %v1678 = vlaneseq
        %v1679 = vshrl.u32 %v1678, 7
        %v1680 = vsub.s32 %v1677, %v1679
        %v1681 = vrot.slane %v1667, %v1680
        %1684 = vst [vmem:[%s209 + $0x9] sm:$0x1] %v1674
        %1685 = vst [vmem:[%s209 + $0x19] sm:$0x1] %v1681
        %v1686 = vld [vmem:[%s186 + $0x4] sm:$0x2]
        %v1687 = vld [vmem:[%s186 + $0xc] sm:$0x2]
        %s1688 = scalar_lea.vmem %s216, 640
        %v1689 = vld [vmem:[%s1688] sm:$0xf]
        %v1690 = vld [vmem:[%s1688 + $0x4] sm:$0xf]
        %v1691 = vld [vmem:[%s1688 + $0x8] sm:$0xf]
        %v1692 = vld [vmem:[%s1688 + $0xc] sm:$0xf]
        %v1693 = vld [vmem:[%s1688 + $0x10] sm:$0xf]
        %v1694 = vld [vmem:[%s1688 + $0x14] sm:$0xf]
        %v1695 = vld [vmem:[%s1688 + $0x18] sm:$0xf]
        %v1696 = vld [vmem:[%s1688 + $0x1c] sm:$0xf]
        %v1697 = vld [vmem:[%s1688 + $0x20] sm:$0xf]
        %v1698 = vld [vmem:[%s1688 + $0x24] sm:$0xf]
        %v1699 = vld [vmem:[%s1688 + $0x28] sm:$0xf]
        %v1700 = vld [vmem:[%s1688 + $0x2c] sm:$0xf]
        %v1701 = vld [vmem:[%s1688 + $0x30] sm:$0xf]
        %v1702 = vld [vmem:[%s1688 + $0x34] sm:$0xf]
        %v1703 = vld [vmem:[%s1688 + $0x38] sm:$0xf]
        %v1704 = vld [vmem:[%s1688 + $0x3c] sm:$0xf]
        %v1707 = vunpack.c.l.b16 %v1686
        %v1708 = vunpack.c.l.b16 %v1687
        %v1709 = vpack.c.b16 %v1707, %v1707
        %v1710 = vpack.c.b16 %v1708, %v1708
        %v1711 = vunpack.c.l.b16 %v1709
        %v1712 = vunpack.c.l.b16 %v1710
        %v1713 = vrot.slane %v1711, 2
        %v1714 = vrot.slane %v1712, 1
        %v1715 = vsel %vm247, %v1714, %v1713
        %v1716 = vpack.c.b16 %v1715, %v1715
        %v1734 = vunpack.c.l.b16 %v1689
        %v1735 = vunpack.c.l.b16 %v1690
        %v1736 = vunpack.c.l.b16 %v1691
        %v1737 = vunpack.c.l.b16 %v1692
        %v1738 = vunpack.c.l.b16 %v1693
        %v1739 = vunpack.c.l.b16 %v1694
        %v1740 = vunpack.c.l.b16 %v1695
        %v1741 = vunpack.c.l.b16 %v1696
        %v1742 = vunpack.c.l.b16 %v1697
        %v1743 = vunpack.c.l.b16 %v1698
        %v1744 = vunpack.c.l.b16 %v1699
        %v1745 = vunpack.c.l.b16 %v1700
        %v1746 = vunpack.c.l.b16 %v1701
        %v1747 = vunpack.c.l.b16 %v1702
        %v1748 = vunpack.c.l.b16 %v1703
        %v1749 = vunpack.c.l.b16 %v1704
        %v1750 = vpack.c.b16 %v1735, %v1734
        %v1751 = vpack.c.b16 %v1737, %v1736
        %v1752 = vpack.c.b16 %v1739, %v1738
        %v1753 = vpack.c.b16 %v1741, %v1740
        %v1754 = vpack.c.b16 %v1743, %v1742
        %v1755 = vpack.c.b16 %v1745, %v1744
        %v1756 = vpack.c.b16 %v1747, %v1746
        %v1757 = vpack.c.b16 %v1749, %v1748
        %1766 = vmatprep.subr.bf16.mxu0 0
        %1767 = vmatpush1.bf16.msra.mxu0 %v1750
        %1768 = vmatprep.subr.bf16.mxu0 0
        %1769 = vmatpush1.bf16.msra.mxu0 %v1751
        %1770 = vmatprep.subr.bf16.mxu0 0
        %1771 = vmatpush1.bf16.msra.mxu0 %v1752
        %1772 = vmatprep.subr.bf16.mxu0 0
        %1773 = vmatpush1.bf16.msra.mxu0 %v1753
        %1774 = vmatprep.subr.bf16.mxu0 0
        %1775 = vmatpush1.bf16.msra.mxu0 %v1754
        %1776 = vmatprep.subr.bf16.mxu0 0
        %1777 = vmatpush1.bf16.msra.mxu0 %v1755
        %1778 = vmatprep.subr.bf16.mxu0 0
        %1779 = vmatpush1.bf16.msra.mxu0 %v1756
        %1780 = vmatprep.subr.bf16.mxu0 0
        %1781 = vmatpush1.bf16.msra.mxu0 %v1757
        %1782 = vmatprep.subr.bf16.mxu0 0
        %1783 = vmatpush1.bf16.msra.mxu0 0
        %1784 = vmatprep.subr.bf16.mxu0 0
        %1785 = vmatpush1.bf16.msra.mxu0 0
        %1786 = vmatprep.subr.bf16.mxu0 0
        %1787 = vmatpush1.bf16.msra.mxu0 0
        %1788 = vmatprep.subr.bf16.mxu0 0
        %1789 = vmatpush1.bf16.msra.mxu0 0
        %1790 = vmatprep.subr.bf16.mxu0 0
        %1791 = vmatpush1.bf16.msra.mxu0 0
        %1792 = vmatprep.subr.bf16.mxu0 0
        %1793 = vmatpush1.bf16.msra.mxu0 0
        %1794 = vmatprep.subr.bf16.mxu0 0
        %1795 = vmatpush1.bf16.msra.mxu0 0
        %1796 = vmatprep.subr.bf16.mxu0 0
        %1797 = vmatpush1.bf16.msra.mxu0 0
        %1798 = vmatprep.mubr.bf16.mxu0 0
        %1799 = vmatmul.mubr.bf16.gmra.mrb[0].mxu0 %v1716
        %v1800 = vpop.f32.mrb[0].mxu0
        %v1801 = vadd.f32 0.0, %v1800
        %v1802 = vpop.f32.mrb[0].mxu0
        %v1803 = vpop.f32.mrb[0].mxu0
        %v1804 = vpop.f32.mrb[0].mxu0
        %1805 = vdwg.mxu0
        %v1808 = vunpack.c.l.s4 1966171168
        %v1809 = vunpack.c.0.s8 %v1808
        %v1810 = vlaneseq
        %v1811 = vshrl.u32 %v1810, 7
        %v1812 = vsub.s32 %v1809, %v1811
        %v1813 = vrot.slane %v1801, %v1812
        %v1814 = vcombine.high %v1813, %v1813
        %v1816 = vunpack.c.l.s4 1966171168
        %v1817 = vunpack.c.0.s8 %v1816
        %v1818 = vlaneseq
        %v1819 = vshrl.u32 %v1818, 7
        %v1820 = vsub.s32 %v1817, %v1819
        %v1821 = vrot.slane %v1813, %v1820
        %v1823 = vunpack.c.l.s4 1966171168
        %v1824 = vunpack.c.0.s8 %v1823
        %v1825 = vlaneseq
        %v1826 = vshrl.u32 %v1825, 7
        %v1827 = vsub.s32 %v1824, %v1826
        %v1828 = vrot.slane %v1814, %v1827
        %1831 = vst [vmem:[%s209 + $0xa] sm:$0x1] %v1821
        %1832 = vst [vmem:[%s209 + $0x1a] sm:$0x1] %v1828
        %v1833 = vld [vmem:[%s186 + $0x4] sm:$0x2]
        %v1834 = vld [vmem:[%s186 + $0xc] sm:$0x2]
        %s1835 = scalar_lea.vmem %s216, 704
        %v1836 = vld [vmem:[%s1835] sm:$0xf]
        %v1837 = vld [vmem:[%s1835 + $0x4] sm:$0xf]
        %v1838 = vld [vmem:[%s1835 + $0x8] sm:$0xf]
        %v1839 = vld [vmem:[%s1835 + $0xc] sm:$0xf]
        %v1840 = vld [vmem:[%s1835 + $0x10] sm:$0xf]
        %v1841 = vld [vmem:[%s1835 + $0x14] sm:$0xf]
        %v1842 = vld [vmem:[%s1835 + $0x18] sm:$0xf]
        %v1843 = vld [vmem:[%s1835 + $0x1c] sm:$0xf]
        %v1844 = vld [vmem:[%s1835 + $0x20] sm:$0xf]
        %v1845 = vld [vmem:[%s1835 + $0x24] sm:$0xf]
        %v1846 = vld [vmem:[%s1835 + $0x28] sm:$0xf]
        %v1847 = vld [vmem:[%s1835 + $0x2c] sm:$0xf]
        %v1848 = vld [vmem:[%s1835 + $0x30] sm:$0xf]
        %v1849 = vld [vmem:[%s1835 + $0x34] sm:$0xf]
        %v1850 = vld [vmem:[%s1835 + $0x38] sm:$0xf]
        %v1851 = vld [vmem:[%s1835 + $0x3c] sm:$0xf]
        %v1854 = vunpack.c.l.b16 %v1833
        %v1855 = vunpack.c.l.b16 %v1834
        %v1856 = vpack.c.b16 %v1854, %v1854
        %v1857 = vpack.c.b16 %v1855, %v1855
        %v1858 = vunpack.c.l.b16 %v1856
        %v1859 = vunpack.c.l.b16 %v1857
        %v1860 = vrot.slane %v1858, 3
        %v1861 = vrot.slane %v1859, 2
        %v1862 = vsel %vm247, %v1861, %v1860
        %v1863 = vpack.c.b16 %v1862, %v1862
        %v1881 = vunpack.c.l.b16 %v1836
        %v1882 = vunpack.c.l.b16 %v1837
        %v1883 = vunpack.c.l.b16 %v1838
        %v1884 = vunpack.c.l.b16 %v1839
        %v1885 = vunpack.c.l.b16 %v1840
        %v1886 = vunpack.c.l.b16 %v1841
        %v1887 = vunpack.c.l.b16 %v1842
        %v1888 = vunpack.c.l.b16 %v1843
        %v1889 = vunpack.c.l.b16 %v1844
        %v1890 = vunpack.c.l.b16 %v1845
        %v1891 = vunpack.c.l.b16 %v1846
        %v1892 = vunpack.c.l.b16 %v1847
        %v1893 = vunpack.c.l.b16 %v1848
        %v1894 = vunpack.c.l.b16 %v1849
        %v1895 = vunpack.c.l.b16 %v1850
        %v1896 = vunpack.c.l.b16 %v1851
        %v1897 = vpack.c.b16 %v1882, %v1881
        %v1898 = vpack.c.b16 %v1884, %v1883
        %v1899 = vpack.c.b16 %v1886, %v1885
        %v1900 = vpack.c.b16 %v1888, %v1887
        %v1901 = vpack.c.b16 %v1890, %v1889
        %v1902 = vpack.c.b16 %v1892, %v1891
        %v1903 = vpack.c.b16 %v1894, %v1893
        %v1904 = vpack.c.b16 %v1896, %v1895
        %1913 = vmatprep.subr.bf16.mxu0 0
        %1914 = vmatpush1.bf16.msra.mxu0 %v1897
        %1915 = vmatprep.subr.bf16.mxu0 0
        %1916 = vmatpush1.bf16.msra.mxu0 %v1898
        %1917 = vmatprep.subr.bf16.mxu0 0
        %1918 = vmatpush1.bf16.msra.mxu0 %v1899
        %1919 = vmatprep.subr.bf16.mxu0 0
        %1920 = vmatpush1.bf16.msra.mxu0 %v1900
        %1921 = vmatprep.subr.bf16.mxu0 0
        %1922 = vmatpush1.bf16.msra.mxu0 %v1901
        %1923 = vmatprep.subr.bf16.mxu0 0
        %1924 = vmatpush1.bf16.msra.mxu0 %v1902
        %1925 = vmatprep.subr.bf16.mxu0 0
        %1926 = vmatpush1.bf16.msra.mxu0 %v1903
        %1927 = vmatprep.subr.bf16.mxu0 0
        %1928 = vmatpush1.bf16.msra.mxu0 %v1904
        %1929 = vmatprep.subr.bf16.mxu0 0
        %1930 = vmatpush1.bf16.msra.mxu0 0
        %1931 = vmatprep.subr.bf16.mxu0 0
        %1932 = vmatpush1.bf16.msra.mxu0 0
        %1933 = vmatprep.subr.bf16.mxu0 0
        %1934 = vmatpush1.bf16.msra.mxu0 0
        %1935 = vmatprep.subr.bf16.mxu0 0
        %1936 = vmatpush1.bf16.msra.mxu0 0
        %1937 = vmatprep.subr.bf16.mxu0 0
        %1938 = vmatpush1.bf16.msra.mxu0 0
        %1939 = vmatprep.subr.bf16.mxu0 0
        %1940 = vmatpush1.bf16.msra.mxu0 0
        %1941 = vmatprep.subr.bf16.mxu0 0
        %1942 = vmatpush1.bf16.msra.mxu0 0
        %1943 = vmatprep.subr.bf16.mxu0 0
        %1944 = vmatpush1.bf16.msra.mxu0 0
        %1945 = vmatprep.mubr.bf16.mxu0 0
        %1946 = vmatmul.mubr.bf16.gmra.mrb[0].mxu0 %v1863
        %v1947 = vpop.f32.mrb[0].mxu0
        %v1948 = vadd.f32 0.0, %v1947
        %v1949 = vpop.f32.mrb[0].mxu0
        %v1950 = vpop.f32.mrb[0].mxu0
        %v1951 = vpop.f32.mrb[0].mxu0
        %1952 = vdwg.mxu0
        %v1955 = vunpack.c.l.s4 1966171168
        %v1956 = vunpack.c.0.s8 %v1955
        %v1957 = vlaneseq
        %v1958 = vshrl.u32 %v1957, 7
        %v1959 = vsub.s32 %v1956, %v1958
        %v1960 = vrot.slane %v1948, %v1959
        %v1961 = vcombine.high %v1960, %v1960
        %v1963 = vunpack.c.l.s4 1966171168
        %v1964 = vunpack.c.0.s8 %v1963
        %v1965 = vlaneseq
        %v1966 = vshrl.u32 %v1965, 7
        %v1967 = vsub.s32 %v1964, %v1966
        %v1968 = vrot.slane %v1960, %v1967
        %v1970 = vunpack.c.l.s4 1966171168
        %v1971 = vunpack.c.0.s8 %v1970
        %v1972 = vlaneseq
        %v1973 = vshrl.u32 %v1972, 7
        %v1974 = vsub.s32 %v1971, %v1973
        %v1975 = vrot.slane %v1961, %v1974
        %1978 = vst [vmem:[%s209 + $0xb] sm:$0x1] %v1968
        %1979 = vst [vmem:[%s209 + $0x1b] sm:$0x1] %v1975
        %v1980 = vld [vmem:[%s186 + $0x4] sm:$0x4]
        %v1981 = vld [vmem:[%s186 + $0xc] sm:$0x4]
        %s1982 = scalar_lea.vmem %s216, 768
        %v1983 = vld [vmem:[%s1982] sm:$0xf]
        %v1984 = vld [vmem:[%s1982 + $0x4] sm:$0xf]
        %v1985 = vld [vmem:[%s1982 + $0x8] sm:$0xf]
        %v1986 = vld [vmem:[%s1982 + $0xc] sm:$0xf]
        %v1987 = vld [vmem:[%s1982 + $0x10] sm:$0xf]
        %v1988 = vld [vmem:[%s1982 + $0x14] sm:$0xf]
        %v1989 = vld [vmem:[%s1982 + $0x18] sm:$0xf]
        %v1990 = vld [vmem:[%s1982 + $0x1c] sm:$0xf]
        %v1991 = vld [vmem:[%s1982 + $0x20] sm:$0xf]
        %v1992 = vld [vmem:[%s1982 + $0x24] sm:$0xf]
        %v1993 = vld [vmem:[%s1982 + $0x28] sm:$0xf]
        %v1994 = vld [vmem:[%s1982 + $0x2c] sm:$0xf]
        %v1995 = vld [vmem:[%s1982 + $0x30] sm:$0xf]
        %v1996 = vld [vmem:[%s1982 + $0x34] sm:$0xf]
        %v1997 = vld [vmem:[%s1982 + $0x38] sm:$0xf]
        %v1998 = vld [vmem:[%s1982 + $0x3c] sm:$0xf]
        %v2001 = vunpack.c.l.b16 %v1980
        %v2002 = vunpack.c.l.b16 %v1981
        %v2003 = vpack.c.b16 %v2001, %v2001
        %v2004 = vpack.c.b16 %v2002, %v2002
        %v2005 = vunpack.c.l.b16 %v2003
        %v2006 = vunpack.c.l.b16 %v2004
        %v2007 = vrot.slane %v2005, 4
        %v2008 = vrot.slane %v2006, 3
        %v2009 = vsel %vm247, %v2008, %v2007
        %v2010 = vpack.c.b16 %v2009, %v2009
        %v2028 = vunpack.c.l.b16 %v1983
        %v2029 = vunpack.c.l.b16 %v1984
        %v2030 = vunpack.c.l.b16 %v1985
        %v2031 = vunpack.c.l.b16 %v1986
        %v2032 = vunpack.c.l.b16 %v1987
        %v2033 = vunpack.c.l.b16 %v1988
        %v2034 = vunpack.c.l.b16 %v1989
        %v2035 = vunpack.c.l.b16 %v1990
        %v2036 = vunpack.c.l.b16 %v1991
        %v2037 = vunpack.c.l.b16 %v1992
        %v2038 = vunpack.c.l.b16 %v1993
        %v2039 = vunpack.c.l.b16 %v1994
        %v2040 = vunpack.c.l.b16 %v1995
        %v2041 = vunpack.c.l.b16 %v1996
        %v2042 = vunpack.c.l.b16 %v1997
        %v2043 = vunpack.c.l.b16 %v1998
        %v2044 = vpack.c.b16 %v2029, %v2028
        %v2045 = vpack.c.b16 %v2031, %v2030
        %v2046 = vpack.c.b16 %v2033, %v2032
        %v2047 = vpack.c.b16 %v2035, %v2034
        %v2048 = vpack.c.b16 %v2037, %v2036
        %v2049 = vpack.c.b16 %v2039, %v2038
        %v2050 = vpack.c.b16 %v2041, %v2040
        %v2051 = vpack.c.b16 %v2043, %v2042
        %2060 = vmatprep.subr.bf16.mxu0 0
        %2061 = vmatpush1.bf16.msra.mxu0 %v2044
        %2062 = vmatprep.subr.bf16.mxu0 0
        %2063 = vmatpush1.bf16.msra.mxu0 %v2045
        %2064 = vmatprep.subr.bf16.mxu0 0
        %2065 = vmatpush1.bf16.msra.mxu0 %v2046
        %2066 = vmatprep.subr.bf16.mxu0 0
        %2067 = vmatpush1.bf16.msra.mxu0 %v2047
        %2068 = vmatprep.subr.bf16.mxu0 0
        %2069 = vmatpush1.bf16.msra.mxu0 %v2048
        %2070 = vmatprep.subr.bf16.mxu0 0
        %2071 = vmatpush1.bf16.msra.mxu0 %v2049
        %2072 = vmatprep.subr.bf16.mxu0 0
        %2073 = vmatpush1.bf16.msra.mxu0 %v2050
        %2074 = vmatprep.subr.bf16.mxu0 0
        %2075 = vmatpush1.bf16.msra.mxu0 %v2051
        %2076 = vmatprep.subr.bf16.mxu0 0
        %2077 = vmatpush1.bf16.msra.mxu0 0
        %2078 = vmatprep.subr.bf16.mxu0 0
        %2079 = vmatpush1.bf16.msra.mxu0 0
        %2080 = vmatprep.subr.bf16.mxu0 0
        %2081 = vmatpush1.bf16.msra.mxu0 0
        %2082 = vmatprep.subr.bf16.mxu0 0
        %2083 = vmatpush1.bf16.msra.mxu0 0
        %2084 = vmatprep.subr.bf16.mxu0 0
        %2085 = vmatpush1.bf16.msra.mxu0 0
        %2086 = vmatprep.subr.bf16.mxu0 0
        %2087 = vmatpush1.bf16.msra.mxu0 0
        %2088 = vmatprep.subr.bf16.mxu0 0
        %2089 = vmatpush1.bf16.msra.mxu0 0
        %2090 = vmatprep.subr.bf16.mxu0 0
        %2091 = vmatpush1.bf16.msra.mxu0 0
        %2092 = vmatprep.mubr.bf16.mxu0 0
        %2093 = vmatmul.mubr.bf16.gmra.mrb[0].mxu0 %v2010
        %v2094 = vpop.f32.mrb[0].mxu0
        %v2095 = vadd.f32 0.0, %v2094
        %v2096 = vpop.f32.mrb[0].mxu0
        %v2097 = vpop.f32.mrb[0].mxu0
        %v2098 = vpop.f32.mrb[0].mxu0
        %2099 = vdwg.mxu0
        %v2102 = vunpack.c.l.s4 1966171168
        %v2103 = vunpack.c.0.s8 %v2102
        %v2104 = vlaneseq
        %v2105 = vshrl.u32 %v2104, 7
        %v2106 = vsub.s32 %v2103, %v2105
        %v2107 = vrot.slane %v2095, %v2106
        %v2108 = vcombine.high %v2107, %v2107
        %v2110 = vunpack.c.l.s4 1966171168
        %v2111 = vunpack.c.0.s8 %v2110
        %v2112 = vlaneseq
        %v2113 = vshrl.u32 %v2112, 7
        %v2114 = vsub.s32 %v2111, %v2113
        %v2115 = vrot.slane %v2107, %v2114
        %v2117 = vunpack.c.l.s4 1966171168
        %v2118 = vunpack.c.0.s8 %v2117
        %v2119 = vlaneseq
        %v2120 = vshrl.u32 %v2119, 7
        %v2121 = vsub.s32 %v2118, %v2120
        %v2122 = vrot.slane %v2108, %v2121
        %2125 = vst [vmem:[%s209 + $0xc] sm:$0x1] %v2115
        %2126 = vst [vmem:[%s209 + $0x1c] sm:$0x1] %v2122
        %v2127 = vld [vmem:[%s186 + $0x4] sm:$0x4]
        %v2128 = vld [vmem:[%s186 + $0xc] sm:$0x4]
        %s2129 = scalar_lea.vmem %s216, 832
        %v2130 = vld [vmem:[%s2129] sm:$0xf]
        %v2131 = vld [vmem:[%s2129 + $0x4] sm:$0xf]
        %v2132 = vld [vmem:[%s2129 + $0x8] sm:$0xf]
        %v2133 = vld [vmem:[%s2129 + $0xc] sm:$0xf]
        %v2134 = vld [vmem:[%s2129 + $0x10] sm:$0xf]
        %v2135 = vld [vmem:[%s2129 + $0x14] sm:$0xf]
        %v2136 = vld [vmem:[%s2129 + $0x18] sm:$0xf]
        %v2137 = vld [vmem:[%s2129 + $0x1c] sm:$0xf]
        %v2138 = vld [vmem:[%s2129 + $0x20] sm:$0xf]
        %v2139 = vld [vmem:[%s2129 + $0x24] sm:$0xf]
        %v2140 = vld [vmem:[%s2129 + $0x28] sm:$0xf]
        %v2141 = vld [vmem:[%s2129 + $0x2c] sm:$0xf]
        %v2142 = vld [vmem:[%s2129 + $0x30] sm:$0xf]
        %v2143 = vld [vmem:[%s2129 + $0x34] sm:$0xf]
        %v2144 = vld [vmem:[%s2129 + $0x38] sm:$0xf]
        %v2145 = vld [vmem:[%s2129 + $0x3c] sm:$0xf]
        %v2148 = vunpack.c.l.b16 %v2127
        %v2149 = vunpack.c.l.b16 %v2128
        %v2150 = vpack.c.b16 %v2148, %v2148
        %v2151 = vpack.c.b16 %v2149, %v2149
        %v2152 = vunpack.c.l.b16 %v2150
        %v2153 = vunpack.c.l.b16 %v2151
        %v2154 = vrot.slane %v2152, 5
        %v2155 = vrot.slane %v2153, 4
        %v2156 = vsel %vm247, %v2155, %v2154
        %v2157 = vpack.c.b16 %v2156, %v2156
        %v2175 = vunpack.c.l.b16 %v2130
        %v2176 = vunpack.c.l.b16 %v2131
        %v2177 = vunpack.c.l.b16 %v2132
        %v2178 = vunpack.c.l.b16 %v2133
        %v2179 = vunpack.c.l.b16 %v2134
        %v2180 = vunpack.c.l.b16 %v2135
        %v2181 = vunpack.c.l.b16 %v2136
        %v2182 = vunpack.c.l.b16 %v2137
        %v2183 = vunpack.c.l.b16 %v2138
        %v2184 = vunpack.c.l.b16 %v2139
        %v2185 = vunpack.c.l.b16 %v2140
        %v2186 = vunpack.c.l.b16 %v2141
        %v2187 = vunpack.c.l.b16 %v2142
        %v2188 = vunpack.c.l.b16 %v2143
        %v2189 = vunpack.c.l.b16 %v2144
        %v2190 = vunpack.c.l.b16 %v2145
        %v2191 = vpack.c.b16 %v2176, %v2175
        %v2192 = vpack.c.b16 %v2178, %v2177
        %v2193 = vpack.c.b16 %v2180, %v2179
        %v2194 = vpack.c.b16 %v2182, %v2181
        %v2195 = vpack.c.b16 %v2184, %v2183
        %v2196 = vpack.c.b16 %v2186, %v2185
        %v2197 = vpack.c.b16 %v2188, %v2187
        %v2198 = vpack.c.b16 %v2190, %v2189
        %2207 = vmatprep.subr.bf16.mxu0 0
        %2208 = vmatpush1.bf16.msra.mxu0 %v2191
        %2209 = vmatprep.subr.bf16.mxu0 0
        %2210 = vmatpush1.bf16.msra.mxu0 %v2192
        %2211 = vmatprep.subr.bf16.mxu0 0
        %2212 = vmatpush1.bf16.msra.mxu0 %v2193
        %2213 = vmatprep.subr.bf16.mxu0 0
        %2214 = vmatpush1.bf16.msra.mxu0 %v2194
        %2215 = vmatprep.subr.bf16.mxu0 0
        %2216 = vmatpush1.bf16.msra.mxu0 %v2195
        %2217 = vmatprep.subr.bf16.mxu0 0
        %2218 = vmatpush1.bf16.msra.mxu0 %v2196
        %2219 = vmatprep.subr.bf16.mxu0 0
        %2220 = vmatpush1.bf16.msra.mxu0 %v2197
        %2221 = vmatprep.subr.bf16.mxu0 0
        %2222 = vmatpush1.bf16.msra.mxu0 %v2198
        %2223 = vmatprep.subr.bf16.mxu0 0
        %2224 = vmatpush1.bf16.msra.mxu0 0
        %2225 = vmatprep.subr.bf16.mxu0 0
        %2226 = vmatpush1.bf16.msra.mxu0 0
        %2227 = vmatprep.subr.bf16.mxu0 0
        %2228 = vmatpush1.bf16.msra.mxu0 0
        %2229 = vmatprep.subr.bf16.mxu0 0
        %2230 = vmatpush1.bf16.msra.mxu0 0
        %2231 = vmatprep.subr.bf16.mxu0 0
        %2232 = vmatpush1.bf16.msra.mxu0 0
        %2233 = vmatprep.subr.bf16.mxu0 0
        %2234 = vmatpush1.bf16.msra.mxu0 0
        %2235 = vmatprep.subr.bf16.mxu0 0
        %2236 = vmatpush1.bf16.msra.mxu0 0
        %2237 = vmatprep.subr.bf16.mxu0 0
        %2238 = vmatpush1.bf16.msra.mxu0 0
        %2239 = vmatprep.mubr.bf16.mxu0 0
        %2240 = vmatmul.mubr.bf16.gmra.mrb[0].mxu0 %v2157
        %v2241 = vpop.f32.mrb[0].mxu0
        %v2242 = vadd.f32 0.0, %v2241
        %v2243 = vpop.f32.mrb[0].mxu0
        %v2244 = vpop.f32.mrb[0].mxu0
        %v2245 = vpop.f32.mrb[0].mxu0
        %2246 = vdwg.mxu0
        %v2249 = vunpack.c.l.s4 1966171168
        %v2250 = vunpack.c.0.s8 %v2249
        %v2251 = vlaneseq
        %v2252 = vshrl.u32 %v2251, 7
        %v2253 = vsub.s32 %v2250, %v2252
        %v2254 = vrot.slane %v2242, %v2253
        %v2255 = vcombine.high %v2254, %v2254
        %v2257 = vunpack.c.l.s4 1966171168
        %v2258 = vunpack.c.0.s8 %v2257
        %v2259 = vlaneseq
        %v2260 = vshrl.u32 %v2259, 7
        %v2261 = vsub.s32 %v2258, %v2260
        %v2262 = vrot.slane %v2254, %v2261
        %v2264 = vunpack.c.l.s4 1966171168
        %v2265 = vunpack.c.0.s8 %v2264
        %v2266 = vlaneseq
        %v2267 = vshrl.u32 %v2266, 7
        %v2268 = vsub.s32 %v2265, %v2267
        %v2269 = vrot.slane %v2255, %v2268
        %2272 = vst [vmem:[%s209 + $0xd] sm:$0x1] %v2262
        %2273 = vst [vmem:[%s209 + $0x1d] sm:$0x1] %v2269
        %v2274 = vld [vmem:[%s186 + $0x4] sm:$0x8]
        %v2275 = vld [vmem:[%s186 + $0xc] sm:$0x8]
        %s2276 = scalar_lea.vmem %s216, 896
        %v2277 = vld [vmem:[%s2276] sm:$0xf]
        %v2278 = vld [vmem:[%s2276 + $0x4] sm:$0xf]
        %v2279 = vld [vmem:[%s2276 + $0x8] sm:$0xf]
        %v2280 = vld [vmem:[%s2276 + $0xc] sm:$0xf]
        %v2281 = vld [vmem:[%s2276 + $0x10] sm:$0xf]
        %v2282 = vld [vmem:[%s2276 + $0x14] sm:$0xf]
        %v2283 = vld [vmem:[%s2276 + $0x18] sm:$0xf]
        %v2284 = vld [vmem:[%s2276 + $0x1c] sm:$0xf]
        %v2285 = vld [vmem:[%s2276 + $0x20] sm:$0xf]
        %v2286 = vld [vmem:[%s2276 + $0x24] sm:$0xf]
        %v2287 = vld [vmem:[%s2276 + $0x28] sm:$0xf]
        %v2288 = vld [vmem:[%s2276 + $0x2c] sm:$0xf]
        %v2289 = vld [vmem:[%s2276 + $0x30] sm:$0xf]
        %v2290 = vld [vmem:[%s2276 + $0x34] sm:$0xf]
        %v2291 = vld [vmem:[%s2276 + $0x38] sm:$0xf]
        %v2292 = vld [vmem:[%s2276 + $0x3c] sm:$0xf]
        %v2295 = vunpack.c.l.b16 %v2274
        %v2296 = vunpack.c.l.b16 %v2275
        %v2297 = vpack.c.b16 %v2295, %v2295
        %v2298 = vpack.c.b16 %v2296, %v2296
        %v2299 = vunpack.c.l.b16 %v2297
        %v2300 = vunpack.c.l.b16 %v2298
        %v2301 = vrot.slane %v2299, 6
        %v2302 = vrot.slane %v2300, 5
        %v2303 = vsel %vm247, %v2302, %v2301
        %v2304 = vpack.c.b16 %v2303, %v2303
        %v2322 = vunpack.c.l.b16 %v2277
        %v2323 = vunpack.c.l.b16 %v2278
        %v2324 = vunpack.c.l.b16 %v2279
        %v2325 = vunpack.c.l.b16 %v2280
        %v2326 = vunpack.c.l.b16 %v2281
        %v2327 = vunpack.c.l.b16 %v2282
        %v2328 = vunpack.c.l.b16 %v2283
        %v2329 = vunpack.c.l.b16 %v2284
        %v2330 = vunpack.c.l.b16 %v2285
        %v2331 = vunpack.c.l.b16 %v2286
        %v2332 = vunpack.c.l.b16 %v2287
        %v2333 = vunpack.c.l.b16 %v2288
        %v2334 = vunpack.c.l.b16 %v2289
        %v2335 = vunpack.c.l.b16 %v2290
        %v2336 = vunpack.c.l.b16 %v2291
        %v2337 = vunpack.c.l.b16 %v2292
        %v2338 = vpack.c.b16 %v2323, %v2322
        %v2339 = vpack.c.b16 %v2325, %v2324
        %v2340 = vpack.c.b16 %v2327, %v2326
        %v2341 = vpack.c.b16 %v2329, %v2328
        %v2342 = vpack.c.b16 %v2331, %v2330
        %v2343 = vpack.c.b16 %v2333, %v2332
        %v2344 = vpack.c.b16 %v2335, %v2334
        %v2345 = vpack.c.b16 %v2337, %v2336
        %2354 = vmatprep.subr.bf16.mxu0 0
        %2355 = vmatpush1.bf16.msra.mxu0 %v2338
        %2356 = vmatprep.subr.bf16.mxu0 0
        %2357 = vmatpush1.bf16.msra.mxu0 %v2339
        %2358 = vmatprep.subr.bf16.mxu0 0
        %2359 = vmatpush1.bf16.msra.mxu0 %v2340
        %2360 = vmatprep.subr.bf16.mxu0 0
        %2361 = vmatpush1.bf16.msra.mxu0 %v2341
        %2362 = vmatprep.subr.bf16.mxu0 0
        %2363 = vmatpush1.bf16.msra.mxu0 %v2342
        %2364 = vmatprep.subr.bf16.mxu0 0
        %2365 = vmatpush1.bf16.msra.mxu0 %v2343
        %2366 = vmatprep.subr.bf16.mxu0 0
        %2367 = vmatpush1.bf16.msra.mxu0 %v2344
        %2368 = vmatprep.subr.bf16.mxu0 0
        %2369 = vmatpush1.bf16.msra.mxu0 %v2345
        %2370 = vmatprep.subr.bf16.mxu0 0
        %2371 = vmatpush1.bf16.msra.mxu0 0
        %2372 = vmatprep.subr.bf16.mxu0 0
        %2373 = vmatpush1.bf16.msra.mxu0 0
        %2374 = vmatprep.subr.bf16.mxu0 0
        %2375 = vmatpush1.bf16.msra.mxu0 0
        %2376 = vmatprep.subr.bf16.mxu0 0
        %2377 = vmatpush1.bf16.msra.mxu0 0
        %2378 = vmatprep.subr.bf16.mxu0 0
        %2379 = vmatpush1.bf16.msra.mxu0 0
        %2380 = vmatprep.subr.bf16.mxu0 0
        %2381 = vmatpush1.bf16.msra.mxu0 0
        %2382 = vmatprep.subr.bf16.mxu0 0
        %2383 = vmatpush1.bf16.msra.mxu0 0
        %2384 = vmatprep.subr.bf16.mxu0 0
        %2385 = vmatpush1.bf16.msra.mxu0 0
        %2386 = vmatprep.mubr.bf16.mxu0 0
        %2387 = vmatmul.mubr.bf16.gmra.mrb[0].mxu0 %v2304
        %v2388 = vpop.f32.mrb[0].mxu0
        %v2389 = vadd.f32 0.0, %v2388
        %v2390 = vpop.f32.mrb[0].mxu0
        %v2391 = vpop.f32.mrb[0].mxu0
        %v2392 = vpop.f32.mrb[0].mxu0
        %2393 = vdwg.mxu0
        %v2396 = vunpack.c.l.s4 1966171168
        %v2397 = vunpack.c.0.s8 %v2396
        %v2398 = vlaneseq
        %v2399 = vshrl.u32 %v2398, 7
        %v2400 = vsub.s32 %v2397, %v2399
        %v2401 = vrot.slane %v2389, %v2400
        %v2402 = vcombine.high %v2401, %v2401
        %v2404 = vunpack.c.l.s4 1966171168
        %v2405 = vunpack.c.0.s8 %v2404
        %v2406 = vlaneseq
        %v2407 = vshrl.u32 %v2406, 7
        %v2408 = vsub.s32 %v2405, %v2407
        %v2409 = vrot.slane %v2401, %v2408
        %v2411 = vunpack.c.l.s4 1966171168
        %v2412 = vunpack.c.0.s8 %v2411
        %v2413 = vlaneseq
        %v2414 = vshrl.u32 %v2413, 7
        %v2415 = vsub.s32 %v2412, %v2414
        %v2416 = vrot.slane %v2402, %v2415
        %2419 = vst [vmem:[%s209 + $0xe] sm:$0x1] %v2409
        %2420 = vst [vmem:[%s209 + $0x1e] sm:$0x1] %v2416
        %v2421 = vld [vmem:[%s186 + $0x4] sm:$0x8]
        %v2422 = vld [vmem:[%s186 + $0xc] sm:$0x8]
        %s2423 = scalar_lea.vmem %s216, 960
        %v2424 = vld [vmem:[%s2423] sm:$0xf]
        %v2425 = vld [vmem:[%s2423 + $0x4] sm:$0xf]
        %v2426 = vld [vmem:[%s2423 + $0x8] sm:$0xf]
        %v2427 = vld [vmem:[%s2423 + $0xc] sm:$0xf]
        %v2428 = vld [vmem:[%s2423 + $0x10] sm:$0xf]
        %v2429 = vld [vmem:[%s2423 + $0x14] sm:$0xf]
        %v2430 = vld [vmem:[%s2423 + $0x18] sm:$0xf]
        %v2431 = vld [vmem:[%s2423 + $0x1c] sm:$0xf]
        %v2432 = vld [vmem:[%s2423 + $0x20] sm:$0xf]
        %v2433 = vld [vmem:[%s2423 + $0x24] sm:$0xf]
        %v2434 = vld [vmem:[%s2423 + $0x28] sm:$0xf]
        %v2435 = vld [vmem:[%s2423 + $0x2c] sm:$0xf]
        %v2436 = vld [vmem:[%s2423 + $0x30] sm:$0xf]
        %v2437 = vld [vmem:[%s2423 + $0x34] sm:$0xf]
        %v2438 = vld [vmem:[%s2423 + $0x38] sm:$0xf]
        %v2439 = vld [vmem:[%s2423 + $0x3c] sm:$0xf]
        %v2442 = vunpack.c.l.b16 %v2421
        %v2443 = vunpack.c.l.b16 %v2422
        %v2444 = vpack.c.b16 %v2442, %v2442
        %v2445 = vpack.c.b16 %v2443, %v2443
        %v2446 = vunpack.c.l.b16 %v2444
        %v2447 = vunpack.c.l.b16 %v2445
        %v2448 = vrot.slane %v2446, 7
        %v2449 = vrot.slane %v2447, 6
        %v2450 = vsel %vm247, %v2449, %v2448
        %v2451 = vpack.c.b16 %v2450, %v2450
        %v2469 = vunpack.c.l.b16 %v2424
        %v2470 = vunpack.c.l.b16 %v2425
        %v2471 = vunpack.c.l.b16 %v2426
        %v2472 = vunpack.c.l.b16 %v2427
        %v2473 = vunpack.c.l.b16 %v2428
        %v2474 = vunpack.c.l.b16 %v2429
        %v2475 = vunpack.c.l.b16 %v2430
        %v2476 = vunpack.c.l.b16 %v2431
        %v2477 = vunpack.c.l.b16 %v2432
        %v2478 = vunpack.c.l.b16 %v2433
        %v2479 = vunpack.c.l.b16 %v2434
        %v2480 = vunpack.c.l.b16 %v2435
        %v2481 = vunpack.c.l.b16 %v2436
        %v2482 = vunpack.c.l.b16 %v2437
        %v2483 = vunpack.c.l.b16 %v2438
        %v2484 = vunpack.c.l.b16 %v2439
        %v2485 = vpack.c.b16 %v2470, %v2469
        %v2486 = vpack.c.b16 %v2472, %v2471
        %v2487 = vpack.c.b16 %v2474, %v2473
        %v2488 = vpack.c.b16 %v2476, %v2475
        %v2489 = vpack.c.b16 %v2478, %v2477
        %v2490 = vpack.c.b16 %v2480, %v2479
        %v2491 = vpack.c.b16 %v2482, %v2481
        %v2492 = vpack.c.b16 %v2484, %v2483
        %2501 = vmatprep.subr.bf16.mxu0 0
        %2502 = vmatpush1.bf16.msra.mxu0 %v2485
        %2503 = vmatprep.subr.bf16.mxu0 0
        %2504 = vmatpush1.bf16.msra.mxu0 %v2486
        %2505 = vmatprep.subr.bf16.mxu0 0
        %2506 = vmatpush1.bf16.msra.mxu0 %v2487
        %2507 = vmatprep.subr.bf16.mxu0 0
        %2508 = vmatpush1.bf16.msra.mxu0 %v2488
        %2509 = vmatprep.subr.bf16.mxu0 0
        %2510 = vmatpush1.bf16.msra.mxu0 %v2489
        %2511 = vmatprep.subr.bf16.mxu0 0
        %2512 = vmatpush1.bf16.msra.mxu0 %v2490
        %2513 = vmatprep.subr.bf16.mxu0 0
        %2514 = vmatpush1.bf16.msra.mxu0 %v2491
        %2515 = vmatprep.subr.bf16.mxu0 0
        %2516 = vmatpush1.bf16.msra.mxu0 %v2492
        %2517 = vmatprep.subr.bf16.mxu0 0
        %2518 = vmatpush1.bf16.msra.mxu0 0
        %2519 = vmatprep.subr.bf16.mxu0 0
        %2520 = vmatpush1.bf16.msra.mxu0 0
        %2521 = vmatprep.subr.bf16.mxu0 0
        %2522 = vmatpush1.bf16.msra.mxu0 0
        %2523 = vmatprep.subr.bf16.mxu0 0
        %2524 = vmatpush1.bf16.msra.mxu0 0
        %2525 = vmatprep.subr.bf16.mxu0 0
        %2526 = vmatpush1.bf16.msra.mxu0 0
        %2527 = vmatprep.subr.bf16.mxu0 0
        %2528 = vmatpush1.bf16.msra.mxu0 0
        %2529 = vmatprep.subr.bf16.mxu0 0
        %2530 = vmatpush1.bf16.msra.mxu0 0
        %2531 = vmatprep.subr.bf16.mxu0 0
        %2532 = vmatpush1.bf16.msra.mxu0 0
        %2533 = vmatprep.mubr.bf16.mxu0 0
        %2534 = vmatmul.mubr.bf16.gmra.mrb[0].mxu0 %v2451
        %v2535 = vpop.f32.mrb[0].mxu0
        %v2536 = vadd.f32 0.0, %v2535
        %v2537 = vpop.f32.mrb[0].mxu0
        %v2538 = vpop.f32.mrb[0].mxu0
        %v2539 = vpop.f32.mrb[0].mxu0
        %2540 = vdwg.mxu0
        %v2543 = vunpack.c.l.s4 1966171168
        %v2544 = vunpack.c.0.s8 %v2543
        %v2545 = vlaneseq
        %v2546 = vshrl.u32 %v2545, 7
        %v2547 = vsub.s32 %v2544, %v2546
        %v2548 = vrot.slane %v2536, %v2547
        %v2549 = vcombine.high %v2548, %v2548
        %v2551 = vunpack.c.l.s4 1966171168
        %v2552 = vunpack.c.0.s8 %v2551
        %v2553 = vlaneseq
        %v2554 = vshrl.u32 %v2553, 7
        %v2555 = vsub.s32 %v2552, %v2554
        %v2556 = vrot.slane %v2548, %v2555
        %v2558 = vunpack.c.l.s4 1966171168
        %v2559 = vunpack.c.0.s8 %v2558
        %v2560 = vlaneseq
        %v2561 = vshrl.u32 %v2560, 7
        %v2562 = vsub.s32 %v2559, %v2561
        %v2563 = vrot.slane %v2549, %v2562
        %2566 = vst [vmem:[%s209 + $0xf] sm:$0x1] %v2556
        %2567 = vst [vmem:[%s209 + $0x1f] sm:$0x1] %v2563
        %s2568 = sand.u32 %s73, 1
        %s2569 = sand.u32 %s73, 1
        %s2570 = smul.addr %s2569, 32
        %s2571 = scalar_lea.vmem [#allocation3], %s2570
        // Predicated region
        $region70: #{fno2d.11} parent=64 // pred_check
          %p2572 = pneg %p83
        $region71: #{fno2d.11} parent=64 // pred_check_branch
          %2574 = sbr.rel (%p2572) target = $region73
        $region72: #{fno2d.11} parent=64 // pred_region
          %s2575 = smul.u32 2, %s13
          %s2576 = smul.addr %s2575, 8
          %s2577 = scalar_lea.vmem %s2, %s2576
          // Predicated region
          $region74: #{fno2d.11} parent=72 // pred_check
            _
          $region75: #{fno2d.11} parent=72 // pred_check_branch
            %2579 = sbr.rel (0) target = $region77
          $region76: #{fno2d.11} parent=72 // pred_region
            // Predicated region
            $region78: #{fno2d.11} parent=76 // pred_check
              _
            $region79: #{fno2d.11} parent=76 // pred_check_branch
              %2581 = sbr.rel (0) target = $region81
            $region80: #{fno2d.11} parent=76 // pred_region
              // Predicated region
              $region93: #{fno2d.11} parent=80 // pred_check
                _
              $region94: #{fno2d.11} parent=80 // pred_check_branch
                %2602 = sbr.rel (0) target = $region96
              $region95: #{fno2d.11} parent=80 // pred_region
                loop: start=0, step=1, limit=1
                $region97: #{fno2d.11} parent=95 // loop_pre_header
                  _
                $region98: #{fno2d.11} parent=95 // loop_header
                  %s2604 = sphi 0, %s2608
                  %p2605 = scmp.ge.s32.totalorder %s2604, 1
                  %s2609 = sphi %s2571, %s2571
                  %s2610 = sphi %s2577, %s2577
                $region99: #{fno2d.11} parent=95 // loop_header_branch
                  %2607 = sbr.rel (%p2605) target = $region103
                $region100: #{fno2d.11} parent=95 // loop_body
                  %v2611 = vld [vmem:[%s2609] sm:$0xff]
                  %2612 = vst [vmem:[%s2610] sm:$0xff] %v2611
                  %v2613 = vld [vmem:[%s2609 + $0x8] sm:$0xff]
                  %2614 = vst [vmem:[%s2610 + $0x8] sm:$0xff] %v2613
                  %v2615 = vld [vmem:[%s2609 + $0x10] sm:$0xff]
                  %2616 = vst [vmem:[%s2610 + $0x20] sm:$0xff] %v2615
                  %v2617 = vld [vmem:[%s2609 + $0x18] sm:$0xff]
                  %2618 = vst [vmem:[%s2610 + $0x28] sm:$0xff] %v2617
                $region101: #{fno2d.11} parent=95 // loop_footer
                  %s2608 = sadd.s32 1, %s2604
                $region102: #{fno2d.11} parent=95 // loop_footer_branch
                  %2603 = sbr.rel target = $region98
                $region103: #{fno2d.11} parent=95 // loop_exit
                  _
              $region96: #{fno2d.11} parent=80 // pred_fallthru
                _
              // Predicated region
              $region104: #{fno2d.11} parent=80 // pred_check
                _
              $region105: #{fno2d.11} parent=80 // pred_check_branch
                %2620 = sbr.rel target = $region107
              $region106: #{fno2d.11} parent=80 // pred_region
                _
              $region107: #{fno2d.11} parent=80 // pred_fallthru
                _
            $region81: #{fno2d.11} parent=76 // pred_fallthru
              _
            // Predicated region
            $region82: #{fno2d.11} parent=76 // pred_check
              _
            $region83: #{fno2d.11} parent=76 // pred_check_branch
              %2583 = sbr.rel target = $region85
            $region84: #{fno2d.11} parent=76 // pred_region
              loop: start=0, step=1, limit=1
              $region86: #{fno2d.11} parent=84 // loop_pre_header
                _
              $region87: #{fno2d.11} parent=84 // loop_header
                %s2586 = sphi 0, %s2590
                %p2587 = scmp.ge.s32.totalorder %s2586, 1
                %s2591 = sphi %s2571, %s2571
                %s2592 = sphi %s2577, %s2577
              $region88: #{fno2d.11} parent=84 // loop_header_branch
                %2589 = sbr.rel (%p2587) target = $region92
              $region89: #{fno2d.11} parent=84 // loop_body
                %v2593 = vld [vmem:[%s2591] sm:$0xff]
                %2594 = vst [vmem:[%s2592] sm:$0xff] %v2593
                %v2595 = vld [vmem:[%s2591 + $0x8] sm:$0xff]
                %2596 = vst [vmem:[%s2592 + $0x8] sm:$0xff] %v2595
                %v2597 = vld [vmem:[%s2591 + $0x10] sm:$0xff]
                %2598 = vst [vmem:[%s2592 + $0x20] sm:$0xff] %v2597
                %v2599 = vld [vmem:[%s2591 + $0x18] sm:$0xff]
                %2600 = vst [vmem:[%s2592 + $0x28] sm:$0xff] %v2599
              $region90: #{fno2d.11} parent=84 // loop_footer
                %s2590 = sadd.s32 1, %s2586
              $region91: #{fno2d.11} parent=84 // loop_footer_branch
                %2585 = sbr.rel target = $region87
              $region92: #{fno2d.11} parent=84 // loop_exit
                _
            $region85: #{fno2d.11} parent=76 // pred_fallthru
              _
          $region77: #{fno2d.11} parent=72 // pred_fallthru
            _
          %2621 = vnop
        $region73: #{fno2d.11} parent=64 // pred_fallthru
          _
      $region65: #{fno2d.11} parent=5 // pred_fallthru
        _
      %p2622 = scmp.le.s32.totalorder 2, %s8
      // Predicated region
      $region108: #{fno2d.11} parent=5 // pred_check
        %p2623 = pneg %p2622
      $region109: #{fno2d.11} parent=5 // pred_check_branch
        %2625 = sbr.rel (%p2623) target = $region111
      $region110: #{fno2d.11} parent=5 // pred_region
        %s2626 = ssub.s32 %s8, 2
        // Predicated region
        $region112: #{fno2d.11} parent=110 // pred_check
          %p2627 = pneg %p89
        $region113: #{fno2d.11} parent=110 // pred_check_branch
          %2629 = sbr.rel (%p2627) target = $region115
        $region114: #{fno2d.11} parent=110 // pred_region
          %s2630 = sand.u32 %s74, 1
          %s2631 = sand.u32 %s74, 1
          %s2632 = smul.addr %s2631, 32
          %s2633 = scalar_lea.vmem [#allocation3], %s2632
        $region115: #{fno2d.11} parent=110 // pred_fallthru
          _
      $region111: #{fno2d.11} parent=5 // pred_fallthru
        _
    $region6: #{fno2d.11} parent=1 // loop_footer
      %s12 = sadd.s32 1, %s8
    $region7: #{fno2d.11} parent=1 // loop_footer_branch
      %7 = sbr.rel target = $region3
    $region8: #{fno2d.11} parent=1 // loop_exit
      _

// kernel: fno2d.12
$region0: #{fno2d.12}
  #allocation0 [shape = 'u32[]', space=smem, size = 0x4, offset = 0x4, fixed_abs, tag = 'smem constant byte address 0x4 - core index']
  #allocation1 [shape = 'u32[144,128]{1,0:T(1,128)}', space=vmem, size = 0x12000, scoped, tag = 'internal scratch']
  %s0 = inlined_call_operand.vmem [shape: bf16[256,128], index: 0, kind: input, shape index: {}]
  %s1 = inlined_call_operand.vmem [shape: bf16[128,128], index: 1, kind: input, shape index: {}]
  %s2 = inlined_call_operand.vmem [shape: f32[1,128], index: 2, kind: input, shape index: {}]
  %s3 = inlined_call_operand.vmem [shape: bf16[256,128], index: 3, kind: input, shape index: {}]
  %s4 = inlined_call_operand.vmem [shape: bf16[256,128], index: 4, kind: output, shape index: {}]
  %s5 = sld [smem:[#allocation0]]
  $region49: #{fno2d.12} parent=0
    _
  %s7 = ssub.s32 1, %s5
  %s8 = scalar_select 0, %s7, %s5
  loop: start=0, step=1, limit=4
  $region2: #{fno2d.12} parent=0 // loop_pre_header
    _
  $region3: #{fno2d.12} parent=0 // loop_header
    %s10 = sphi 0, %s14
    %p11 = scmp.ge.s32.totalorder %s10, 4
    %s20 = sphi 0, %s22
    %s23 = sphi 0, %s20
    %s24 = sphi 0, %s23
    %s40 = sphi 0, %s24
    %s44 = sphi 0, %s44
    %s46 = sphi 0, %s44
    %s47 = sphi 0, %s46
    %s61 = sphi 0, %s47
    %s65 = sphi 0, %s65
    %s67 = sphi 0, %s65
    %s68 = sphi 0, %s67
    %s82 = sphi 0, %s68
    %s88 = sphi 0, %s90
    %s91 = sphi 0, %s88
    %s92 = sphi 0, %s91
    %s108 = sphi 0, %s92
    %s114 = sphi 0, %s116
    %s117 = sphi 0, %s114
    %s118 = sphi 0, %s117
    %s134 = sphi 0, %s118
  $region4: #{fno2d.12} parent=0 // loop_header_branch
    %13 = sbr.rel (%p11) target = $region8
  $region5: #{fno2d.12} parent=0 // loop_body
    %s15 = ssub.s32 %s10, 1
    %s16 = ssub.s32 %s10, 2
    %s17 = sadd.s32 %s10, 1
    %s18 = ssub.s32 %s10, %s17
    %p19 = scmp.eq.s32.totalorder %s18, 0
    %s21 = sadd.s32 %s20, 1
    %s22 = scalar_select %p19, %s20, %s21
    %p25 = pneg %p19
    %p26 = scmp.eq.s32.totalorder %s10, 1
    %p27 = por %p25, %p26
    %p28 = scmp.ne.s32.totalorder %s20, %s23
    %p29 = scmp.eq.s32.totalorder %s10, 0
    %p30 = por %p28, %p29
    %p31 = scmp.ne.s32.totalorder %s20, %s23
    %p32 = scmp.eq.s32.totalorder %s15, 1
    %p33 = por %p31, %p32
    %p34 = scmp.ne.s32.totalorder %s23, %s24
    %p35 = scmp.eq.s32.totalorder %s15, 0
    %p36 = por %p34, %p35
    %p37 = scmp.ne.s32.totalorder %s23, %s24
    %p38 = scmp.eq.s32.totalorder %s16, 1
    %p39 = por %p37, %p38
    %p41 = scmp.ne.s32.totalorder %s24, %s40
    %p42 = scmp.eq.s32.totalorder %s16, 0
    %p43 = por %p41, %p42
    %s45 = sadd.s32 %s44, 1
    %p48 = scmp.eq.s32.totalorder %s10, 1
    %p49 = scmp.ne.s32.totalorder %s44, %s46
    %p50 = scmp.eq.s32.totalorder %s10, 0
    %p51 = por %p49, %p50
    %p52 = scmp.ne.s32.totalorder %s44, %s46
    %p53 = scmp.eq.s32.totalorder %s15, 1
    %p54 = por %p52, %p53
    %p55 = scmp.ne.s32.totalorder %s46, %s47
    %p56 = scmp.eq.s32.totalorder %s15, 0
    %p57 = por %p55, %p56
    %p58 = scmp.ne.s32.totalorder %s46, %s47
    %p59 = scmp.eq.s32.totalorder %s16, 1
    %p60 = por %p58, %p59
    %p62 = scmp.ne.s32.totalorder %s47, %s61
    %p63 = scmp.eq.s32.totalorder %s16, 0
    %p64 = por %p62, %p63
    %s66 = sadd.s32 %s65, 1
    %p69 = scmp.eq.s32.totalorder %s10, 1
    %p70 = scmp.ne.s32.totalorder %s65, %s67
    %p71 = scmp.eq.s32.totalorder %s10, 0
    %p72 = por %p70, %p71
    %p73 = scmp.ne.s32.totalorder %s65, %s67
    %p74 = scmp.eq.s32.totalorder %s15, 1
    %p75 = por %p73, %p74
    %p76 = scmp.ne.s32.totalorder %s67, %s68
    %p77 = scmp.eq.s32.totalorder %s15, 0
    %p78 = por %p76, %p77
    %p79 = scmp.ne.s32.totalorder %s67, %s68
    %p80 = scmp.eq.s32.totalorder %s16, 1
    %p81 = por %p79, %p80
    %p83 = scmp.ne.s32.totalorder %s68, %s82
    %p84 = scmp.eq.s32.totalorder %s16, 0
    %p85 = por %p83, %p84
    %s86 = ssub.s32 %s10, %s17
    %p87 = scmp.eq.s32.totalorder %s86, 0
    %s89 = sadd.s32 %s88, 1
    %s90 = scalar_select %p87, %s88, %s89
    %p93 = pneg %p87
    %p94 = scmp.eq.s32.totalorder %s10, 1
    %p95 = por %p93, %p94
    %p96 = scmp.ne.s32.totalorder %s88, %s91
    %p97 = scmp.eq.s32.totalorder %s10, 0
    %p98 = por %p96, %p97
    %p99 = scmp.ne.s32.totalorder %s88, %s91
    %p100 = scmp.eq.s32.totalorder %s15, 1
    %p101 = por %p99, %p100
    %p102 = scmp.ne.s32.totalorder %s91, %s92
    %p103 = scmp.eq.s32.totalorder %s15, 0
    %p104 = por %p102, %p103
    %p105 = scmp.ne.s32.totalorder %s91, %s92
    %p106 = scmp.eq.s32.totalorder %s16, 1
    %p107 = por %p105, %p106
    %p109 = scmp.ne.s32.totalorder %s92, %s108
    %p110 = scmp.eq.s32.totalorder %s16, 0
    %p111 = por %p109, %p110
    %s112 = ssub.s32 %s10, %s17
    %p113 = scmp.eq.s32.totalorder %s112, 0
    %s115 = sadd.s32 %s114, 1
    %s116 = scalar_select %p113, %s114, %s115
    %p119 = pneg %p113
    %p120 = scmp.eq.s32.totalorder %s10, 1
    %p121 = por %p119, %p120
    %p122 = scmp.ne.s32.totalorder %s114, %s117
    %p123 = scmp.eq.s32.totalorder %s10, 0
    %p124 = por %p122, %p123
    %p125 = scmp.ne.s32.totalorder %s114, %s117
    %p126 = scmp.eq.s32.totalorder %s15, 1
    %p127 = por %p125, %p126
    %p128 = scmp.ne.s32.totalorder %s117, %s118
    %p129 = scmp.eq.s32.totalorder %s15, 0
    %p130 = por %p128, %p129
    %p131 = scmp.ne.s32.totalorder %s117, %s118
    %p132 = scmp.eq.s32.totalorder %s16, 1
    %p133 = por %p131, %p132
    %p135 = scmp.ne.s32.totalorder %s118, %s134
    %p136 = scmp.eq.s32.totalorder %s16, 0
    %p137 = por %p135, %p136
    %p138 = scmp.le.s32.totalorder 1, %s10
    %p139 = scmp.lt.s32.totalorder %s10, 3
    %p140 = pnand %p138, %p139
    %p141 = pneg %p140
    // Predicated region
    $region9: #{fno2d.12} parent=5 // pred_check
      _
    $region10: #{fno2d.12} parent=5 // pred_check_branch
      %143 = sbr.rel (%p140) target = $region12
    $region11: #{fno2d.12} parent=5 // pred_region
      %s144 = ssub.s32 %s10, 1
      // Predicated region
      $region13: #{fno2d.12} parent=11 // pred_check
        %p145 = pneg %p57
      $region14: #{fno2d.12} parent=11 // pred_check_branch
        %147 = sbr.rel (%p145) target = $region16
      $region15: #{fno2d.12} parent=11 // pred_region
        _
      $region16: #{fno2d.12} parent=11 // pred_fallthru
        _
      // Predicated region
      $region17: #{fno2d.12} parent=11 // pred_check
        %p148 = pneg %p78
      $region18: #{fno2d.12} parent=11 // pred_check_branch
        %150 = sbr.rel (%p148) target = $region20
      $region19: #{fno2d.12} parent=11 // pred_region
        _
      $region20: #{fno2d.12} parent=11 // pred_fallthru
        _
    $region12: #{fno2d.12} parent=5 // pred_fallthru
      _
    %p151 = scmp.lt.s32.totalorder %s10, 2
    // Predicated region
    $region21: #{fno2d.12} parent=5 // pred_check
      %p152 = pneg %p151
    $region22: #{fno2d.12} parent=5 // pred_check_branch
      %154 = sbr.rel (%p152) target = $region24
    $region23: #{fno2d.12} parent=5 // pred_region
      // Predicated region
      $region25: #{fno2d.12} parent=23 // pred_check
        %p155 = pneg %p30
      $region26: #{fno2d.12} parent=23 // pred_check_branch
        %157 = sbr.rel (%p155) target = $region28
      $region27: #{fno2d.12} parent=23 // pred_region
        %s158 = smul.u32 16, %s10
        %p159 = scmp.lt.s32.totalorder %s158, 31
        %s160 = scalar_select %p159, %s158, 31
        %s161 = smul.addr %s160, 4
        %s162 = scalar_lea.vmem %s0, %s161
        %s163 = smul.u32 16, %s10
      $region28: #{fno2d.12} parent=23 // pred_fallthru
        _
      // Predicated region
      $region29: #{fno2d.12} parent=23 // pred_check
        %p164 = pneg %p98
      $region30: #{fno2d.12} parent=23 // pred_check_branch
        %166 = sbr.rel (%p164) target = $region32
      $region31: #{fno2d.12} parent=23 // pred_region
        %s167 = smul.u32 16, %s10
        %p168 = scmp.lt.s32.totalorder %s167, 31
        %s169 = scalar_select %p168, %s167, 31
        %s170 = smul.addr %s169, 4
        %s171 = scalar_lea.vmem %s3, %s170
        %s172 = smul.u32 16, %s10
      $region32: #{fno2d.12} parent=23 // pred_fallthru
        _
    $region24: #{fno2d.12} parent=5 // pred_fallthru
      _
    %p173 = scmp.le.s32.totalorder 1, %s10
    %p174 = scmp.lt.s32.totalorder %s10, 3
    %p175 = pnand %p173, %p174
    %p176 = pneg %p175
    // Predicated region
    $region33: #{fno2d.12} parent=5 // pred_check
      _
    $region34: #{fno2d.12} parent=5 // pred_check_branch
      %178 = sbr.rel (%p175) target = $region36
    $region35: #{fno2d.12} parent=5 // pred_region
      %s179 = ssub.s32 %s10, 1
      %s180 = smul.u32 16, %s15
      %p181 = scmp.lt.s32.totalorder %s180, 31
      %s182 = scalar_select %p181, %s180, 31
      %s183 = smul.addr %s182, 4
      %s184 = scalar_lea.vmem %s0, %s183
      %p185 = pneg %p36
      %p186 = pneg %p33
      %p187 = pneg %p57
      %p188 = pneg %p54
      %p189 = pneg %p78
      %p190 = pneg %p75
      %s191 = smul.u32 16, %s15
      %p192 = scmp.lt.s32.totalorder %s191, 31
      %s193 = scalar_select %p192, %s191, 31
      %s194 = smul.addr %s193, 4
      %s195 = scalar_lea.vmem %s3, %s194
      %p196 = pneg %p104
      %p197 = pneg %p101
      %p198 = pneg %p130
      %p199 = pneg %p127
      %s200 = smul.u32 16, %s15
      %p201 = scmp.lt.s32.totalorder %s200, 31
      %s202 = scalar_select %p201, %s200, 31
      %s203 = smul.addr %s202, 4
      %s204 = scalar_lea.vmem %s4, %s203
      %s205 = smul.u32 16, %s15
      %p206 = scmp.lt.s32.totalorder %s205, 31
      %s207 = scalar_select %p206, %s205, 31
      %s208 = smul.addr %s207, 4
      %s209 = scalar_lea.vmem %s0, %s208
      %s210 = smul.u32 16, %s15
      %s211 = smul.u32 16, %s15
      %p212 = scmp.lt.s32.totalorder %s211, 31
      %s213 = scalar_select %p212, %s211, 31
      %s214 = smul.addr %s213, 4
      %s215 = scalar_lea.vmem %s3, %s214
      %s216 = smul.u32 16, %s15
      %s217 = smul.u32 16, %s15
      %p218 = scmp.lt.s32.totalorder %s217, 31
      %s219 = scalar_select %p218, %s217, 31
      %s220 = smul.addr %s219, 4
      %s221 = scalar_lea.vmem %s4, %s220
      %s222 = smul.u32 16, %s15
      %v224 = vld [vmem:[%s209] sm:$0xf]
      %v225 = vld [vmem:[%s209 + $0x4] sm:$0xf]
      %v226 = vld [vmem:[%s209 + $0x8] sm:$0xf]
      %v227 = vld [vmem:[%s209 + $0xc] sm:$0xf]
      %v228 = vld [vmem:[%s209 + $0x10] sm:$0xf]
      %v229 = vld [vmem:[%s209 + $0x14] sm:$0xf]
      %v230 = vld [vmem:[%s209 + $0x18] sm:$0xf]
      %v231 = vld [vmem:[%s209 + $0x1c] sm:$0xf]
      %v232 = vld [vmem:[%s209 + $0x20] sm:$0xf]
      %v233 = vld [vmem:[%s209 + $0x24] sm:$0xf]
      %v234 = vld [vmem:[%s209 + $0x28] sm:$0xf]
      %v235 = vld [vmem:[%s209 + $0x2c] sm:$0xf]
      %v236 = vld [vmem:[%s209 + $0x30] sm:$0xf]
      %v237 = vld [vmem:[%s209 + $0x34] sm:$0xf]
      %v238 = vld [vmem:[%s209 + $0x38] sm:$0xf]
      %v239 = vld [vmem:[%s209 + $0x3c] sm:$0xf]
      %v240 = vld [vmem:[%s1] sm:$0xf]
      %v241 = vld [vmem:[%s1 + $0x4] sm:$0xf]
      %v242 = vld [vmem:[%s1 + $0x8] sm:$0xf]
      %v243 = vld [vmem:[%s1 + $0xc] sm:$0xf]
      %v244 = vld [vmem:[%s1 + $0x10] sm:$0xf]
      %v245 = vld [vmem:[%s1 + $0x14] sm:$0xf]
      %v246 = vld [vmem:[%s1 + $0x18] sm:$0xf]
      %v247 = vld [vmem:[%s1 + $0x1c] sm:$0xf]
      %v248 = vld [vmem:[%s1 + $0x20] sm:$0xf]
      %v249 = vld [vmem:[%s1 + $0x24] sm:$0xf]
      %v250 = vld [vmem:[%s1 + $0x28] sm:$0xf]
      %v251 = vld [vmem:[%s1 + $0x2c] sm:$0xf]
      %v252 = vld [vmem:[%s1 + $0x30] sm:$0xf]
      %v253 = vld [vmem:[%s1 + $0x34] sm:$0xf]
      %v254 = vld [vmem:[%s1 + $0x38] sm:$0xf]
      %v255 = vld [vmem:[%s1 + $0x3c] sm:$0xf]
      %v256 = vld [vmem:[%s2] sm:$0x1]
      %v258 = vlaneseq
      %v259 = vshrl.u32 %v258, 7
      %v260 = vsub.s32 0, %v259
      %v261 = vrot.slane %v256, %v260
      %v279 = vunpack.c.l.b16 %v224
      %v280 = vunpack.c.l.b16 %v225
      %v281 = vunpack.c.l.b16 %v226
      %v282 = vunpack.c.l.b16 %v227
      %v283 = vunpack.c.l.b16 %v228
      %v284 = vunpack.c.l.b16 %v229
      %v285 = vunpack.c.l.b16 %v230
      %v286 = vunpack.c.l.b16 %v231
      %v287 = vunpack.c.l.b16 %v232
      %v288 = vunpack.c.l.b16 %v233
      %v289 = vunpack.c.l.b16 %v234
      %v290 = vunpack.c.l.b16 %v235
      %v291 = vunpack.c.l.b16 %v236
      %v292 = vunpack.c.l.b16 %v237
      %v293 = vunpack.c.l.b16 %v238
      %v294 = vunpack.c.l.b16 %v239
      %v295 = vpack.c.b16 %v280, %v279
      %v296 = vpack.c.b16 %v282, %v281
      %v297 = vpack.c.b16 %v284, %v283
      %v298 = vpack.c.b16 %v286, %v285
      %v299 = vpack.c.b16 %v288, %v287
      %v300 = vpack.c.b16 %v290, %v289
      %v301 = vpack.c.b16 %v292, %v291
      %v302 = vpack.c.b16 %v294, %v293
      %v327 = vunpack.c.l.b16 %v240
      %v328 = vunpack.c.l.b16 %v241
      %v329 = vunpack.c.l.b16 %v242
      %v330 = vunpack.c.l.b16 %v243
      %v331 = vunpack.c.l.b16 %v244
      %v332 = vunpack.c.l.b16 %v245
      %v333 = vunpack.c.l.b16 %v246
      %v334 = vunpack.c.l.b16 %v247
      %v335 = vunpack.c.l.b16 %v248
      %v336 = vunpack.c.l.b16 %v249
      %v337 = vunpack.c.l.b16 %v250
      %v338 = vunpack.c.l.b16 %v251
      %v339 = vunpack.c.l.b16 %v252
      %v340 = vunpack.c.l.b16 %v253
      %v341 = vunpack.c.l.b16 %v254
      %v342 = vunpack.c.l.b16 %v255
      %v343 = vpack.c.b16 %v328, %v327
      %v344 = vpack.c.b16 %v330, %v329
      %v345 = vpack.c.b16 %v332, %v331
      %v346 = vpack.c.b16 %v334, %v333
      %v347 = vpack.c.b16 %v336, %v335
      %v348 = vpack.c.b16 %v338, %v337
      %v349 = vpack.c.b16 %v340, %v339
      %v350 = vpack.c.b16 %v342, %v341
      %359 = vmatprep.subr.bf16.mxu0 0
      %360 = vmatpush1.bf16.msra.mxu0 %v343
      %361 = vmatprep.subr.bf16.mxu0 0
      %362 = vmatpush1.bf16.msra.mxu0 %v344
      %363 = vmatprep.subr.bf16.mxu0 0
      %364 = vmatpush1.bf16.msra.mxu0 %v345
      %365 = vmatprep.subr.bf16.mxu0 0
      %366 = vmatpush1.bf16.msra.mxu0 %v346
      %367 = vmatprep.subr.bf16.mxu0 0
      %368 = vmatpush1.bf16.msra.mxu0 %v347
      %369 = vmatprep.subr.bf16.mxu0 0
      %370 = vmatpush1.bf16.msra.mxu0 %v348
      %371 = vmatprep.subr.bf16.mxu0 0
      %372 = vmatpush1.bf16.msra.mxu0 %v349
      %373 = vmatprep.subr.bf16.mxu0 0
      %374 = vmatpush1.bf16.msra.mxu0 %v350
      %375 = vmatprep.subr.bf16.mxu0 0
      %376 = vmatpush1.bf16.msra.mxu0 0
      %377 = vmatprep.subr.bf16.mxu0 0
      %378 = vmatpush1.bf16.msra.mxu0 0
      %379 = vmatprep.subr.bf16.mxu0 0
      %380 = vmatpush1.bf16.msra.mxu0 0
      %381 = vmatprep.subr.bf16.mxu0 0
      %382 = vmatpush1.bf16.msra.mxu0 0
      %383 = vmatprep.subr.bf16.mxu0 0
      %384 = vmatpush1.bf16.msra.mxu0 0
      %385 = vmatprep.subr.bf16.mxu0 0
      %386 = vmatpush1.bf16.msra.mxu0 0
      %387 = vmatprep.subr.bf16.mxu0 0
      %388 = vmatpush1.bf16.msra.mxu0 0
      %389 = vmatprep.subr.bf16.mxu0 0
      %390 = vmatpush1.bf16.msra.mxu0 0
      %391 = vmatprep.mubr.bf16.mxu0 0
      %392 = vmatmul.mubr.bf16.gmra.mrb[0].mxu0 %v295
      %v393 = vpop.f32.mrb[0].mxu0
      %v394 = vadd.f32 %v261, %v393
      %v395 = vpop.f32.mrb[0].mxu0
      %v396 = vpop.f32.mrb[0].mxu0
      %v397 = vadd.f32 %v261, %v396
      %v398 = vpop.f32.mrb[0].mxu0
      %399 = vmatprep.mubr.bf16.mxu0 0
      %400 = vmatmul.mubr.bf16.gmra.mrb[0].mxu0 %v296
      %v401 = vpop.f32.mrb[0].mxu0
      %v402 = vadd.f32 %v261, %v401
      %v403 = vpop.f32.mrb[0].mxu0
      %v404 = vpop.f32.mrb[0].mxu0
      %v405 = vadd.f32 %v261, %v404
      %v406 = vpop.f32.mrb[0].mxu0
      %407 = vmatprep.mubr.bf16.mxu0 0
      %408 = vmatmul.mubr.bf16.gmra.mrb[0].mxu0 %v297
      %v409 = vpop.f32.mrb[0].mxu0
      %v410 = vadd.f32 %v261, %v409
      %v411 = vpop.f32.mrb[0].mxu0
      %v412 = vpop.f32.mrb[0].mxu0
      %v413 = vadd.f32 %v261, %v412
      %v414 = vpop.f32.mrb[0].mxu0
      %415 = vmatprep.mubr.bf16.mxu0 0
      %416 = vmatmul.mubr.bf16.gmra.mrb[0].mxu0 %v298
      %v417 = vpop.f32.mrb[0].mxu0
      %v418 = vadd.f32 %v261, %v417
      %v419 = vpop.f32.mrb[0].mxu0
      %v420 = vpop.f32.mrb[0].mxu0
      %v421 = vadd.f32 %v261, %v420
      %v422 = vpop.f32.mrb[0].mxu0
      %423 = vmatprep.mubr.bf16.mxu0 0
      %424 = vmatmul.mubr.bf16.gmra.mrb[0].mxu0 %v299
      %v425 = vpop.f32.mrb[0].mxu0
      %v426 = vadd.f32 %v261, %v425
      %v427 = vpop.f32.mrb[0].mxu0
      %v428 = vpop.f32.mrb[0].mxu0
      %v429 = vadd.f32 %v261, %v428
      %v430 = vpop.f32.mrb[0].mxu0
      %431 = vmatprep.mubr.bf16.mxu0 0
      %432 = vmatmul.mubr.bf16.gmra.mrb[0].mxu0 %v300
      %v433 = vpop.f32.mrb[0].mxu0
      %v434 = vadd.f32 %v261, %v433
      %v435 = vpop.f32.mrb[0].mxu0
      %v436 = vpop.f32.mrb[0].mxu0
      %v437 = vadd.f32 %v261, %v436
      %v438 = vpop.f32.mrb[0].mxu0
      %439 = vmatprep.mubr.bf16.mxu0 0
      %440 = vmatmul.mubr.bf16.gmra.mrb[0].mxu0 %v301
      %v441 = vpop.f32.mrb[0].mxu0
      %v442 = vadd.f32 %v261, %v441
      %v443 = vpop.f32.mrb[0].mxu0
      %v444 = vpop.f32.mrb[0].mxu0
      %v445 = vadd.f32 %v261, %v444
      %v446 = vpop.f32.mrb[0].mxu0
      %447 = vmatprep.mubr.bf16.mxu0 0
      %448 = vmatmul.mubr.bf16.gmra.mrb[0].mxu0 %v302
      %v449 = vpop.f32.mrb[0].mxu0
      %v450 = vadd.f32 %v261, %v449
      %v451 = vpop.f32.mrb[0].mxu0
      %v452 = vpop.f32.mrb[0].mxu0
      %v453 = vadd.f32 %v261, %v452
      %v454 = vpop.f32.mrb[0].mxu0
      %455 = vdwg.mxu0
      %v456 = vld [vmem:[%s215] sm:$0xf]
      %v457 = vld [vmem:[%s215 + $0x4] sm:$0xf]
      %v458 = vld [vmem:[%s215 + $0x8] sm:$0xf]
      %v459 = vld [vmem:[%s215 + $0xc] sm:$0xf]
      %v460 = vld [vmem:[%s215 + $0x10] sm:$0xf]
      %v461 = vld [vmem:[%s215 + $0x14] sm:$0xf]
      %v462 = vld [vmem:[%s215 + $0x18] sm:$0xf]
      %v463 = vld [vmem:[%s215 + $0x1c] sm:$0xf]
      %v464 = vld [vmem:[%s215 + $0x20] sm:$0xf]
      %v465 = vld [vmem:[%s215 + $0x24] sm:$0xf]
      %v466 = vld [vmem:[%s215 + $0x28] sm:$0xf]
      %v467 = vld [vmem:[%s215 + $0x2c] sm:$0xf]
      %v468 = vld [vmem:[%s215 + $0x30] sm:$0xf]
      %v469 = vld [vmem:[%s215 + $0x34] sm:$0xf]
      %v470 = vld [vmem:[%s215 + $0x38] sm:$0xf]
      %v471 = vld [vmem:[%s215 + $0x3c] sm:$0xf]
      %v472 = vunpack.c.l.bf16 %v456
      %v473 = vunpack.c.l.bf16 %v457
      %v474 = vunpack.c.l.bf16 %v458
      %v475 = vunpack.c.l.bf16 %v459
      %v476 = vunpack.c.l.bf16 %v460
      %v477 = vunpack.c.l.bf16 %v461
      %v478 = vunpack.c.l.bf16 %v462
      %v479 = vunpack.c.l.bf16 %v463
      %v480 = vunpack.c.l.bf16 %v464
      %v481 = vunpack.c.l.bf16 %v465
      %v482 = vunpack.c.l.bf16 %v466
      %v483 = vunpack.c.l.bf16 %v467
      %v484 = vunpack.c.l.bf16 %v468
      %v485 = vunpack.c.l.bf16 %v469
      %v486 = vunpack.c.l.bf16 %v470
      %v487 = vunpack.c.l.bf16 %v471
      %v488 = vadd.f32 %v394, %v472
      %v489 = vadd.f32 %v397, %v473
      %v490 = vadd.f32 %v402, %v474
      %v491 = vadd.f32 %v405, %v475
      %v492 = vadd.f32 %v410, %v476
      %v493 = vadd.f32 %v413, %v477
      %v494 = vadd.f32 %v418, %v478
      %v495 = vadd.f32 %v421, %v479
      %v496 = vadd.f32 %v426, %v480
      %v497 = vadd.f32 %v429, %v481
      %v498 = vadd.f32 %v434, %v482
      %v499 = vadd.f32 %v437, %v483
      %v500 = vadd.f32 %v442, %v484
      %v501 = vadd.f32 %v445, %v485
      %v502 = vadd.f32 %v450, %v486
      %v503 = vadd.f32 %v453, %v487
      %v504 = vmax.f32 %v488, 0.0
      %v505 = vmax.f32 %v489, 0.0
      %v506 = vmax.f32 %v490, 0.0
      %v507 = vmax.f32 %v491, 0.0
      %v508 = vmax.f32 %v492, 0.0
      %v509 = vmax.f32 %v493, 0.0
      %v510 = vmax.f32 %v494, 0.0
      %v511 = vmax.f32 %v495, 0.0
      %v512 = vmax.f32 %v496, 0.0
      %v513 = vmax.f32 %v497, 0.0
      %v514 = vmax.f32 %v498, 0.0
      %v515 = vmax.f32 %v499, 0.0
      %v516 = vmax.f32 %v500, 0.0
      %v517 = vmax.f32 %v501, 0.0
      %v518 = vmax.f32 %v502, 0.0
      %v519 = vmax.f32 %v503, 0.0
      %v520 = vpack.c.bf16 %v505, %v504
      %v521 = vpack.c.bf16 %v507, %v506
      %v522 = vpack.c.bf16 %v509, %v508
      %v523 = vpack.c.bf16 %v511, %v510
      %v524 = vpack.c.bf16 %v513, %v512
      %v525 = vpack.c.bf16 %v515, %v514
      %v526 = vpack.c.bf16 %v517, %v516
      %v527 = vpack.c.bf16 %v519, %v518
      %v536 = vunpack.c.l.b16 %v520
      %v537 = vunpack.c.h.b16 %v520
      %v538 = vunpack.c.l.b16 %v521
      %v539 = vunpack.c.h.b16 %v521
      %v540 = vunpack.c.l.b16 %v522
      %v541 = vunpack.c.h.b16 %v522
      %v542 = vunpack.c.l.b16 %v523
      %v543 = vunpack.c.h.b16 %v523
      %v544 = vunpack.c.l.b16 %v524
      %v545 = vunpack.c.h.b16 %v524
      %v546 = vunpack.c.l.b16 %v525
      %v547 = vunpack.c.h.b16 %v525
      %v548 = vunpack.c.l.b16 %v526
      %v549 = vunpack.c.h.b16 %v526
      %v550 = vunpack.c.l.b16 %v527
      %v551 = vunpack.c.h.b16 %v527
      %v552 = vpack.c.b16 %v536, %v536
      %v553 = vpack.c.b16 %v537, %v537
      %v554 = vpack.c.b16 %v538, %v538
      %v555 = vpack.c.b16 %v539, %v539
      %v556 = vpack.c.b16 %v540, %v540
      %v557 = vpack.c.b16 %v541, %v541
      %v558 = vpack.c.b16 %v542, %v542
      %v559 = vpack.c.b16 %v543, %v543
      %v560 = vpack.c.b16 %v544, %v544
      %v561 = vpack.c.b16 %v545, %v545
      %v562 = vpack.c.b16 %v546, %v546
      %v563 = vpack.c.b16 %v547, %v547
      %v564 = vpack.c.b16 %v548, %v548
      %v565 = vpack.c.b16 %v549, %v549
      %v566 = vpack.c.b16 %v550, %v550
      %v567 = vpack.c.b16 %v551, %v551
      %584 = vst [vmem:[%s221] sm:$0xf] %v552
      %585 = vst [vmem:[%s221 + $0x4] sm:$0xf] %v553
      %586 = vst [vmem:[%s221 + $0x8] sm:$0xf] %v554
      %587 = vst [vmem:[%s221 + $0xc] sm:$0xf] %v555
      %588 = vst [vmem:[%s221 + $0x10] sm:$0xf] %v556
      %589 = vst [vmem:[%s221 + $0x14] sm:$0xf] %v557
      %590 = vst [vmem:[%s221 + $0x18] sm:$0xf] %v558
      %591 = vst [vmem:[%s221 + $0x1c] sm:$0xf] %v559
      %592 = vst [vmem:[%s221 + $0x20] sm:$0xf] %v560
      %593 = vst [vmem:[%s221 + $0x24] sm:$0xf] %v561
      %594 = vst [vmem:[%s221 + $0x28] sm:$0xf] %v562
      %595 = vst [vmem:[%s221 + $0x2c] sm:$0xf] %v563
      %596 = vst [vmem:[%s221 + $0x30] sm:$0xf] %v564
      %597 = vst [vmem:[%s221 + $0x34] sm:$0xf] %v565
      %598 = vst [vmem:[%s221 + $0x38] sm:$0xf] %v566
      %599 = vst [vmem:[%s221 + $0x3c] sm:$0xf] %v567
      %s600 = smul.u32 16, %s15
      %p601 = scmp.lt.s32.totalorder %s600, 31
      %s602 = scalar_select %p601, %s600, 31
      %s603 = smul.addr %s602, 4
      %s604 = scalar_lea.vmem %s4, %s603
      // Predicated region
      $region37: #{fno2d.12} parent=35 // pred_check
        %p605 = pneg %p127
      $region38: #{fno2d.12} parent=35 // pred_check_branch
        %607 = sbr.rel (%p605) target = $region40
      $region39: #{fno2d.12} parent=35 // pred_region
        %s608 = smul.u32 16, %s15
      $region40: #{fno2d.12} parent=35 // pred_fallthru
        _
    $region36: #{fno2d.12} parent=5 // pred_fallthru
      _
    %p609 = scmp.le.s32.totalorder 2, %s10
    // Predicated region
    $region41: #{fno2d.12} parent=5 // pred_check
      %p610 = pneg %p609
    $region42: #{fno2d.12} parent=5 // pred_check_branch
      %612 = sbr.rel (%p610) target = $region44
    $region43: #{fno2d.12} parent=5 // pred_region
      %s613 = ssub.s32 %s10, 2
      // Predicated region
      $region45: #{fno2d.12} parent=43 // pred_check
        %p614 = pneg %p133
      $region46: #{fno2d.12} parent=43 // pred_check_branch
        %616 = sbr.rel (%p614) target = $region48
      $region47: #{fno2d.12} parent=43 // pred_region
        %s617 = smul.u32 16, %s16
        %p618 = scmp.lt.s32.totalorder %s617, 31
        %s619 = scalar_select %p618, %s617, 31
        %s620 = smul.addr %s619, 4
        %s621 = scalar_lea.vmem %s4, %s620
      $region48: #{fno2d.12} parent=43 // pred_fallthru
        _
    $region44: #{fno2d.12} parent=5 // pred_fallthru
      _
  $region6: #{fno2d.12} parent=0 // loop_footer
    %s14 = sadd.s32 1, %s10
  $region7: #{fno2d.12} parent=0 // loop_footer_branch
    %9 = sbr.rel target = $region3
  $region8: #{fno2d.12} parent=0 // loop_exit
    _

// kernel: fno2d.19
$region0: #{fno2d.19}
  #allocation0 [shape = 'u32[]', space=smem, size = 0x4, offset = 0x4, fixed_abs, tag = 'smem constant byte address 0x4 - core index']
  #allocation1 [shape = 'u32[144,128]{1,0:T(1,128)}', space=vmem, size = 0x12000, scoped, tag = 'internal scratch']
  %s0 = inlined_call_operand.vmem [shape: bf16[256,128], index: 0, kind: input, shape index: {}]
  %s1 = inlined_call_operand.vmem [shape: bf16[128,256], index: 1, kind: input, shape index: {}]
  %s2 = inlined_call_operand.vmem [shape: f32[1,256], index: 2, kind: input, shape index: {}]
  %s3 = inlined_call_operand.vmem [shape: bf16[256,2], index: 3, kind: input, shape index: {}]
  %s4 = inlined_call_operand.vmem [shape: f32[1,2], index: 4, kind: input, shape index: {}]
  %s5 = inlined_call_operand.vmem [shape: f32[256,2], index: 5, kind: output, shape index: {}]
  %s6 = sld [smem:[#allocation0]]
  $region53: #{fno2d.19} parent=0
    _
  %s8 = ssub.s32 1, %s6
  %s9 = scalar_select 0, %s8, %s6
  loop: start=0, step=1, limit=4
  $region2: #{fno2d.19} parent=0 // loop_pre_header
    _
  $region3: #{fno2d.19} parent=0 // loop_header
    %s11 = sphi 0, %s15
    %p12 = scmp.ge.s32.totalorder %s11, 4
    %s21 = sphi 0, %s23
    %s24 = sphi 0, %s21
    %s25 = sphi 0, %s24
    %s41 = sphi 0, %s25
    %s45 = sphi 0, %s45
    %s47 = sphi 0, %s45
    %s48 = sphi 0, %s47
    %s62 = sphi 0, %s48
    %s66 = sphi 0, %s66
    %s68 = sphi 0, %s66
    %s69 = sphi 0, %s68
    %s83 = sphi 0, %s69
    %s87 = sphi 0, %s87
    %s89 = sphi 0, %s87
    %s90 = sphi 0, %s89
    %s104 = sphi 0, %s90
    %s108 = sphi 0, %s108
    %s110 = sphi 0, %s108
    %s111 = sphi 0, %s110
    %s125 = sphi 0, %s111
    %s131 = sphi 0, %s133
    %s134 = sphi 0, %s131
    %s135 = sphi 0, %s134
    %s151 = sphi 0, %s135
  $region4: #{fno2d.19} parent=0 // loop_header_branch
    %14 = sbr.rel (%p12) target = $region8
  $region5: #{fno2d.19} parent=0 // loop_body
    %s16 = ssub.s32 %s11, 1
    %s17 = ssub.s32 %s11, 2
    %s18 = sadd.s32 %s11, 1
    %s19 = ssub.s32 %s11, %s18
    %p20 = scmp.eq.s32.totalorder %s19, 0
    %s22 = sadd.s32 %s21, 1
    %s23 = scalar_select %p20, %s21, %s22
    %p26 = pneg %p20
    %p27 = scmp.eq.s32.totalorder %s11, 1
    %p28 = por %p26, %p27
    %p29 = scmp.ne.s32.totalorder %s21, %s24
    %p30 = scmp.eq.s32.totalorder %s11, 0
    %p31 = por %p29, %p30
    %p32 = scmp.ne.s32.totalorder %s21, %s24
    %p33 = scmp.eq.s32.totalorder %s16, 1
    %p34 = por %p32, %p33
    %p35 = scmp.ne.s32.totalorder %s24, %s25
    %p36 = scmp.eq.s32.totalorder %s16, 0
    %p37 = por %p35, %p36
    %p38 = scmp.ne.s32.totalorder %s24, %s25
    %p39 = scmp.eq.s32.totalorder %s17, 1
    %p40 = por %p38, %p39
    %p42 = scmp.ne.s32.totalorder %s25, %s41
    %p43 = scmp.eq.s32.totalorder %s17, 0
    %p44 = por %p42, %p43
    %s46 = sadd.s32 %s45, 1
    %p49 = scmp.eq.s32.totalorder %s11, 1
    %p50 = scmp.ne.s32.totalorder %s45, %s47
    %p51 = scmp.eq.s32.totalorder %s11, 0
    %p52 = por %p50, %p51
    %p53 = scmp.ne.s32.totalorder %s45, %s47
    %p54 = scmp.eq.s32.totalorder %s16, 1
    %p55 = por %p53, %p54
    %p56 = scmp.ne.s32.totalorder %s47, %s48
    %p57 = scmp.eq.s32.totalorder %s16, 0
    %p58 = por %p56, %p57
    %p59 = scmp.ne.s32.totalorder %s47, %s48
    %p60 = scmp.eq.s32.totalorder %s17, 1
    %p61 = por %p59, %p60
    %p63 = scmp.ne.s32.totalorder %s48, %s62
    %p64 = scmp.eq.s32.totalorder %s17, 0
    %p65 = por %p63, %p64
    %s67 = sadd.s32 %s66, 1
    %p70 = scmp.eq.s32.totalorder %s11, 1
    %p71 = scmp.ne.s32.totalorder %s66, %s68
    %p72 = scmp.eq.s32.totalorder %s11, 0
    %p73 = por %p71, %p72
    %p74 = scmp.ne.s32.totalorder %s66, %s68
    %p75 = scmp.eq.s32.totalorder %s16, 1
    %p76 = por %p74, %p75
    %p77 = scmp.ne.s32.totalorder %s68, %s69
    %p78 = scmp.eq.s32.totalorder %s16, 0
    %p79 = por %p77, %p78
    %p80 = scmp.ne.s32.totalorder %s68, %s69
    %p81 = scmp.eq.s32.totalorder %s17, 1
    %p82 = por %p80, %p81
    %p84 = scmp.ne.s32.totalorder %s69, %s83
    %p85 = scmp.eq.s32.totalorder %s17, 0
    %p86 = por %p84, %p85
    %s88 = sadd.s32 %s87, 1
    %p91 = scmp.eq.s32.totalorder %s11, 1
    %p92 = scmp.ne.s32.totalorder %s87, %s89
    %p93 = scmp.eq.s32.totalorder %s11, 0
    %p94 = por %p92, %p93
    %p95 = scmp.ne.s32.totalorder %s87, %s89
    %p96 = scmp.eq.s32.totalorder %s16, 1
    %p97 = por %p95, %p96
    %p98 = scmp.ne.s32.totalorder %s89, %s90
    %p99 = scmp.eq.s32.totalorder %s16, 0
    %p100 = por %p98, %p99
    %p101 = scmp.ne.s32.totalorder %s89, %s90
    %p102 = scmp.eq.s32.totalorder %s17, 1
    %p103 = por %p101, %p102
    %p105 = scmp.ne.s32.totalorder %s90, %s104
    %p106 = scmp.eq.s32.totalorder %s17, 0
    %p107 = por %p105, %p106
    %s109 = sadd.s32 %s108, 1
    %p112 = scmp.eq.s32.totalorder %s11, 1
    %p113 = scmp.ne.s32.totalorder %s108, %s110
    %p114 = scmp.eq.s32.totalorder %s11, 0
    %p115 = por %p113, %p114
    %p116 = scmp.ne.s32.totalorder %s108, %s110
    %p117 = scmp.eq.s32.totalorder %s16, 1
    %p118 = por %p116, %p117
    %p119 = scmp.ne.s32.totalorder %s110, %s111
    %p120 = scmp.eq.s32.totalorder %s16, 0
    %p121 = por %p119, %p120
    %p122 = scmp.ne.s32.totalorder %s110, %s111
    %p123 = scmp.eq.s32.totalorder %s17, 1
    %p124 = por %p122, %p123
    %p126 = scmp.ne.s32.totalorder %s111, %s125
    %p127 = scmp.eq.s32.totalorder %s17, 0
    %p128 = por %p126, %p127
    %s129 = ssub.s32 %s11, %s18
    %p130 = scmp.eq.s32.totalorder %s129, 0
    %s132 = sadd.s32 %s131, 1
    %s133 = scalar_select %p130, %s131, %s132
    %p136 = pneg %p130
    %p137 = scmp.eq.s32.totalorder %s11, 1
    %p138 = por %p136, %p137
    %p139 = scmp.ne.s32.totalorder %s131, %s134
    %p140 = scmp.eq.s32.totalorder %s11, 0
    %p141 = por %p139, %p140
    %p142 = scmp.ne.s32.totalorder %s131, %s134
    %p143 = scmp.eq.s32.totalorder %s16, 1
    %p144 = por %p142, %p143
    %p145 = scmp.ne.s32.totalorder %s134, %s135
    %p146 = scmp.eq.s32.totalorder %s16, 0
    %p147 = por %p145, %p146
    %p148 = scmp.ne.s32.totalorder %s134, %s135
    %p149 = scmp.eq.s32.totalorder %s17, 1
    %p150 = por %p148, %p149
    %p152 = scmp.ne.s32.totalorder %s135, %s151
    %p153 = scmp.eq.s32.totalorder %s17, 0
    %p154 = por %p152, %p153
    %p155 = scmp.le.s32.totalorder 1, %s11
    %p156 = scmp.lt.s32.totalorder %s11, 3
    %p157 = pnand %p155, %p156
    %p158 = pneg %p157
    // Predicated region
    $region9: #{fno2d.19} parent=5 // pred_check
      _
    $region10: #{fno2d.19} parent=5 // pred_check_branch
      %160 = sbr.rel (%p157) target = $region12
    $region11: #{fno2d.19} parent=5 // pred_region
      %s161 = ssub.s32 %s11, 1
      // Predicated region
      $region13: #{fno2d.19} parent=11 // pred_check
        %p162 = pneg %p58
      $region14: #{fno2d.19} parent=11 // pred_check_branch
        %164 = sbr.rel (%p162) target = $region16
      $region15: #{fno2d.19} parent=11 // pred_region
        _
      $region16: #{fno2d.19} parent=11 // pred_fallthru
        _
      // Predicated region
      $region17: #{fno2d.19} parent=11 // pred_check
        %p165 = pneg %p79
      $region18: #{fno2d.19} parent=11 // pred_check_branch
        %167 = sbr.rel (%p165) target = $region20
      $region19: #{fno2d.19} parent=11 // pred_region
        _
      $region20: #{fno2d.19} parent=11 // pred_fallthru
        _
      // Predicated region
      $region21: #{fno2d.19} parent=11 // pred_check
        %p168 = pneg %p100
      $region22: #{fno2d.19} parent=11 // pred_check_branch
        %170 = sbr.rel (%p168) target = $region24
      $region23: #{fno2d.19} parent=11 // pred_region
        _
      $region24: #{fno2d.19} parent=11 // pred_fallthru
        _
      // Predicated region
      $region25: #{fno2d.19} parent=11 // pred_check
        %p171 = pneg %p121
      $region26: #{fno2d.19} parent=11 // pred_check_branch
        %173 = sbr.rel (%p171) target = $region28
      $region27: #{fno2d.19} parent=11 // pred_region
        _
      $region28: #{fno2d.19} parent=11 // pred_fallthru
        _
    $region12: #{fno2d.19} parent=5 // pred_fallthru
      _
    %p174 = scmp.lt.s32.totalorder %s11, 2
    // Predicated region
    $region29: #{fno2d.19} parent=5 // pred_check
      %p175 = pneg %p174
    $region30: #{fno2d.19} parent=5 // pred_check_branch
      %177 = sbr.rel (%p175) target = $region32
    $region31: #{fno2d.19} parent=5 // pred_region
      // Predicated region
      $region33: #{fno2d.19} parent=31 // pred_check
        %p178 = pneg %p31
      $region34: #{fno2d.19} parent=31 // pred_check_branch
        %180 = sbr.rel (%p178) target = $region36
      $region35: #{fno2d.19} parent=31 // pred_region
        %s181 = smul.u32 16, %s11
        %p182 = scmp.lt.s32.totalorder %s181, 31
        %s183 = scalar_select %p182, %s181, 31
        %s184 = smul.addr %s183, 4
        %s185 = scalar_lea.vmem %s0, %s184
        %s186 = smul.u32 16, %s11
      $region36: #{fno2d.19} parent=31 // pred_fallthru
        _
    $region32: #{fno2d.19} parent=5 // pred_fallthru
      _
    %p187 = scmp.le.s32.totalorder 1, %s11
    %p188 = scmp.lt.s32.totalorder %s11, 3
    %p189 = pnand %p187, %p188
    %p190 = pneg %p189
    // Predicated region
    $region37: #{fno2d.19} parent=5 // pred_check
      _
    $region38: #{fno2d.19} parent=5 // pred_check_branch
      %192 = sbr.rel (%p189) target = $region40
    $region39: #{fno2d.19} parent=5 // pred_region
      %s193 = ssub.s32 %s11, 1
      %s194 = smul.u32 16, %s16
      %p195 = scmp.lt.s32.totalorder %s194, 31
      %s196 = scalar_select %p195, %s194, 31
      %s197 = smul.addr %s196, 4
      %s198 = scalar_lea.vmem %s0, %s197
      %p199 = pneg %p37
      %p200 = pneg %p34
      %p201 = pneg %p58
      %p202 = pneg %p55
      %p203 = pneg %p79
      %p204 = pneg %p76
      %p205 = pneg %p100
      %p206 = pneg %p97
      %p207 = pneg %p121
      %p208 = pneg %p118
      %p209 = pneg %p147
      %p210 = pneg %p144
      %s211 = smul.u32 16, %s16
      %p212 = scmp.lt.s32.totalorder %s211, 31
      %s213 = scalar_select %p212, %s211, 31
      %s214 = smul.addr %s213, 8
      %s215 = scalar_lea.vmem %s5, %s214
      %s216 = smul.u32 16, %s16
      %p217 = scmp.lt.s32.totalorder %s216, 31
      %s218 = scalar_select %p217, %s216, 31
      %s219 = smul.addr %s218, 4
      %s220 = scalar_lea.vmem %s0, %s219
      %s221 = smul.u32 16, %s16
      %s222 = smul.u32 16, %s16
      %p223 = scmp.lt.s32.totalorder %s222, 31
      %s224 = scalar_select %p223, %s222, 31
      %s225 = smul.addr %s224, 8
      %s226 = scalar_lea.vmem %s5, %s225
      %s227 = smul.u32 16, %s16
      %v229 = vld [vmem:[%s220] sm:$0xf]
      %v230 = vld [vmem:[%s220 + $0x4] sm:$0xf]
      %v231 = vld [vmem:[%s220 + $0x8] sm:$0xf]
      %v232 = vld [vmem:[%s220 + $0xc] sm:$0xf]
      %v233 = vld [vmem:[%s220 + $0x10] sm:$0xf]
      %v234 = vld [vmem:[%s220 + $0x14] sm:$0xf]
      %v235 = vld [vmem:[%s220 + $0x18] sm:$0xf]
      %v236 = vld [vmem:[%s220 + $0x1c] sm:$0xf]
      %v237 = vld [vmem:[%s220 + $0x20] sm:$0xf]
      %v238 = vld [vmem:[%s220 + $0x24] sm:$0xf]
      %v239 = vld [vmem:[%s220 + $0x28] sm:$0xf]
      %v240 = vld [vmem:[%s220 + $0x2c] sm:$0xf]
      %v241 = vld [vmem:[%s220 + $0x30] sm:$0xf]
      %v242 = vld [vmem:[%s220 + $0x34] sm:$0xf]
      %v243 = vld [vmem:[%s220 + $0x38] sm:$0xf]
      %v244 = vld [vmem:[%s220 + $0x3c] sm:$0xf]
      %v245 = vld [vmem:[%s1] sm:$0xff]
      %v246 = vld [vmem:[%s1 + $0x8] sm:$0xff]
      %v247 = vld [vmem:[%s1 + $0x10] sm:$0xff]
      %v248 = vld [vmem:[%s1 + $0x18] sm:$0xff]
      %v249 = vld [vmem:[%s1 + $0x20] sm:$0xff]
      %v250 = vld [vmem:[%s1 + $0x28] sm:$0xff]
      %v251 = vld [vmem:[%s1 + $0x30] sm:$0xff]
      %v252 = vld [vmem:[%s1 + $0x38] sm:$0xff]
      %v253 = vld [vmem:[%s1 + $0x40] sm:$0xff]
      %v254 = vld [vmem:[%s1 + $0x48] sm:$0xff]
      %v255 = vld [vmem:[%s1 + $0x50] sm:$0xff]
      %v256 = vld [vmem:[%s1 + $0x58] sm:$0xff]
      %v257 = vld [vmem:[%s1 + $0x60] sm:$0xff]
      %v258 = vld [vmem:[%s1 + $0x68] sm:$0xff]
      %v259 = vld [vmem:[%s1 + $0x70] sm:$0xff]
      %v260 = vld [vmem:[%s1 + $0x78] sm:$0xff]
      %v261 = vld [vmem:[%s2] sm:$0x3]
      %v263 = vlaneseq
      %v264 = vshrl.u32 %v263, 7
      %v265 = vsub.s32 0, %v264
      %v266 = vrot.slane %v261, %v265
      %v267 = vlaneseq
      %v268 = vshrl.u32 %v267, 7
      %v269 = vsub.s32 1, %v268
      %v270 = vrot.slane %v261, %v269
      %v289 = vunpack.c.l.b16 %v229
      %v290 = vunpack.c.l.b16 %v230
      %v291 = vunpack.c.l.b16 %v231
      %v292 = vunpack.c.l.b16 %v232
      %v293 = vunpack.c.l.b16 %v233
      %v294 = vunpack.c.l.b16 %v234
      %v295 = vunpack.c.l.b16 %v235
      %v296 = vunpack.c.l.b16 %v236
      %v297 = vunpack.c.l.b16 %v237
      %v298 = vunpack.c.l.b16 %v238
      %v299 = vunpack.c.l.b16 %v239
      %v300 = vunpack.c.l.b16 %v240
      %v301 = vunpack.c.l.b16 %v241
      %v302 = vunpack.c.l.b16 %v242
      %v303 = vunpack.c.l.b16 %v243
      %v304 = vunpack.c.l.b16 %v244
      %v305 = vpack.c.b16 %v290, %v289
      %v306 = vpack.c.b16 %v292, %v291
      %v307 = vpack.c.b16 %v294, %v293
      %v308 = vpack.c.b16 %v296, %v295
      %v309 = vpack.c.b16 %v298, %v297
      %v310 = vpack.c.b16 %v300, %v299
      %v311 = vpack.c.b16 %v302, %v301
      %v312 = vpack.c.b16 %v304, %v303
      %v337 = vunpack.c.l.b16 %v245
      %v338 = vunpack.c.h.b16 %v245
      %v339 = vunpack.c.l.b16 %v246
      %v340 = vunpack.c.h.b16 %v246
      %v341 = vunpack.c.l.b16 %v247
      %v342 = vunpack.c.h.b16 %v247
      %v343 = vunpack.c.l.b16 %v248
      %v344 = vunpack.c.h.b16 %v248
      %v345 = vunpack.c.l.b16 %v249
      %v346 = vunpack.c.h.b16 %v249
      %v347 = vunpack.c.l.b16 %v250
      %v348 = vunpack.c.h.b16 %v250
      %v349 = vunpack.c.l.b16 %v251
      %v350 = vunpack.c.h.b16 %v251
      %v351 = vunpack.c.l.b16 %v252
      %v352 = vunpack.c.h.b16 %v252
      %v353 = vunpack.c.l.b16 %v253
      %v354 = vunpack.c.h.b16 %v253
      %v355 = vunpack.c.l.b16 %v254
      %v356 = vunpack.c.h.b16 %v254
      %v357 = vunpack.c.l.b16 %v255
      %v358 = vunpack.c.h.b16 %v255
      %v359 = vunpack.c.l.b16 %v256
      %v360 = vunpack.c.h.b16 %v256
      %v361 = vunpack.c.l.b16 %v257
      %v362 = vunpack.c.h.b16 %v257
      %v363 = vunpack.c.l.b16 %v258
      %v364 = vunpack.c.h.b16 %v258
      %v365 = vunpack.c.l.b16 %v259
      %v366 = vunpack.c.h.b16 %v259
      %v367 = vunpack.c.l.b16 %v260
      %v368 = vunpack.c.h.b16 %v260
      %v369 = vpack.c.b16 %v339, %v337
      %v370 = vpack.c.b16 %v340, %v338
      %v371 = vpack.c.b16 %v343, %v341
      %v372 = vpack.c.b16 %v344, %v342
      %v373 = vpack.c.b16 %v347, %v345
      %v374 = vpack.c.b16 %v348, %v346
      %v375 = vpack.c.b16 %v351, %v349
      %v376 = vpack.c.b16 %v352, %v350
      %v377 = vpack.c.b16 %v355, %v353
      %v378 = vpack.c.b16 %v356, %v354
      %v379 = vpack.c.b16 %v359, %v357
      %v380 = vpack.c.b16 %v360, %v358
      %v381 = vpack.c.b16 %v363, %v361
      %v382 = vpack.c.b16 %v364, %v362
      %v383 = vpack.c.b16 %v367, %v365
      %v384 = vpack.c.b16 %v368, %v366
      %401 = vmatprep.subr.bf16.mxu0 %v370
      %402 = vmatpush1.bf16.msra.mxu0 %v369
      %403 = vmatprep.subr.bf16.mxu0 %v372
      %404 = vmatpush1.bf16.msra.mxu0 %v371
      %405 = vmatprep.subr.bf16.mxu0 %v374
      %406 = vmatpush1.bf16.msra.mxu0 %v373
      %407 = vmatprep.subr.bf16.mxu0 %v376
      %408 = vmatpush1.bf16.msra.mxu0 %v375
      %409 = vmatprep.subr.bf16.mxu0 %v378
      %410 = vmatpush1.bf16.msra.mxu0 %v377
      %411 = vmatprep.subr.bf16.mxu0 %v380
      %412 = vmatpush1.bf16.msra.mxu0 %v379
      %413 = vmatprep.subr.bf16.mxu0 %v382
      %414 = vmatpush1.bf16.msra.mxu0 %v381
      %415 = vmatprep.subr.bf16.mxu0 %v384
      %416 = vmatpush1.bf16.msra.mxu0 %v383
      %417 = vmatprep.subr.bf16.mxu0 0
      %418 = vmatpush1.bf16.msra.mxu0 0
      %419 = vmatprep.subr.bf16.mxu0 0
      %420 = vmatpush1.bf16.msra.mxu0 0
      %421 = vmatprep.subr.bf16.mxu0 0
      %422 = vmatpush1.bf16.msra.mxu0 0
      %423 = vmatprep.subr.bf16.mxu0 0
      %424 = vmatpush1.bf16.msra.mxu0 0
      %425 = vmatprep.subr.bf16.mxu0 0
      %426 = vmatpush1.bf16.msra.mxu0 0
      %427 = vmatprep.subr.bf16.mxu0 0
      %428 = vmatpush1.bf16.msra.mxu0 0
      %429 = vmatprep.subr.bf16.mxu0 0
      %430 = vmatpush1.bf16.msra.mxu0 0
      %431 = vmatprep.subr.bf16.mxu0 0
      %432 = vmatpush1.bf16.msra.mxu0 0
      %433 = vmatprep.mubr.bf16.mxu0 0
      %434 = vmatmul.mubr.bf16.gmra.mrb[0].mxu0 %v305
      %v435 = vpop.f32.mrb[0].mxu0
      %v436 = vadd.f32 %v266, %v435
      %v437 = vpop.f32.mrb[0].mxu0
      %v438 = vadd.f32 %v270, %v437
      %v439 = vpop.f32.mrb[0].mxu0
      %v440 = vadd.f32 %v266, %v439
      %v441 = vpop.f32.mrb[0].mxu0
      %v442 = vadd.f32 %v270, %v441
      %443 = vmatprep.mubr.bf16.mxu0 0
      %444 = vmatmul.mubr.bf16.gmra.mrb[0].mxu0 %v306
      %v445 = vpop.f32.mrb[0].mxu0
      %v446 = vadd.f32 %v266, %v445
      %v447 = vpop.f32.mrb[0].mxu0
      %v448 = vadd.f32 %v270, %v447
      %v449 = vpop.f32.mrb[0].mxu0
      %v450 = vadd.f32 %v266, %v449
      %v451 = vpop.f32.mrb[0].mxu0
      %v452 = vadd.f32 %v270, %v451
      %453 = vmatprep.mubr.bf16.mxu0 0
      %454 = vmatmul.mubr.bf16.gmra.mrb[0].mxu0 %v307
      %v455 = vpop.f32.mrb[0].mxu0
      %v456 = vadd.f32 %v266, %v455
      %v457 = vpop.f32.mrb[0].mxu0
      %v458 = vadd.f32 %v270, %v457
      %v459 = vpop.f32.mrb[0].mxu0
      %v460 = vadd.f32 %v266, %v459
      %v461 = vpop.f32.mrb[0].mxu0
      %v462 = vadd.f32 %v270, %v461
      %463 = vmatprep.mubr.bf16.mxu0 0
      %464 = vmatmul.mubr.bf16.gmra.mrb[0].mxu0 %v308
      %v465 = vpop.f32.mrb[0].mxu0
      %v466 = vadd.f32 %v266, %v465
      %v467 = vpop.f32.mrb[0].mxu0
      %v468 = vadd.f32 %v270, %v467
      %v469 = vpop.f32.mrb[0].mxu0
      %v470 = vadd.f32 %v266, %v469
      %v471 = vpop.f32.mrb[0].mxu0
      %v472 = vadd.f32 %v270, %v471
      %473 = vmatprep.mubr.bf16.mxu0 0
      %474 = vmatmul.mubr.bf16.gmra.mrb[0].mxu0 %v309
      %v475 = vpop.f32.mrb[0].mxu0
      %v476 = vadd.f32 %v266, %v475
      %v477 = vpop.f32.mrb[0].mxu0
      %v478 = vadd.f32 %v270, %v477
      %v479 = vpop.f32.mrb[0].mxu0
      %v480 = vadd.f32 %v266, %v479
      %v481 = vpop.f32.mrb[0].mxu0
      %v482 = vadd.f32 %v270, %v481
      %483 = vmatprep.mubr.bf16.mxu0 0
      %484 = vmatmul.mubr.bf16.gmra.mrb[0].mxu0 %v310
      %v485 = vpop.f32.mrb[0].mxu0
      %v486 = vadd.f32 %v266, %v485
      %v487 = vpop.f32.mrb[0].mxu0
      %v488 = vadd.f32 %v270, %v487
      %v489 = vpop.f32.mrb[0].mxu0
      %v490 = vadd.f32 %v266, %v489
      %v491 = vpop.f32.mrb[0].mxu0
      %v492 = vadd.f32 %v270, %v491
      %493 = vmatprep.mubr.bf16.mxu0 0
      %494 = vmatmul.mubr.bf16.gmra.mrb[0].mxu0 %v311
      %v495 = vpop.f32.mrb[0].mxu0
      %v496 = vadd.f32 %v266, %v495
      %v497 = vpop.f32.mrb[0].mxu0
      %v498 = vadd.f32 %v270, %v497
      %v499 = vpop.f32.mrb[0].mxu0
      %v500 = vadd.f32 %v266, %v499
      %v501 = vpop.f32.mrb[0].mxu0
      %v502 = vadd.f32 %v270, %v501
      %503 = vmatprep.mubr.bf16.mxu0 0
      %504 = vmatmul.mubr.bf16.gmra.mrb[0].mxu0 %v312
      %v505 = vpop.f32.mrb[0].mxu0
      %v506 = vadd.f32 %v266, %v505
      %v507 = vpop.f32.mrb[0].mxu0
      %v508 = vadd.f32 %v270, %v507
      %v509 = vpop.f32.mrb[0].mxu0
      %v510 = vadd.f32 %v266, %v509
      %v511 = vpop.f32.mrb[0].mxu0
      %v512 = vadd.f32 %v270, %v511
      %513 = vdwg.mxu0
      %v514 = vmax.f32 %v436, 0.0
      %v515 = vmax.f32 %v438, 0.0
      %v516 = vmax.f32 %v440, 0.0
      %v517 = vmax.f32 %v442, 0.0
      %v518 = vmax.f32 %v446, 0.0
      %v519 = vmax.f32 %v448, 0.0
      %v520 = vmax.f32 %v450, 0.0
      %v521 = vmax.f32 %v452, 0.0
      %v522 = vmax.f32 %v456, 0.0
      %v523 = vmax.f32 %v458, 0.0
      %v524 = vmax.f32 %v460, 0.0
      %v525 = vmax.f32 %v462, 0.0
      %v526 = vmax.f32 %v466, 0.0
      %v527 = vmax.f32 %v468, 0.0
      %v528 = vmax.f32 %v470, 0.0
      %v529 = vmax.f32 %v472, 0.0
      %v530 = vmax.f32 %v476, 0.0
      %v531 = vmax.f32 %v478, 0.0
      %v532 = vmax.f32 %v480, 0.0
      %v533 = vmax.f32 %v482, 0.0
      %v534 = vmax.f32 %v486, 0.0
      %v535 = vmax.f32 %v488, 0.0
      %v536 = vmax.f32 %v490, 0.0
      %v537 = vmax.f32 %v492, 0.0
      %v538 = vmax.f32 %v496, 0.0
      %v539 = vmax.f32 %v498, 0.0
      %v540 = vmax.f32 %v500, 0.0
      %v541 = vmax.f32 %v502, 0.0
      %v542 = vmax.f32 %v506, 0.0
      %v543 = vmax.f32 %v508, 0.0
      %v544 = vmax.f32 %v510, 0.0
      %v545 = vmax.f32 %v512, 0.0
      %v546 = vpack.c.bf16 %v516, %v514
      %v547 = vpack.c.bf16 %v517, %v515
      %v548 = vpack.c.bf16 %v520, %v518
      %v549 = vpack.c.bf16 %v521, %v519
      %v550 = vpack.c.bf16 %v524, %v522
      %v551 = vpack.c.bf16 %v525, %v523
      %v552 = vpack.c.bf16 %v528, %v526
      %v553 = vpack.c.bf16 %v529, %v527
      %v554 = vpack.c.bf16 %v532, %v530
      %v555 = vpack.c.bf16 %v533, %v531
      %v556 = vpack.c.bf16 %v536, %v534
      %v557 = vpack.c.bf16 %v537, %v535
      %v558 = vpack.c.bf16 %v540, %v538
      %v559 = vpack.c.bf16 %v541, %v539
      %v560 = vpack.c.bf16 %v544, %v542
      %v561 = vpack.c.bf16 %v545, %v543
      %v562 = vld [vmem:[%s3] sm:$0xf]
      %v563 = vld [vmem:[%s3 + $0x4] sm:$0xf]
      %v564 = vld [vmem:[%s3 + $0x8] sm:$0xf]
      %v565 = vld [vmem:[%s3 + $0xc] sm:$0xf]
      %v566 = vld [vmem:[%s3 + $0x10] sm:$0xf]
      %v567 = vld [vmem:[%s3 + $0x14] sm:$0xf]
      %v568 = vld [vmem:[%s3 + $0x18] sm:$0xf]
      %v569 = vld [vmem:[%s3 + $0x1c] sm:$0xf]
      %v570 = vld [vmem:[%s3 + $0x20] sm:$0xf]
      %v571 = vld [vmem:[%s3 + $0x24] sm:$0xf]
      %v572 = vld [vmem:[%s3 + $0x28] sm:$0xf]
      %v573 = vld [vmem:[%s3 + $0x2c] sm:$0xf]
      %v574 = vld [vmem:[%s3 + $0x30] sm:$0xf]
      %v575 = vld [vmem:[%s3 + $0x34] sm:$0xf]
      %v576 = vld [vmem:[%s3 + $0x38] sm:$0xf]
      %v577 = vld [vmem:[%s3 + $0x3c] sm:$0xf]
      %v578 = vld [vmem:[%s3 + $0x40] sm:$0xf]
      %v579 = vld [vmem:[%s3 + $0x44] sm:$0xf]
      %v580 = vld [vmem:[%s3 + $0x48] sm:$0xf]
      %v581 = vld [vmem:[%s3 + $0x4c] sm:$0xf]
      %v582 = vld [vmem:[%s3 + $0x50] sm:$0xf]
      %v583 = vld [vmem:[%s3 + $0x54] sm:$0xf]
      %v584 = vld [vmem:[%s3 + $0x58] sm:$0xf]
      %v585 = vld [vmem:[%s3 + $0x5c] sm:$0xf]
      %v586 = vld [vmem:[%s3 + $0x60] sm:$0xf]
      %v587 = vld [vmem:[%s3 + $0x64] sm:$0xf]
      %v588 = vld [vmem:[%s3 + $0x68] sm:$0xf]
      %v589 = vld [vmem:[%s3 + $0x6c] sm:$0xf]
      %v590 = vld [vmem:[%s3 + $0x70] sm:$0xf]
      %v591 = vld [vmem:[%s3 + $0x74] sm:$0xf]
      %v592 = vld [vmem:[%s3 + $0x78] sm:$0xf]
      %v593 = vld [vmem:[%s3 + $0x7c] sm:$0xf]
      %v594 = vld [vmem:[%s4] sm:$0x1]
      %v596 = vlaneseq
      %v597 = vshrl.u32 %v596, 7
      %v598 = vsub.s32 0, %v597
      %v599 = vrot.slane %v594, %v598
      %v633 = vunpack.c.l.b16 %v562
      %v634 = vunpack.c.l.b16 %v563
      %v635 = vunpack.c.l.b16 %v564
      %v636 = vunpack.c.l.b16 %v565
      %v637 = vunpack.c.l.b16 %v566
      %v638 = vunpack.c.l.b16 %v567
      %v639 = vunpack.c.l.b16 %v568
      %v640 = vunpack.c.l.b16 %v569
      %v641 = vunpack.c.l.b16 %v570
      %v642 = vunpack.c.l.b16 %v571
      %v643 = vunpack.c.l.b16 %v572
      %v644 = vunpack.c.l.b16 %v573
      %v645 = vunpack.c.l.b16 %v574
      %v646 = vunpack.c.l.b16 %v575
      %v647 = vunpack.c.l.b16 %v576
      %v648 = vunpack.c.l.b16 %v577
      %v649 = vunpack.c.l.b16 %v578
      %v650 = vunpack.c.l.b16 %v579
      %v651 = vunpack.c.l.b16 %v580
      %v652 = vunpack.c.l.b16 %v581
      %v653 = vunpack.c.l.b16 %v582
      %v654 = vunpack.c.l.b16 %v583
      %v655 = vunpack.c.l.b16 %v584
      %v656 = vunpack.c.l.b16 %v585
      %v657 = vunpack.c.l.b16 %v586
      %v658 = vunpack.c.l.b16 %v587
      %v659 = vunpack.c.l.b16 %v588
      %v660 = vunpack.c.l.b16 %v589
      %v661 = vunpack.c.l.b16 %v590
      %v662 = vunpack.c.l.b16 %v591
      %v663 = vunpack.c.l.b16 %v592
      %v664 = vunpack.c.l.b16 %v593
      %v665 = vpack.c.b16 %v634, %v633
      %v666 = vpack.c.b16 %v636, %v635
      %v667 = vpack.c.b16 %v638, %v637
      %v668 = vpack.c.b16 %v640, %v639
      %v669 = vpack.c.b16 %v642, %v641
      %v670 = vpack.c.b16 %v644, %v643
      %v671 = vpack.c.b16 %v646, %v645
      %v672 = vpack.c.b16 %v648, %v647
      %v673 = vpack.c.b16 %v650, %v649
      %v674 = vpack.c.b16 %v652, %v651
      %v675 = vpack.c.b16 %v654, %v653
      %v676 = vpack.c.b16 %v656, %v655
      %v677 = vpack.c.b16 %v658, %v657
      %v678 = vpack.c.b16 %v660, %v659
      %v679 = vpack.c.b16 %v662, %v661
      %v680 = vpack.c.b16 %v664, %v663
      %697 = vmatprep.subr.bf16.mxu0 0
      %698 = vmatpush1.bf16.msra.mxu0 %v665
      %699 = vmatprep.subr.bf16.mxu0 0
      %700 = vmatpush1.bf16.msra.mxu0 %v666
      %701 = vmatprep.subr.bf16.mxu0 0
      %702 = vmatpush1.bf16.msra.mxu0 %v667
      %703 = vmatprep.subr.bf16.mxu0 0
      %704 = vmatpush1.bf16.msra.mxu0 %v668
      %705 = vmatprep.subr.bf16.mxu0 0
      %706 = vmatpush1.bf16.msra.mxu0 %v669
      %707 = vmatprep.subr.bf16.mxu0 0
      %708 = vmatpush1.bf16.msra.mxu0 %v670
      %709 = vmatprep.subr.bf16.mxu0 0
      %710 = vmatpush1.bf16.msra.mxu0 %v671
      %711 = vmatprep.subr.bf16.mxu0 0
      %712 = vmatpush1.bf16.msra.mxu0 %v672
      %713 = vmatprep.subr.bf16.mxu0 0
      %714 = vmatpush1.bf16.msra.mxu0 %v673
      %715 = vmatprep.subr.bf16.mxu0 0
      %716 = vmatpush1.bf16.msra.mxu0 %v674
      %717 = vmatprep.subr.bf16.mxu0 0
      %718 = vmatpush1.bf16.msra.mxu0 %v675
      %719 = vmatprep.subr.bf16.mxu0 0
      %720 = vmatpush1.bf16.msra.mxu0 %v676
      %721 = vmatprep.subr.bf16.mxu0 0
      %722 = vmatpush1.bf16.msra.mxu0 %v677
      %723 = vmatprep.subr.bf16.mxu0 0
      %724 = vmatpush1.bf16.msra.mxu0 %v678
      %725 = vmatprep.subr.bf16.mxu0 0
      %726 = vmatpush1.bf16.msra.mxu0 %v679
      %727 = vmatprep.subr.bf16.mxu0 0
      %728 = vmatpush1.bf16.msra.mxu0 %v680
      %729 = vmatprep.mubr.bf16.mxu0 %v547
      %730 = vmatmul.mubr.bf16.gmra.mrb[0].mxu0 %v546
      %v731 = vpop.f32.mrb[0].mxu0
      %v732 = vadd.f32 %v599, %v731
      %v733 = vpop.f32.mrb[0].mxu0
      %v734 = vpop.f32.mrb[0].mxu0
      %v735 = vadd.f32 %v599, %v734
      %v736 = vpop.f32.mrb[0].mxu0
      %737 = vmatprep.mubr.bf16.mxu0 %v549
      %738 = vmatmul.mubr.bf16.gmra.mrb[0].mxu0 %v548
      %v739 = vpop.f32.mrb[0].mxu0
      %v740 = vadd.f32 %v599, %v739
      %v741 = vpop.f32.mrb[0].mxu0
      %v742 = vpop.f32.mrb[0].mxu0
      %v743 = vadd.f32 %v599, %v742
      %v744 = vpop.f32.mrb[0].mxu0
      %745 = vmatprep.mubr.bf16.mxu0 %v551
      %746 = vmatmul.mubr.bf16.gmra.mrb[0].mxu0 %v550
      %v747 = vpop.f32.mrb[0].mxu0
      %v748 = vadd.f32 %v599, %v747
      %v749 = vpop.f32.mrb[0].mxu0
      %v750 = vpop.f32.mrb[0].mxu0
      %v751 = vadd.f32 %v599, %v750
      %v752 = vpop.f32.mrb[0].mxu0
      %753 = vmatprep.mubr.bf16.mxu0 %v553
      %754 = vmatmul.mubr.bf16.gmra.mrb[0].mxu0 %v552
      %v755 = vpop.f32.mrb[0].mxu0
      %v756 = vadd.f32 %v599, %v755
      %v757 = vpop.f32.mrb[0].mxu0
      %v758 = vpop.f32.mrb[0].mxu0
      %v759 = vadd.f32 %v599, %v758
      %v760 = vpop.f32.mrb[0].mxu0
      %761 = vmatprep.mubr.bf16.mxu0 %v555
      %762 = vmatmul.mubr.bf16.gmra.mrb[0].mxu0 %v554
      %v763 = vpop.f32.mrb[0].mxu0
      %v764 = vadd.f32 %v599, %v763
      %v765 = vpop.f32.mrb[0].mxu0
      %v766 = vpop.f32.mrb[0].mxu0
      %v767 = vadd.f32 %v599, %v766
      %v768 = vpop.f32.mrb[0].mxu0
      %769 = vmatprep.mubr.bf16.mxu0 %v557
      %770 = vmatmul.mubr.bf16.gmra.mrb[0].mxu0 %v556
      %v771 = vpop.f32.mrb[0].mxu0
      %v772 = vadd.f32 %v599, %v771
      %v773 = vpop.f32.mrb[0].mxu0
      %v774 = vpop.f32.mrb[0].mxu0
      %v775 = vadd.f32 %v599, %v774
      %v776 = vpop.f32.mrb[0].mxu0
      %777 = vmatprep.mubr.bf16.mxu0 %v559
      %778 = vmatmul.mubr.bf16.gmra.mrb[0].mxu0 %v558
      %v779 = vpop.f32.mrb[0].mxu0
      %v780 = vadd.f32 %v599, %v779
      %v781 = vpop.f32.mrb[0].mxu0
      %v782 = vpop.f32.mrb[0].mxu0
      %v783 = vadd.f32 %v599, %v782
      %v784 = vpop.f32.mrb[0].mxu0
      %785 = vmatprep.mubr.bf16.mxu0 %v561
      %786 = vmatmul.mubr.bf16.gmra.mrb[0].mxu0 %v560
      %v787 = vpop.f32.mrb[0].mxu0
      %v788 = vadd.f32 %v599, %v787
      %v789 = vpop.f32.mrb[0].mxu0
      %v790 = vpop.f32.mrb[0].mxu0
      %v791 = vadd.f32 %v599, %v790
      %v792 = vpop.f32.mrb[0].mxu0
      %793 = vdwg.mxu0
      %vm794 = vcmask 15360
      %795 = vst.msk [vmem:[%s226] sm:$0xff] %vm794, %v732
      %796 = vst.msk [vmem:[%s226 + $0x8] sm:$0xff] %vm794, %v735
      %797 = vst.msk [vmem:[%s226 + $0x10] sm:$0xff] %vm794, %v740
      %798 = vst.msk [vmem:[%s226 + $0x18] sm:$0xff] %vm794, %v743
      %799 = vst.msk [vmem:[%s226 + $0x20] sm:$0xff] %vm794, %v748
      %800 = vst.msk [vmem:[%s226 + $0x28] sm:$0xff] %vm794, %v751
      %801 = vst.msk [vmem:[%s226 + $0x30] sm:$0xff] %vm794, %v756
      %802 = vst.msk [vmem:[%s226 + $0x38] sm:$0xff] %vm794, %v759
      %803 = vst.msk [vmem:[%s226 + $0x40] sm:$0xff] %vm794, %v764
      %804 = vst.msk [vmem:[%s226 + $0x48] sm:$0xff] %vm794, %v767
      %805 = vst.msk [vmem:[%s226 + $0x50] sm:$0xff] %vm794, %v772
      %806 = vst.msk [vmem:[%s226 + $0x58] sm:$0xff] %vm794, %v775
      %807 = vst.msk [vmem:[%s226 + $0x60] sm:$0xff] %vm794, %v780
      %808 = vst.msk [vmem:[%s226 + $0x68] sm:$0xff] %vm794, %v783
      %809 = vst.msk [vmem:[%s226 + $0x70] sm:$0xff] %vm794, %v788
      %810 = vst.msk [vmem:[%s226 + $0x78] sm:$0xff] %vm794, %v791
      %s811 = smul.u32 16, %s16
      %p812 = scmp.lt.s32.totalorder %s811, 31
      %s813 = scalar_select %p812, %s811, 31
      %s814 = smul.addr %s813, 8
      %s815 = scalar_lea.vmem %s5, %s814
      // Predicated region
      $region41: #{fno2d.19} parent=39 // pred_check
        %p816 = pneg %p144
      $region42: #{fno2d.19} parent=39 // pred_check_branch
        %818 = sbr.rel (%p816) target = $region44
      $region43: #{fno2d.19} parent=39 // pred_region
        %s819 = smul.u32 16, %s16
      $region44: #{fno2d.19} parent=39 // pred_fallthru
        _
    $region40: #{fno2d.19} parent=5 // pred_fallthru
      _
    %p820 = scmp.le.s32.totalorder 2, %s11
    // Predicated region
    $region45: #{fno2d.19} parent=5 // pred_check
      %p821 = pneg %p820
    $region46: #{fno2d.19} parent=5 // pred_check_branch
      %823 = sbr.rel (%p821) target = $region48
    $region47: #{fno2d.19} parent=5 // pred_region
      %s824 = ssub.s32 %s11, 2
      // Predicated region
      $region49: #{fno2d.19} parent=47 // pred_check
        %p825 = pneg %p150
      $region50: #{fno2d.19} parent=47 // pred_check_branch
        %827 = sbr.rel (%p825) target = $region52
      $region51: #{fno2d.19} parent=47 // pred_region
        %s828 = smul.u32 16, %s17
        %p829 = scmp.lt.s32.totalorder %s828, 31
        %s830 = scalar_select %p829, %s828, 31
        %s831 = smul.addr %s830, 8
        %s832 = scalar_lea.vmem %s5, %s831
      $region52: #{fno2d.19} parent=47 // pred_fallthru
        _
    $region48: #{fno2d.19} parent=5 // pred_fallthru
      _
  $region6: #{fno2d.19} parent=0 // loop_footer
    %s15 = sadd.s32 1, %s11
  $region7: #{fno2d.19} parent=0 // loop_footer_branch
    %10 = sbr.rel target = $region3
  $region8: #{fno2d.19} parent=0 // loop_exit
    _

</llo_original>
